<compile_context>
chip_gen: v5e
topology: v5e:2x2
jax: 0.10.0
libtpu: 0.0.40
codegen_flags: <defaults>
</compile_context>

<pallas_src>
import jax
import jax.numpy as jnp
from jax.experimental import pallas as pl
from jax.experimental.pallas import tpu as pltpu

# ---------------- model config (small, consistent with the module) -----------
B = 2             # batch
CHANNELS = 64     # backbone feature channels ("channels" ctor arg, shrunk)
FEAT = 8          # feature-map spatial size
PATCH = 2         # patch-size
DIM = 32          # transformer dim
DEPTH = 2         # transformer depth
HEADS = 4         # attention heads
DIM_HEAD = 8      # per-head dim
INNER = HEADS * DIM_HEAD
MLP_DIM = 64      # mlp-dim
NUM_CLASSES = 2   # num-classes
EMB_DIM = 4       # emb-dim (pos_embedding leading dim, must be >= batch)
SCALE = DIM_HEAD ** -0.5

NP = (FEAT // PATCH) ** 2                    # patches per sample = 16
PDIM = PATCH * PATCH * CHANNELS              # patch feature dim  = 256
SEH = PATCH * PATCH * (CHANNELS // 16)       # expanded SE hidden = 16
N_TOK = NP + 1                               # tokens (cls + patches) = 17
N_PAD = 32                                   # per-sample padded tokens (pow2)
TOKS = B * N_PAD                             # stacked token rows = 64
SROWS = HEADS * TOKS                         # stacked score rows = 256
SLAB_W = 256                                 # weight-slab lane width


# ---------------------------- weight-slab layout ------------------------------
def _build_layout():
    offs = {}
    r = 0

    def add(name, rows):
        nonlocal r
        offs[name] = r
        r += rows

    # 2-D weights (every row-count is a multiple of 8 -> aligned sublane slices)
    add("se_w1", PDIM)            # (PDIM, SEH)   block-diag expanded SE conv1
    add("se_w2", SEH)             # (SEH, PDIM)   block-diag expanded SE conv2
    add("patch_w", PDIM)          # (PDIM, DIM)
    for l in range(DEPTH):
        add(f"qkv_w{l}", DIM)     # (DIM, 3*INNER) fused qkv (scale folded in q)
        add(f"out_w{l}", INNER)   # (INNER, DIM)
        add(f"ff1_w{l}", DIM)     # (DIM, MLP_DIM)
        add(f"ff2_w{l}", MLP_DIM) # (MLP_DIM, DIM)
    add("head_w1", DIM)           # (DIM, MLP_DIM)
    add("head_w2", MLP_DIM)       # (MLP_DIM, NUM_CLASSES)
    # 1-row vectors (biases / LN params / cls) and per-sample pos rows
    for name in ("se_b1", "se_b2", "patch_b", "cls"):
        add(name, 1)
    for l in range(DEPTH):
        for name in (f"ln1_g{l}", f"ln1_b{l}", f"out_b{l}",
                     f"ln2_g{l}", f"ln2_b{l}", f"ff1_b{l}", f"ff2_b{l}"):
            add(name, 1)
    add("head_b1", 1)
    add("head_b2", 1)
    add("pos", B)
    return offs, ((r + 7) // 8) * 8


OFFS, SLAB_ROWS = _build_layout()


# ------------------------------ small helpers --------------------------------
def _layernorm(x, g, b):
    mu = jnp.mean(x, axis=-1, keepdims=True)
    var = jnp.mean(jnp.square(x - mu), axis=-1, keepdims=True)
    return (x - mu) * jax.lax.rsqrt(var + 1e-5) * g + b


def _gelu(x):  # exact (erf) GELU, matching nn.GELU default
    return 0.5 * x * (1.0 + jax.lax.erf(x * 0.7071067811865475))


# ------------------------------ fused Pallas kernel ---------------------------
def _evit_kernel(x_ref, slab_ref, o_ref):
    f32 = jnp.float32

    def W(name, rows, cols):                       # 2-D weight slice
        r0 = OFFS[name]
        return slab_ref[r0:r0 + rows, 0:cols]

    def V(name, cols, row=0):                      # 1-row vector slice
        r0 = OFFS[name] + row
        return slab_ref[r0:r0 + 1, 0:cols]

    x = x_ref[...]                                                  # (B*NP, PDIM)

    # --- SE block: per-pixel 1x1 convs as block-diagonal matmuls -> gate ---
    h = jnp.maximum(
        jnp.dot(x, W("se_w1", PDIM, SEH), preferred_element_type=f32)
        + V("se_b1", SEH), 0.0)
    gate = jax.nn.sigmoid(
        jnp.dot(h, W("se_w2", SEH, PDIM), preferred_element_type=f32)
        + V("se_b2", PDIM))
    x = x * gate                                                    # (B*NP, PDIM)

    # --- patch_to_embedding ---
    y = jnp.dot(x, W("patch_w", PDIM, DIM), preferred_element_type=f32) \
        + V("patch_b", DIM)                                         # (B*NP, DIM)

    # --- [cls] + patches, pad to N_PAD rows/sample, add per-sample pos, stack B ---
    cls_row = V("cls", DIM)
    pad = jnp.zeros((N_PAD - N_TOK, DIM), f32)
    blocks = []
    for b in range(B):
        pos_b = V("pos", DIM, row=b)
        blk = jnp.concatenate([cls_row, y[b * NP:(b + 1) * NP, :], pad], axis=0)
        blocks.append(blk + pos_b)
    x_tok = jnp.concatenate(blocks, axis=0)                         # (TOKS, DIM)

    # --- constant masks, hoisted out of the layer loop (no int div/mod) ---
    col = jax.lax.broadcasted_iota(jnp.int32, (TOKS, INNER), 1)
    hm = jnp.concatenate(
        [jnp.where((col >= hd * DIM_HEAD) & (col < (hd + 1) * DIM_HEAD), 1.0, 0.0)
         for hd in range(HEADS)], axis=0)                           # (SROWS, INNER)
    colj = jax.lax.broadcasted_iota(jnp.int32, (N_PAD, TOKS), 1)
    bias_tok = jnp.concatenate(
        [jnp.where((colj >= b * N_PAD) & (colj < b * N_PAD + N_TOK), 0.0, -1e30)
         for b in range(B)], axis=0)                                # (TOKS, TOKS)
    key_bias = jnp.tile(bias_tok, (HEADS, 1))                       # (SROWS, TOKS)

    for l in range(DEPTH):
        # --- PreNorm + multi-head attention + residual (fused 96-lane qkv) ---
        hln = _layernorm(x_tok, V(f"ln1_g{l}", DIM), V(f"ln1_b{l}", DIM))
        qkv = jnp.dot(hln, W(f"qkv_w{l}", DIM, 3 * INNER),
                      preferred_element_type=f32)                   # (TOKS, 3*INNER)
        q = qkv[:, 0:INNER]            # scale already folded into these weights
        k = qkv[:, INNER:2 * INNER]
        v = qkv[:, 2 * INNER:3 * INNER]

        # Stack all heads along sublanes; masking q per head makes the single
        # (HEADS*TOKS, INNER) x (TOKS, INNER)^T contraction exactly per-head,
        # and key_bias keeps attention block-diagonal per sample / unpadded.
        q_rep = jnp.tile(q, (HEADS, 1)) * hm                        # (SROWS, INNER)
        s = jax.lax.dot_general(q_rep, k, (((1,), (1,)), ((), ())),
                                preferred_element_type=f32) + key_bias
        m = jnp.max(s, axis=-1, keepdims=True)
        p = jnp.exp(s - m)
        p = p * pl.reciprocal(jnp.sum(p, axis=-1, keepdims=True), approx=True)
        o_all = jnp.dot(p, v, preferred_element_type=f32)           # (SROWS, INNER)

        # Re-merge heads: token row t, column d takes head d//DIM_HEAD's output.
        attn = o_all[0:TOKS, :] * hm[0:TOKS, :]
        for hd in range(1, HEADS):
            attn = attn + o_all[hd * TOKS:(hd + 1) * TOKS, :] * hm[hd * TOKS:(hd + 1) * TOKS, :]

        proj = jnp.dot(attn, W(f"out_w{l}", INNER, DIM),
                       preferred_element_type=f32) + V(f"out_b{l}", DIM)
        x_tok = x_tok + proj

        # --- PreNorm + FeedForward (exact GELU) + residual ---
        hln = _layernorm(x_tok, V(f"ln2_g{l}", DIM), V(f"ln2_b{l}", DIM))
        h1 = _gelu(jnp.dot(hln, W(f"ff1_w{l}", DIM, MLP_DIM),
                           preferred_element_type=f32) + V(f"ff1_b{l}", MLP_DIM))
        h2 = jnp.dot(h1, W(f"ff2_w{l}", MLP_DIM, DIM),
                     preferred_element_type=f32) + V(f"ff2_b{l}", DIM)
        x_tok = x_tok + h2

    # --- cls rows (one per sample) -> mlp_head (fused epilogue) ---
    cls_rows = jnp.concatenate(
        [x_tok[b * N_PAD:b * N_PAD + 1, :] for b in range(B)], axis=0)  # (B, DIM)
    hh1 = jnp.maximum(
        jnp.dot(cls_rows, W("head_w1", DIM, MLP_DIM), preferred_element_type=f32)
        + V("head_b1", MLP_DIM), 0.0)
    logits = jnp.dot(hh1, W("head_w2", MLP_DIM, NUM_CLASSES),
                     preferred_element_type=f32) + V("head_b2", NUM_CLASSES)
    o_ref[...] = logits                                             # (B, NUM_CLASSES)


# ------------------------------ parameters -----------------------------------
def init_params(key):
    ks = iter(jax.random.split(key, 32))

    def nrm(shape, s=0.02):
        return (s * jax.random.normal(next(ks), shape)).astype(jnp.float32)

    return dict(
        # se_block: Conv2d(C, C//16, 1) -> ReLU -> Conv2d(C//16, C, 1) -> Sigmoid
        se_w1=nrm((CHANNELS, CHANNELS // 16)),
        se_b1=nrm((1, CHANNELS // 16)),
        se_w2=nrm((CHANNELS // 16, CHANNELS)),
        se_b2=nrm((1, CHANNELS)),
        # patch_to_embedding: Linear(patch_dim, dim)
        patch_w=nrm((PDIM, DIM)),
        patch_b=nrm((1, DIM)),
        cls_token=nrm((1, 1, DIM), 1.0),
        pos_embedding=nrm((EMB_DIM, 1, DIM), 1.0),
        # transformer layers, stacked along a leading DEPTH axis
        ln1_g=jnp.ones((DEPTH, 1, DIM), jnp.float32),
        ln1_b=jnp.zeros((DEPTH, 1, DIM), jnp.float32),
        qkv_w=nrm((DEPTH, 3, DIM, INNER)),           # to_qkv (bias=False)
        out_w=nrm((DEPTH, INNER, DIM)),
        out_b=nrm((DEPTH, 1, DIM)),
        ln2_g=jnp.ones((DEPTH, 1, DIM), jnp.float32),
        ln2_b=jnp.zeros((DEPTH, 1, DIM), jnp.float32),
        ff1_w=nrm((DEPTH, DIM, MLP_DIM)),
        ff1_b=nrm((DEPTH, 1, MLP_DIM)),
        ff2_w=nrm((DEPTH, MLP_DIM, DIM)),
        ff2_b=nrm((DEPTH, 1, DIM)),
        # mlp_head: Linear(dim, mlp_dim) -> ReLU -> Linear(mlp_dim, num_classes)
        head_w1=nrm((DIM, MLP_DIM)),
        head_b1=nrm((1, MLP_DIM)),
        head_w2=nrm((MLP_DIM, NUM_CLASSES)),
        head_b2=nrm((1, NUM_CLASSES)),
    )


# --------------------- pack every weight into one f32 slab --------------------
def _pack_slab(params):
    f32 = jnp.float32
    # Per-pixel 1x1-conv SE weights expanded block-diagonally so they act
    # directly on the (p1 p2 c) patch layout (weights-only, tiny).
    eye = jnp.eye(PATCH * PATCH, dtype=f32)
    entries = {
        "se_w1": jnp.kron(eye, params["se_w1"]),                 # (PDIM, SEH)
        "se_w2": jnp.kron(eye, params["se_w2"]),                 # (SEH, PDIM)
        "se_b1": jnp.tile(params["se_b1"], (1, PATCH * PATCH)),  # (1, SEH)
        "se_b2": jnp.tile(params["se_b2"], (1, PATCH * PATCH)),  # (1, PDIM)
        "patch_w": params["patch_w"],
        "patch_b": params["patch_b"],
        "cls": params["cls_token"][0],                           # (1, DIM)
        "pos": params["pos_embedding"][0:B, 0, :],               # (B, DIM)
        "head_w1": params["head_w1"],
        "head_b1": params["head_b1"],
        "head_w2": params["head_w2"],
        "head_b2": params["head_b2"],
    }
    for l in range(DEPTH):
        entries[f"qkv_w{l}"] = jnp.concatenate(
            [params["qkv_w"][l, 0] * SCALE,        # fold attention scale into q
             params["qkv_w"][l, 1],
             params["qkv_w"][l, 2]], axis=-1)                    # (DIM, 3*INNER)
        entries[f"out_w{l}"] = params["out_w"][l]
        entries[f"out_b{l}"] = params["out_b"][l]
        entries[f"ff1_w{l}"] = params["ff1_w"][l]
        entries[f"ff1_b{l}"] = params["ff1_b"][l]
        entries[f"ff2_w{l}"] = params["ff2_w"][l]
        entries[f"ff2_b{l}"] = params["ff2_b"][l]
        entries[f"ln1_g{l}"] = params["ln1_g"][l]
        entries[f"ln1_b{l}"] = params["ln1_b"][l]
        entries[f"ln2_g{l}"] = params["ln2_g"][l]
        entries[f"ln2_b{l}"] = params["ln2_b"][l]

    slab = jnp.zeros((SLAB_ROWS, SLAB_W), f32)
    for name, arr in entries.items():
        r0 = OFFS[name]
        rows, cols = arr.shape
        slab = slab.at[r0:r0 + rows, 0:cols].set(arr.astype(f32))
    return slab


# ------------------------------ forward ---------------------------------------
def efficient_vit_forward(x_feat, params):
    """x_feat: backbone features, NCHW (B, CHANNELS, FEAT, FEAT)."""
    b, C, H, Wd = x_feat.shape
    assert (b, C, H, Wd) == (B, CHANNELS, FEAT, FEAT)
    p = PATCH
    hh, ww = H // p, Wd // p

    # rearrange 'b c (h p1) (w p2) -> (b h w) (p1 p2 c)'  (single XLA shuffle
    # before the one fused kernel; everything downstream stays in VMEM).
    xp = x_feat.reshape(b, C, hh, p, ww, p)
    xp = jnp.transpose(xp, (0, 2, 4, 3, 5, 1)).reshape(b * hh * ww, p * p * C)

    slab = _pack_slab(params)

    # No grid: the whole batch is processed in one invocation (batch stacked
    # along sublanes), so the call has exactly 2 input DMAs + 1 output DMA.
    logits = pl.pallas_call(
        _evit_kernel,
        out_shape=jax.ShapeDtypeStruct((b, NUM_CLASSES), jnp.float32),
    )(xp, slab)
    return logits


# ------------------------- pure-JAX reference (for checking) ------------------
def reference_forward(x_feat, params):
    b, C, H, Wd = x_feat.shape
    p = PATCH
    hh, ww = H // p, Wd // p

    # SE block (per-pixel 1x1 convs)
    x_nhwc = jnp.transpose(x_feat, (0, 2, 3, 1)).reshape(b * H * Wd, C)
    h = jnp.maximum(x_nhwc @ params["se_w1"] + params["se_b1"], 0.0)
    s = jax.nn.sigmoid(h @ params["se_w2"] + params["se_b2"])
    x_se = (x_nhwc * s).reshape(b, H, Wd, C)

    # rearrange + patch embedding
    y = x_se.reshape(b, hh, p, ww, p, C).transpose(0, 1, 3, 2, 4, 5)
    y = y.reshape(b, hh * ww, p * p * C)
    y = y @ params["patch_w"] + params["patch_b"]

    cls = jnp.broadcast_to(params["cls_token"], (b, 1, DIM))
    x_tok = jnp.concatenate([cls, y], axis=1) + params["pos_embedding"][0:b]
    n = x_tok.shape[1]

    for l in range(DEPTH):
        hln = _layernorm(x_tok, params["ln1_g"][l], params["ln1_b"][l])
        q = hln @ params["qkv_w"][l, 0]
        k = hln @ params["qkv_w"][l, 1]
        v = hln @ params["qkv_w"][l, 2]

        def heads(t):
            return t.reshape(b, n, HEADS, DIM_HEAD).transpose(0, 2, 1, 3)

        qh, kh, vh = heads(q), heads(k), heads(v)
        dots = jnp.einsum("bhid,bhjd->bhij", qh, kh) * SCALE
        attn = jax.nn.softmax(dots, axis=-1)
        o = jnp.einsum("bhij,bhjd->bhid", attn, vh)
        o = o.transpose(0, 2, 1, 3).reshape(b, n, INNER)
        x_tok = x_tok + (o @ params["out_w"][l] + params["out_b"][l])

        hln = _layernorm(x_tok, params["ln2_g"][l], params["ln2_b"][l])
        h1 = _gelu(hln @ params["ff1_w"][l] + params["ff1_b"][l])
        x_tok = x_tok + (h1 @ params["ff2_w"][l] + params["ff2_b"][l])

    clsr = x_tok[:, 0]
    hh1 = jnp.maximum(clsr @ params["head_w1"] + params["head_b1"], 0.0)
    return hh1 @ params["head_w2"] + params["head_b2"]


if __name__ == "__main__":
    key = jax.random.PRNGKey(0)
    kp, kx = jax.random.split(key)
    params = init_params(kp)
    # Backbone feature map stand-in (NCHW, matching extract_features output layout).
    x_feat = jax.random.normal(kx, (B, CHANNELS, FEAT, FEAT), dtype=jnp.float32)

    fwd = jax.jit(efficient_vit_forward)
    out = fwd(x_feat, params)
    jax.block_until_ready(out)

    assert out.shape == (B, NUM_CLASSES)
    assert bool(jnp.all(jnp.isfinite(out)))

    # Correctness check against a pure-JAX reference of the same module math.
    ref = jax.jit(reference_forward)(x_feat, params)
    err = float(jnp.max(jnp.abs(out - ref)))
    assert err < 2e-3, f"mismatch vs reference: max abs err = {err}"

    print("KERNEL_OK")
</pallas_src>

<mosaic_0001>
module attributes {stable_mosaic.version = 11 : i64} {
  func.func @_evit_kernel(%arg0: memref<32x256xf32, #tpu.memory_space<vmem>>, %arg1: memref<968x256xf32, #tpu.memory_space<vmem>>, %arg2: memref<2x2xf32, #tpu.memory_space<vmem>>) attributes {dimension_semantics = [], scalar_prefetch = 0 : i64, scratch_operands = 0 : i64, tpu.core_type = #tpu.core_type<tc>} {
    %c0 = arith.constant 0 : index
    %c0_0 = arith.constant 0 : index
    %0 = vector.load %arg0[%c0, %c0_0] : memref<32x256xf32, #tpu.memory_space<vmem>>, vector<32x256xf32>
    %c0_1 = arith.constant 0 : index
    %c0_2 = arith.constant 0 : index
    %1 = vector.load %arg1[%c0_1, %c0_2] : memref<968x256xf32, #tpu.memory_space<vmem>>, vector<256x16xf32>
    %cst = arith.constant dense<0.000000e+00> : vector<32x16xf32>
    %2 = tpu.matmul %0, %1, %cst {dimension_numbers = #tpu.dot_dimension_numbers<[1], [0], [0], [1], [0, 0, 1, 1], [], []>} : vector<32x256xf32>, vector<256x16xf32>, vector<32x16xf32> -> vector<32x16xf32>
    %c944 = arith.constant 944 : index
    %c0_3 = arith.constant 0 : index
    %3 = vector.load %arg1[%c944, %c0_3] : memref<968x256xf32, #tpu.memory_space<vmem>>, vector<1x16xf32>
    %4 = vector.broadcast %3 : vector<1x16xf32> to vector<32x16xf32>
    %5 = arith.addf %2, %4 : vector<32x16xf32>
    %cst_4 = arith.constant 0.000000e+00 : f32
    %6 = vector.broadcast %cst_4 : f32 to vector<32x16xf32>
    %7 = arith.maximumf %5, %6 : vector<32x16xf32>
    %c256 = arith.constant 256 : index
    %c0_5 = arith.constant 0 : index
    %8 = vector.load %arg1[%c256, %c0_5] : memref<968x256xf32, #tpu.memory_space<vmem>>, vector<16x256xf32>
    %cst_6 = arith.constant dense<0.000000e+00> : vector<32x256xf32>
    %9 = tpu.matmul %7, %8, %cst_6 {dimension_numbers = #tpu.dot_dimension_numbers<[1], [0], [0], [1], [0, 0, 1, 1], [], []>} : vector<32x16xf32>, vector<16x256xf32>, vector<32x256xf32> -> vector<32x256xf32>
    %c945 = arith.constant 945 : index
    %c0_7 = arith.constant 0 : index
    %10 = vector.load %arg1[%c945, %c0_7] : memref<968x256xf32, #tpu.memory_space<vmem>>, vector<1x256xf32>
    %11 = vector.broadcast %10 : vector<1x256xf32> to vector<32x256xf32>
    %12 = arith.addf %9, %11 : vector<32x256xf32>
    %13 = arith.negf %12 : vector<32x256xf32>
    %14 = math.exp %13 : vector<32x256xf32>
    %cst_8 = arith.constant 1.000000e+00 : f32
    %15 = vector.broadcast %cst_8 : f32 to vector<32x256xf32>
    %16 = arith.addf %15, %14 : vector<32x256xf32>
    %17 = arith.divf %15, %16 : vector<32x256xf32>
    %18 = arith.mulf %0, %17 : vector<32x256xf32>
    %c272 = arith.constant 272 : index
    %c0_9 = arith.constant 0 : index
    %19 = vector.load %arg1[%c272, %c0_9] : memref<968x256xf32, #tpu.memory_space<vmem>>, vector<256x32xf32>
    %cst_10 = arith.constant dense<0.000000e+00> : vector<32x32xf32>
    %20 = tpu.matmul %18, %19, %cst_10 {dimension_numbers = #tpu.dot_dimension_numbers<[1], [0], [0], [1], [0, 0, 1, 1], [], []>} : vector<32x256xf32>, vector<256x32xf32>, vector<32x32xf32> -> vector<32x32xf32>
    %c946 = arith.constant 946 : index
    %c0_11 = arith.constant 0 : index
    %21 = vector.load %arg1[%c946, %c0_11] : memref<968x256xf32, #tpu.memory_space<vmem>>, vector<1x32xf32>
    %22 = vector.broadcast %21 : vector<1x32xf32> to vector<32x32xf32>
    %23 = arith.addf %20, %22 : vector<32x32xf32>
    %c947 = arith.constant 947 : index
    %c0_12 = arith.constant 0 : index
    %24 = vector.load %arg1[%c947, %c0_12] : memref<968x256xf32, #tpu.memory_space<vmem>>, vector<1x32xf32>
    %cst_13 = arith.constant 0.000000e+00 : f32
    %25 = vector.broadcast %cst_13 : f32 to vector<15x32xf32>
    %c964 = arith.constant 964 : index
    %c0_14 = arith.constant 0 : index
    %26 = vector.load %arg1[%c964, %c0_14] : memref<968x256xf32, #tpu.memory_space<vmem>>, vector<1x32xf32>
    %27 = vector.extract_strided_slice %23 {offsets = [0, 0], sizes = [16, 32], strides = [1, 1]} : vector<32x32xf32> to vector<16x32xf32>
    %28 = tpu.concatenate %24, %27, %25 in 0 : vector<1x32xf32>, vector<16x32xf32>, vector<15x32xf32> -> vector<32x32xf32>
    %29 = vector.broadcast %26 : vector<1x32xf32> to vector<32x32xf32>
    %30 = arith.addf %28, %29 : vector<32x32xf32>
    %c965 = arith.constant 965 : index
    %c0_15 = arith.constant 0 : index
    %31 = vector.load %arg1[%c965, %c0_15] : memref<968x256xf32, #tpu.memory_space<vmem>>, vector<1x32xf32>
    %32 = vector.extract_strided_slice %23 {offsets = [16, 0], sizes = [16, 32], strides = [1, 1]} : vector<32x32xf32> to vector<16x32xf32>
    %33 = tpu.concatenate %24, %32, %25 in 0 : vector<1x32xf32>, vector<16x32xf32>, vector<15x32xf32> -> vector<32x32xf32>
    %34 = vector.broadcast %31 : vector<1x32xf32> to vector<32x32xf32>
    %35 = arith.addf %33, %34 : vector<32x32xf32>
    %36 = tpu.concatenate %30, %35 in 0 : vector<32x32xf32>, vector<32x32xf32> -> vector<64x32xf32>
    %37 = tpu.iota {dimensions = array<i32: 1>} : vector<64x32xi32>
    %c0_i32 = arith.constant 0 : i32
    %38 = vector.broadcast %c0_i32 : i32 to vector<64x32xi32>
    %39 = arith.cmpi sge, %37, %38 : vector<64x32xi32>
    %c8_i32 = arith.constant 8 : i32
    %40 = vector.broadcast %c8_i32 : i32 to vector<64x32xi32>
    %41 = arith.cmpi slt, %37, %40 : vector<64x32xi32>
    %42 = arith.andi %39, %41 : vector<64x32xi1>
    %cst_16 = arith.constant 1.000000e+00 : f32
    %cst_17 = arith.constant 0.000000e+00 : f32
    %43 = vector.broadcast %cst_16 : f32 to vector<64x32xf32>
    %44 = vector.broadcast %cst_17 : f32 to vector<64x32xf32>
    %45 = arith.select %42, %43, %44 : vector<64x32xi1>, vector<64x32xf32>
    %c8_i32_18 = arith.constant 8 : i32
    %46 = vector.broadcast %c8_i32_18 : i32 to vector<64x32xi32>
    %47 = arith.cmpi sge, %37, %46 : vector<64x32xi32>
    %c16_i32 = arith.constant 16 : i32
    %48 = vector.broadcast %c16_i32 : i32 to vector<64x32xi32>
    %49 = arith.cmpi slt, %37, %48 : vector<64x32xi32>
    %50 = arith.andi %47, %49 : vector<64x32xi1>
    %cst_19 = arith.constant 1.000000e+00 : f32
    %cst_20 = arith.constant 0.000000e+00 : f32
    %51 = vector.broadcast %cst_19 : f32 to vector<64x32xf32>
    %52 = vector.broadcast %cst_20 : f32 to vector<64x32xf32>
    %53 = arith.select %50, %51, %52 : vector<64x32xi1>, vector<64x32xf32>
    %c16_i32_21 = arith.constant 16 : i32
    %54 = vector.broadcast %c16_i32_21 : i32 to vector<64x32xi32>
    %55 = arith.cmpi sge, %37, %54 : vector<64x32xi32>
    %c24_i32 = arith.constant 24 : i32
    %56 = vector.broadcast %c24_i32 : i32 to vector<64x32xi32>
    %57 = arith.cmpi slt, %37, %56 : vector<64x32xi32>
    %58 = arith.andi %55, %57 : vector<64x32xi1>
    %cst_22 = arith.constant 1.000000e+00 : f32
    %cst_23 = arith.constant 0.000000e+00 : f32
    %59 = vector.broadcast %cst_22 : f32 to vector<64x32xf32>
    %60 = vector.broadcast %cst_23 : f32 to vector<64x32xf32>
    %61 = arith.select %58, %59, %60 : vector<64x32xi1>, vector<64x32xf32>
    %c24_i32_24 = arith.constant 24 : i32
    %62 = vector.broadcast %c24_i32_24 : i32 to vector<64x32xi32>
    %63 = arith.cmpi sge, %37, %62 : vector<64x32xi32>
    %c32_i32 = arith.constant 32 : i32
    %64 = vector.broadcast %c32_i32 : i32 to vector<64x32xi32>
    %65 = arith.cmpi slt, %37, %64 : vector<64x32xi32>
    %66 = arith.andi %63, %65 : vector<64x32xi1>
    %cst_25 = arith.constant 1.000000e+00 : f32
    %cst_26 = arith.constant 0.000000e+00 : f32
    %67 = vector.broadcast %cst_25 : f32 to vector<64x32xf32>
    %68 = vector.broadcast %cst_26 : f32 to vector<64x32xf32>
    %69 = arith.select %66, %67, %68 : vector<64x32xi1>, vector<64x32xf32>
    %70 = tpu.concatenate %45, %53, %61, %69 in 0 : vector<64x32xf32>, vector<64x32xf32>, vector<64x32xf32>, vector<64x32xf32> -> vector<256x32xf32>
    %71 = tpu.iota {dimensions = array<i32: 1>} : vector<32x64xi32>
    %c0_i32_27 = arith.constant 0 : i32
    %72 = vector.broadcast %c0_i32_27 : i32 to vector<32x64xi32>
    %73 = arith.cmpi sge, %71, %72 : vector<32x64xi32>
    %c17_i32 = arith.constant 17 : i32
    %74 = vector.broadcast %c17_i32 : i32 to vector<32x64xi32>
    %75 = arith.cmpi slt, %71, %74 : vector<32x64xi32>
    %76 = arith.andi %73, %75 : vector<32x64xi1>
    %cst_28 = arith.constant 0.000000e+00 : f32
    %cst_29 = arith.constant -1.000000e+30 : f32
    %77 = vector.broadcast %cst_28 : f32 to vector<32x64xf32>
    %78 = vector.broadcast %cst_29 : f32 to vector<32x64xf32>
    %79 = arith.select %76, %77, %78 : vector<32x64xi1>, vector<32x64xf32>
    %c32_i32_30 = arith.constant 32 : i32
    %80 = vector.broadcast %c32_i32_30 : i32 to vector<32x64xi32>
    %81 = arith.cmpi sge, %71, %80 : vector<32x64xi32>
    %c49_i32 = arith.constant 49 : i32
    %82 = vector.broadcast %c49_i32 : i32 to vector<32x64xi32>
    %83 = arith.cmpi slt, %71, %82 : vector<32x64xi32>
    %84 = arith.andi %81, %83 : vector<32x64xi1>
    %cst_31 = arith.constant 0.000000e+00 : f32
    %cst_32 = arith.constant -1.000000e+30 : f32
    %85 = vector.broadcast %cst_31 : f32 to vector<32x64xf32>
    %86 = vector.broadcast %cst_32 : f32 to vector<32x64xf32>
    %87 = arith.select %84, %85, %86 : vector<32x64xi1>, vector<32x64xf32>
    %88 = tpu.concatenate %79, %87 in 0 : vector<32x64xf32>, vector<32x64xf32> -> vector<64x64xf32>
    %89 = tpu.concatenate %88, %88, %88, %88 in 0 : vector<64x64xf32>, vector<64x64xf32>, vector<64x64xf32>, vector<64x64xf32> -> vector<256x64xf32>
    %c948 = arith.constant 948 : index
    %c0_33 = arith.constant 0 : index
    %90 = vector.load %arg1[%c948, %c0_33] : memref<968x256xf32, #tpu.memory_space<vmem>>, vector<1x32xf32>
    %c949 = arith.constant 949 : index
    %c0_34 = arith.constant 0 : index
    %91 = vector.load %arg1[%c949, %c0_34] : memref<968x256xf32, #tpu.memory_space<vmem>>, vector<1x32xf32>
    %cst_35 = arith.constant dense<0.000000e+00> : vector<64xf32>
    %92 = vector.multi_reduction <add>, %36, %cst_35 [1] : vector<64x32xf32> to vector<64xf32>
    %93 = vector.shape_cast %92 : vector<64xf32> to vector<64x1xf32>
    %cst_36 = arith.constant 3.200000e+01 : f32
    %94 = vector.broadcast %cst_36 : f32 to vector<64x1xf32>
    %95 = arith.divf %93, %94 : vector<64x1xf32>
    %96 = vector.broadcast %95 : vector<64x1xf32> to vector<64x32xf32>
    %97 = arith.subf %36, %96 : vector<64x32xf32>
    %98 = arith.mulf %97, %97 : vector<64x32xf32>
    %cst_37 = arith.constant dense<0.000000e+00> : vector<64xf32>
    %99 = vector.multi_reduction <add>, %98, %cst_37 [1] : vector<64x32xf32> to vector<64xf32>
    %100 = vector.shape_cast %99 : vector<64xf32> to vector<64x1xf32>
    %cst_38 = arith.constant 3.200000e+01 : f32
    %101 = vector.broadcast %cst_38 : f32 to vector<64x1xf32>
    %102 = arith.divf %100, %101 : vector<64x1xf32>
    %103 = vector.broadcast %95 : vector<64x1xf32> to vector<64x32xf32>
    %104 = arith.subf %36, %103 : vector<64x32xf32>
    %cst_39 = arith.constant 9.99999974E-6 : f32
    %105 = vector.broadcast %cst_39 : f32 to vector<64x1xf32>
    %106 = arith.addf %102, %105 : vector<64x1xf32>
    %107 = math.rsqrt %106 : vector<64x1xf32>
    %108 = vector.broadcast %107 : vector<64x1xf32> to vector<64x32xf32>
    %109 = arith.mulf %104, %108 : vector<64x32xf32>
    %110 = vector.broadcast %90 : vector<1x32xf32> to vector<64x32xf32>
    %111 = arith.mulf %109, %110 : vector<64x32xf32>
    %112 = vector.broadcast %91 : vector<1x32xf32> to vector<64x32xf32>
    %113 = arith.addf %111, %112 : vector<64x32xf32>
    %c528 = arith.constant 528 : index
    %c0_40 = arith.constant 0 : index
    %114 = vector.load %arg1[%c528, %c0_40] : memref<968x256xf32, #tpu.memory_space<vmem>>, vector<32x96xf32>
    %cst_41 = arith.constant dense<0.000000e+00> : vector<64x96xf32>
    %115 = tpu.matmul %113, %114, %cst_41 {dimension_numbers = #tpu.dot_dimension_numbers<[1], [0], [0], [1], [0, 0, 1, 1], [], []>} : vector<64x32xf32>, vector<32x96xf32>, vector<64x96xf32> -> vector<64x96xf32>
    %116 = vector.extract_strided_slice %115 {offsets = [0, 0], sizes = [64, 32], strides = [1, 1]} : vector<64x96xf32> to vector<64x32xf32>
    %117 = vector.extract_strided_slice %115 {offsets = [0, 32], sizes = [64, 32], strides = [1, 1]} : vector<64x96xf32> to vector<64x32xf32>
    %118 = vector.extract_strided_slice %115 {offsets = [0, 64], sizes = [64, 32], strides = [1, 1]} : vector<64x96xf32> to vector<64x32xf32>
    %119 = tpu.concatenate %116, %116, %116, %116 in 0 : vector<64x32xf32>, vector<64x32xf32>, vector<64x32xf32>, vector<64x32xf32> -> vector<256x32xf32>
    %120 = arith.mulf %119, %70 : vector<256x32xf32>
    %cst_42 = arith.constant dense<0.000000e+00> : vector<256x64xf32>
    %121 = tpu.matmul %120, %117, %cst_42 {dimension_numbers = #tpu.dot_dimension_numbers<[1], [1], [0], [0], [0, 0, 1, 0], [], []>} : vector<256x32xf32>, vector<64x32xf32>, vector<256x64xf32> -> vector<256x64xf32>
    %122 = arith.addf %121, %89 : vector<256x64xf32>
    %cst_43 = arith.constant dense<0xFF800000> : vector<256xf32>
    %123 = vector.multi_reduction <maximumf>, %122, %cst_43 [1] : vector<256x64xf32> to vector<256xf32>
    %124 = vector.shape_cast %123 : vector<256xf32> to vector<256x1xf32>
    %125 = vector.broadcast %124 : vector<256x1xf32> to vector<256x64xf32>
    %126 = arith.subf %122, %125 : vector<256x64xf32>
    %127 = math.exp %126 : vector<256x64xf32>
    %cst_44 = arith.constant dense<0.000000e+00> : vector<256xf32>
    %128 = vector.multi_reduction <add>, %127, %cst_44 [1] : vector<256x64xf32> to vector<256xf32>
    %129 = vector.shape_cast %128 : vector<256xf32> to vector<256x1xf32>
    %130 = tpu.reciprocal %129 {approx = true} : vector<256x1xf32> -> vector<256x1xf32>
    %131 = vector.broadcast %130 : vector<256x1xf32> to vector<256x64xf32>
    %132 = arith.mulf %127, %131 : vector<256x64xf32>
    %cst_45 = arith.constant dense<0.000000e+00> : vector<256x32xf32>
    %133 = tpu.matmul %132, %118, %cst_45 {dimension_numbers = #tpu.dot_dimension_numbers<[1], [0], [0], [1], [0, 0, 1, 1], [], []>} : vector<256x64xf32>, vector<64x32xf32>, vector<256x32xf32> -> vector<256x32xf32>
    %134 = vector.extract_strided_slice %133 {offsets = [0, 0], sizes = [64, 32], strides = [1, 1]} : vector<256x32xf32> to vector<64x32xf32>
    %135 = vector.extract_strided_slice %70 {offsets = [0, 0], sizes = [64, 32], strides = [1, 1]} : vector<256x32xf32> to vector<64x32xf32>
    %136 = arith.mulf %134, %135 : vector<64x32xf32>
    %137 = vector.extract_strided_slice %133 {offsets = [64, 0], sizes = [64, 32], strides = [1, 1]} : vector<256x32xf32> to vector<64x32xf32>
    %138 = vector.extract_strided_slice %70 {offsets = [64, 0], sizes = [64, 32], strides = [1, 1]} : vector<256x32xf32> to vector<64x32xf32>
    %139 = arith.mulf %137, %138 : vector<64x32xf32>
    %140 = arith.addf %136, %139 : vector<64x32xf32>
    %141 = vector.extract_strided_slice %133 {offsets = [128, 0], sizes = [64, 32], strides = [1, 1]} : vector<256x32xf32> to vector<64x32xf32>
    %142 = vector.extract_strided_slice %70 {offsets = [128, 0], sizes = [64, 32], strides = [1, 1]} : vector<256x32xf32> to vector<64x32xf32>
    %143 = arith.mulf %141, %142 : vector<64x32xf32>
    %144 = arith.addf %140, %143 : vector<64x32xf32>
    %145 = vector.extract_strided_slice %133 {offsets = [192, 0], sizes = [64, 32], strides = [1, 1]} : vector<256x32xf32> to vector<64x32xf32>
    %146 = vector.extract_strided_slice %70 {offsets = [192, 0], sizes = [64, 32], strides = [1, 1]} : vector<256x32xf32> to vector<64x32xf32>
    %147 = arith.mulf %145, %146 : vector<64x32xf32>
    %148 = arith.addf %144, %147 : vector<64x32xf32>
    %c560 = arith.constant 560 : index
    %c0_46 = arith.constant 0 : index
    %149 = vector.load %arg1[%c560, %c0_46] : memref<968x256xf32, #tpu.memory_space<vmem>>, vector<32x32xf32>
    %cst_47 = arith.constant dense<0.000000e+00> : vector<64x32xf32>
    %150 = tpu.matmul %148, %149, %cst_47 {dimension_numbers = #tpu.dot_dimension_numbers<[1], [0], [0], [1], [0, 0, 1, 1], [], []>} : vector<64x32xf32>, vector<32x32xf32>, vector<64x32xf32> -> vector<64x32xf32>
    %c950 = arith.constant 950 : index
    %c0_48 = arith.constant 0 : index
    %151 = vector.load %arg1[%c950, %c0_48] : memref<968x256xf32, #tpu.memory_space<vmem>>, vector<1x32xf32>
    %152 = vector.broadcast %151 : vector<1x32xf32> to vector<64x32xf32>
    %153 = arith.addf %150, %152 : vector<64x32xf32>
    %154 = arith.addf %36, %153 : vector<64x32xf32>
    %c951 = arith.constant 951 : index
    %c0_49 = arith.constant 0 : index
    %155 = vector.load %arg1[%c951, %c0_49] : memref<968x256xf32, #tpu.memory_space<vmem>>, vector<1x32xf32>
    %c952 = arith.constant 952 : index
    %c0_50 = arith.constant 0 : index
    %156 = vector.load %arg1[%c952, %c0_50] : memref<968x256xf32, #tpu.memory_space<vmem>>, vector<1x32xf32>
    %cst_51 = arith.constant dense<0.000000e+00> : vector<64xf32>
    %157 = vector.multi_reduction <add>, %154, %cst_51 [1] : vector<64x32xf32> to vector<64xf32>
    %158 = vector.shape_cast %157 : vector<64xf32> to vector<64x1xf32>
    %cst_52 = arith.constant 3.200000e+01 : f32
    %159 = vector.broadcast %cst_52 : f32 to vector<64x1xf32>
    %160 = arith.divf %158, %159 : vector<64x1xf32>
    %161 = vector.broadcast %160 : vector<64x1xf32> to vector<64x32xf32>
    %162 = arith.subf %154, %161 : vector<64x32xf32>
    %163 = arith.mulf %162, %162 : vector<64x32xf32>
    %cst_53 = arith.constant dense<0.000000e+00> : vector<64xf32>
    %164 = vector.multi_reduction <add>, %163, %cst_53 [1] : vector<64x32xf32> to vector<64xf32>
    %165 = vector.shape_cast %164 : vector<64xf32> to vector<64x1xf32>
    %cst_54 = arith.constant 3.200000e+01 : f32
    %166 = vector.broadcast %cst_54 : f32 to vector<64x1xf32>
    %167 = arith.divf %165, %166 : vector<64x1xf32>
    %168 = vector.broadcast %160 : vector<64x1xf32> to vector<64x32xf32>
    %169 = arith.subf %154, %168 : vector<64x32xf32>
    %cst_55 = arith.constant 9.99999974E-6 : f32
    %170 = vector.broadcast %cst_55 : f32 to vector<64x1xf32>
    %171 = arith.addf %167, %170 : vector<64x1xf32>
    %172 = math.rsqrt %171 : vector<64x1xf32>
    %173 = vector.broadcast %172 : vector<64x1xf32> to vector<64x32xf32>
    %174 = arith.mulf %169, %173 : vector<64x32xf32>
    %175 = vector.broadcast %155 : vector<1x32xf32> to vector<64x32xf32>
    %176 = arith.mulf %174, %175 : vector<64x32xf32>
    %177 = vector.broadcast %156 : vector<1x32xf32> to vector<64x32xf32>
    %178 = arith.addf %176, %177 : vector<64x32xf32>
    %c592 = arith.constant 592 : index
    %c0_56 = arith.constant 0 : index
    %179 = vector.load %arg1[%c592, %c0_56] : memref<968x256xf32, #tpu.memory_space<vmem>>, vector<32x64xf32>
    %cst_57 = arith.constant dense<0.000000e+00> : vector<64x64xf32>
    %180 = tpu.matmul %178, %179, %cst_57 {dimension_numbers = #tpu.dot_dimension_numbers<[1], [0], [0], [1], [0, 0, 1, 1], [], []>} : vector<64x32xf32>, vector<32x64xf32>, vector<64x64xf32> -> vector<64x64xf32>
    %c953 = arith.constant 953 : index
    %c0_58 = arith.constant 0 : index
    %181 = vector.load %arg1[%c953, %c0_58] : memref<968x256xf32, #tpu.memory_space<vmem>>, vector<1x64xf32>
    %182 = vector.broadcast %181 : vector<1x64xf32> to vector<64x64xf32>
    %183 = arith.addf %180, %182 : vector<64x64xf32>
    %cst_59 = arith.constant 5.000000e-01 : f32
    %184 = vector.broadcast %cst_59 : f32 to vector<64x64xf32>
    %185 = arith.mulf %184, %183 : vector<64x64xf32>
    %cst_60 = arith.constant 0.707106769 : f32
    %186 = vector.broadcast %cst_60 : f32 to vector<64x64xf32>
    %187 = arith.mulf %183, %186 : vector<64x64xf32>
    %188 = math.erf %187 : vector<64x64xf32>
    %cst_61 = arith.constant 1.000000e+00 : f32
    %189 = vector.broadcast %cst_61 : f32 to vector<64x64xf32>
    %190 = arith.addf %189, %188 : vector<64x64xf32>
    %191 = arith.mulf %185, %190 : vector<64x64xf32>
    %c624 = arith.constant 624 : index
    %c0_62 = arith.constant 0 : index
    %192 = vector.load %arg1[%c624, %c0_62] : memref<968x256xf32, #tpu.memory_space<vmem>>, vector<64x32xf32>
    %cst_63 = arith.constant dense<0.000000e+00> : vector<64x32xf32>
    %193 = tpu.matmul %191, %192, %cst_63 {dimension_numbers = #tpu.dot_dimension_numbers<[1], [0], [0], [1], [0, 0, 1, 1], [], []>} : vector<64x64xf32>, vector<64x32xf32>, vector<64x32xf32> -> vector<64x32xf32>
    %c954 = arith.constant 954 : index
    %c0_64 = arith.constant 0 : index
    %194 = vector.load %arg1[%c954, %c0_64] : memref<968x256xf32, #tpu.memory_space<vmem>>, vector<1x32xf32>
    %195 = vector.broadcast %194 : vector<1x32xf32> to vector<64x32xf32>
    %196 = arith.addf %193, %195 : vector<64x32xf32>
    %197 = arith.addf %154, %196 : vector<64x32xf32>
    %c955 = arith.constant 955 : index
    %c0_65 = arith.constant 0 : index
    %198 = vector.load %arg1[%c955, %c0_65] : memref<968x256xf32, #tpu.memory_space<vmem>>, vector<1x32xf32>
    %c956 = arith.constant 956 : index
    %c0_66 = arith.constant 0 : index
    %199 = vector.load %arg1[%c956, %c0_66] : memref<968x256xf32, #tpu.memory_space<vmem>>, vector<1x32xf32>
    %cst_67 = arith.constant dense<0.000000e+00> : vector<64xf32>
    %200 = vector.multi_reduction <add>, %197, %cst_67 [1] : vector<64x32xf32> to vector<64xf32>
    %201 = vector.shape_cast %200 : vector<64xf32> to vector<64x1xf32>
    %cst_68 = arith.constant 3.200000e+01 : f32
    %202 = vector.broadcast %cst_68 : f32 to vector<64x1xf32>
    %203 = arith.divf %201, %202 : vector<64x1xf32>
    %204 = vector.broadcast %203 : vector<64x1xf32> to vector<64x32xf32>
    %205 = arith.subf %197, %204 : vector<64x32xf32>
    %206 = arith.mulf %205, %205 : vector<64x32xf32>
    %cst_69 = arith.constant dense<0.000000e+00> : vector<64xf32>
    %207 = vector.multi_reduction <add>, %206, %cst_69 [1] : vector<64x32xf32> to vector<64xf32>
    %208 = vector.shape_cast %207 : vector<64xf32> to vector<64x1xf32>
    %cst_70 = arith.constant 3.200000e+01 : f32
    %209 = vector.broadcast %cst_70 : f32 to vector<64x1xf32>
    %210 = arith.divf %208, %209 : vector<64x1xf32>
    %211 = vector.broadcast %203 : vector<64x1xf32> to vector<64x32xf32>
    %212 = arith.subf %197, %211 : vector<64x32xf32>
    %cst_71 = arith.constant 9.99999974E-6 : f32
    %213 = vector.broadcast %cst_71 : f32 to vector<64x1xf32>
    %214 = arith.addf %210, %213 : vector<64x1xf32>
    %215 = math.rsqrt %214 : vector<64x1xf32>
    %216 = vector.broadcast %215 : vector<64x1xf32> to vector<64x32xf32>
    %217 = arith.mulf %212, %216 : vector<64x32xf32>
    %218 = vector.broadcast %198 : vector<1x32xf32> to vector<64x32xf32>
    %219 = arith.mulf %217, %218 : vector<64x32xf32>
    %220 = vector.broadcast %199 : vector<1x32xf32> to vector<64x32xf32>
    %221 = arith.addf %219, %220 : vector<64x32xf32>
    %c688 = arith.constant 688 : index
    %c0_72 = arith.constant 0 : index
    %222 = vector.load %arg1[%c688, %c0_72] : memref<968x256xf32, #tpu.memory_space<vmem>>, vector<32x96xf32>
    %cst_73 = arith.constant dense<0.000000e+00> : vector<64x96xf32>
    %223 = tpu.matmul %221, %222, %cst_73 {dimension_numbers = #tpu.dot_dimension_numbers<[1], [0], [0], [1], [0, 0, 1, 1], [], []>} : vector<64x32xf32>, vector<32x96xf32>, vector<64x96xf32> -> vector<64x96xf32>
    %224 = vector.extract_strided_slice %223 {offsets = [0, 0], sizes = [64, 32], strides = [1, 1]} : vector<64x96xf32> to vector<64x32xf32>
    %225 = vector.extract_strided_slice %223 {offsets = [0, 32], sizes = [64, 32], strides = [1, 1]} : vector<64x96xf32> to vector<64x32xf32>
    %226 = vector.extract_strided_slice %223 {offsets = [0, 64], sizes = [64, 32], strides = [1, 1]} : vector<64x96xf32> to vector<64x32xf32>
    %227 = tpu.concatenate %224, %224, %224, %224 in 0 : vector<64x32xf32>, vector<64x32xf32>, vector<64x32xf32>, vector<64x32xf32> -> vector<256x32xf32>
    %228 = arith.mulf %227, %70 : vector<256x32xf32>
    %cst_74 = arith.constant dense<0.000000e+00> : vector<256x64xf32>
    %229 = tpu.matmul %228, %225, %cst_74 {dimension_numbers = #tpu.dot_dimension_numbers<[1], [1], [0], [0], [0, 0, 1, 0], [], []>} : vector<256x32xf32>, vector<64x32xf32>, vector<256x64xf32> -> vector<256x64xf32>
    %230 = arith.addf %229, %89 : vector<256x64xf32>
    %cst_75 = arith.constant dense<0xFF800000> : vector<256xf32>
    %231 = vector.multi_reduction <maximumf>, %230, %cst_75 [1] : vector<256x64xf32> to vector<256xf32>
    %232 = vector.shape_cast %231 : vector<256xf32> to vector<256x1xf32>
    %233 = vector.broadcast %232 : vector<256x1xf32> to vector<256x64xf32>
    %234 = arith.subf %230, %233 : vector<256x64xf32>
    %235 = math.exp %234 : vector<256x64xf32>
    %cst_76 = arith.constant dense<0.000000e+00> : vector<256xf32>
    %236 = vector.multi_reduction <add>, %235, %cst_76 [1] : vector<256x64xf32> to vector<256xf32>
    %237 = vector.shape_cast %236 : vector<256xf32> to vector<256x1xf32>
    %238 = tpu.reciprocal %237 {approx = true} : vector<256x1xf32> -> vector<256x1xf32>
    %239 = vector.broadcast %238 : vector<256x1xf32> to vector<256x64xf32>
    %240 = arith.mulf %235, %239 : vector<256x64xf32>
    %cst_77 = arith.constant dense<0.000000e+00> : vector<256x32xf32>
    %241 = tpu.matmul %240, %226, %cst_77 {dimension_numbers = #tpu.dot_dimension_numbers<[1], [0], [0], [1], [0, 0, 1, 1], [], []>} : vector<256x64xf32>, vector<64x32xf32>, vector<256x32xf32> -> vector<256x32xf32>
    %242 = vector.extract_strided_slice %241 {offsets = [0, 0], sizes = [64, 32], strides = [1, 1]} : vector<256x32xf32> to vector<64x32xf32>
    %243 = vector.extract_strided_slice %70 {offsets = [0, 0], sizes = [64, 32], strides = [1, 1]} : vector<256x32xf32> to vector<64x32xf32>
    %244 = arith.mulf %242, %243 : vector<64x32xf32>
    %245 = vector.extract_strided_slice %241 {offsets = [64, 0], sizes = [64, 32], strides = [1, 1]} : vector<256x32xf32> to vector<64x32xf32>
    %246 = vector.extract_strided_slice %70 {offsets = [64, 0], sizes = [64, 32], strides = [1, 1]} : vector<256x32xf32> to vector<64x32xf32>
    %247 = arith.mulf %245, %246 : vector<64x32xf32>
    %248 = arith.addf %244, %247 : vector<64x32xf32>
    %249 = vector.extract_strided_slice %241 {offsets = [128, 0], sizes = [64, 32], strides = [1, 1]} : vector<256x32xf32> to vector<64x32xf32>
    %250 = vector.extract_strided_slice %70 {offsets = [128, 0], sizes = [64, 32], strides = [1, 1]} : vector<256x32xf32> to vector<64x32xf32>
    %251 = arith.mulf %249, %250 : vector<64x32xf32>
    %252 = arith.addf %248, %251 : vector<64x32xf32>
    %253 = vector.extract_strided_slice %241 {offsets = [192, 0], sizes = [64, 32], strides = [1, 1]} : vector<256x32xf32> to vector<64x32xf32>
    %254 = vector.extract_strided_slice %70 {offsets = [192, 0], sizes = [64, 32], strides = [1, 1]} : vector<256x32xf32> to vector<64x32xf32>
    %255 = arith.mulf %253, %254 : vector<64x32xf32>
    %256 = arith.addf %252, %255 : vector<64x32xf32>
    %c720 = arith.constant 720 : index
    %c0_78 = arith.constant 0 : index
    %257 = vector.load %arg1[%c720, %c0_78] : memref<968x256xf32, #tpu.memory_space<vmem>>, vector<32x32xf32>
    %cst_79 = arith.constant dense<0.000000e+00> : vector<64x32xf32>
    %258 = tpu.matmul %256, %257, %cst_79 {dimension_numbers = #tpu.dot_dimension_numbers<[1], [0], [0], [1], [0, 0, 1, 1], [], []>} : vector<64x32xf32>, vector<32x32xf32>, vector<64x32xf32> -> vector<64x32xf32>
    %c957 = arith.constant 957 : index
    %c0_80 = arith.constant 0 : index
    %259 = vector.load %arg1[%c957, %c0_80] : memref<968x256xf32, #tpu.memory_space<vmem>>, vector<1x32xf32>
    %260 = vector.broadcast %259 : vector<1x32xf32> to vector<64x32xf32>
    %261 = arith.addf %258, %260 : vector<64x32xf32>
    %262 = arith.addf %197, %261 : vector<64x32xf32>
    %c958 = arith.constant 958 : index
    %c0_81 = arith.constant 0 : index
    %263 = vector.load %arg1[%c958, %c0_81] : memref<968x256xf32, #tpu.memory_space<vmem>>, vector<1x32xf32>
    %c959 = arith.constant 959 : index
    %c0_82 = arith.constant 0 : index
    %264 = vector.load %arg1[%c959, %c0_82] : memref<968x256xf32, #tpu.memory_space<vmem>>, vector<1x32xf32>
    %cst_83 = arith.constant dense<0.000000e+00> : vector<64xf32>
    %265 = vector.multi_reduction <add>, %262, %cst_83 [1] : vector<64x32xf32> to vector<64xf32>
    %266 = vector.shape_cast %265 : vector<64xf32> to vector<64x1xf32>
    %cst_84 = arith.constant 3.200000e+01 : f32
    %267 = vector.broadcast %cst_84 : f32 to vector<64x1xf32>
    %268 = arith.divf %266, %267 : vector<64x1xf32>
    %269 = vector.broadcast %268 : vector<64x1xf32> to vector<64x32xf32>
    %270 = arith.subf %262, %269 : vector<64x32xf32>
    %271 = arith.mulf %270, %270 : vector<64x32xf32>
    %cst_85 = arith.constant dense<0.000000e+00> : vector<64xf32>
    %272 = vector.multi_reduction <add>, %271, %cst_85 [1] : vector<64x32xf32> to vector<64xf32>
    %273 = vector.shape_cast %272 : vector<64xf32> to vector<64x1xf32>
    %cst_86 = arith.constant 3.200000e+01 : f32
    %274 = vector.broadcast %cst_86 : f32 to vector<64x1xf32>
    %275 = arith.divf %273, %274 : vector<64x1xf32>
    %276 = vector.broadcast %268 : vector<64x1xf32> to vector<64x32xf32>
    %277 = arith.subf %262, %276 : vector<64x32xf32>
    %cst_87 = arith.constant 9.99999974E-6 : f32
    %278 = vector.broadcast %cst_87 : f32 to vector<64x1xf32>
    %279 = arith.addf %275, %278 : vector<64x1xf32>
    %280 = math.rsqrt %279 : vector<64x1xf32>
    %281 = vector.broadcast %280 : vector<64x1xf32> to vector<64x32xf32>
    %282 = arith.mulf %277, %281 : vector<64x32xf32>
    %283 = vector.broadcast %263 : vector<1x32xf32> to vector<64x32xf32>
    %284 = arith.mulf %282, %283 : vector<64x32xf32>
    %285 = vector.broadcast %264 : vector<1x32xf32> to vector<64x32xf32>
    %286 = arith.addf %284, %285 : vector<64x32xf32>
    %c752 = arith.constant 752 : index
    %c0_88 = arith.constant 0 : index
    %287 = vector.load %arg1[%c752, %c0_88] : memref<968x256xf32, #tpu.memory_space<vmem>>, vector<32x64xf32>
    %cst_89 = arith.constant dense<0.000000e+00> : vector<64x64xf32>
    %288 = tpu.matmul %286, %287, %cst_89 {dimension_numbers = #tpu.dot_dimension_numbers<[1], [0], [0], [1], [0, 0, 1, 1], [], []>} : vector<64x32xf32>, vector<32x64xf32>, vector<64x64xf32> -> vector<64x64xf32>
    %c960 = arith.constant 960 : index
    %c0_90 = arith.constant 0 : index
    %289 = vector.load %arg1[%c960, %c0_90] : memref<968x256xf32, #tpu.memory_space<vmem>>, vector<1x64xf32>
    %290 = vector.broadcast %289 : vector<1x64xf32> to vector<64x64xf32>
    %291 = arith.addf %288, %290 : vector<64x64xf32>
    %cst_91 = arith.constant 5.000000e-01 : f32
    %292 = vector.broadcast %cst_91 : f32 to vector<64x64xf32>
    %293 = arith.mulf %292, %291 : vector<64x64xf32>
    %cst_92 = arith.constant 0.707106769 : f32
    %294 = vector.broadcast %cst_92 : f32 to vector<64x64xf32>
    %295 = arith.mulf %291, %294 : vector<64x64xf32>
    %296 = math.erf %295 : vector<64x64xf32>
    %cst_93 = arith.constant 1.000000e+00 : f32
    %297 = vector.broadcast %cst_93 : f32 to vector<64x64xf32>
    %298 = arith.addf %297, %296 : vector<64x64xf32>
    %299 = arith.mulf %293, %298 : vector<64x64xf32>
    %c784 = arith.constant 784 : index
    %c0_94 = arith.constant 0 : index
    %300 = vector.load %arg1[%c784, %c0_94] : memref<968x256xf32, #tpu.memory_space<vmem>>, vector<64x32xf32>
    %cst_95 = arith.constant dense<0.000000e+00> : vector<64x32xf32>
    %301 = tpu.matmul %299, %300, %cst_95 {dimension_numbers = #tpu.dot_dimension_numbers<[1], [0], [0], [1], [0, 0, 1, 1], [], []>} : vector<64x64xf32>, vector<64x32xf32>, vector<64x32xf32> -> vector<64x32xf32>
    %c961 = arith.constant 961 : index
    %c0_96 = arith.constant 0 : index
    %302 = vector.load %arg1[%c961, %c0_96] : memref<968x256xf32, #tpu.memory_space<vmem>>, vector<1x32xf32>
    %303 = vector.broadcast %302 : vector<1x32xf32> to vector<64x32xf32>
    %304 = arith.addf %301, %303 : vector<64x32xf32>
    %305 = arith.addf %262, %304 : vector<64x32xf32>
    %306 = vector.extract_strided_slice %305 {offsets = [0, 0], sizes = [1, 32], strides = [1, 1]} : vector<64x32xf32> to vector<1x32xf32>
    %307 = vector.extract_strided_slice %305 {offsets = [32, 0], sizes = [1, 32], strides = [1, 1]} : vector<64x32xf32> to vector<1x32xf32>
    %308 = tpu.concatenate %306, %307 in 0 : vector<1x32xf32>, vector<1x32xf32> -> vector<2x32xf32>
    %c848 = arith.constant 848 : index
    %c0_97 = arith.constant 0 : index
    %309 = vector.load %arg1[%c848, %c0_97] : memref<968x256xf32, #tpu.memory_space<vmem>>, vector<32x64xf32>
    %cst_98 = arith.constant dense<0.000000e+00> : vector<2x64xf32>
    %310 = tpu.matmul %308, %309, %cst_98 {dimension_numbers = #tpu.dot_dimension_numbers<[1], [0], [0], [1], [0, 0, 1, 1], [], []>} : vector<2x32xf32>, vector<32x64xf32>, vector<2x64xf32> -> vector<2x64xf32>
    %c962 = arith.constant 962 : index
    %c0_99 = arith.constant 0 : index
    %311 = vector.load %arg1[%c962, %c0_99] : memref<968x256xf32, #tpu.memory_space<vmem>>, vector<1x64xf32>
    %312 = vector.broadcast %311 : vector<1x64xf32> to vector<2x64xf32>
    %313 = arith.addf %310, %312 : vector<2x64xf32>
    %cst_100 = arith.constant 0.000000e+00 : f32
    %314 = vector.broadcast %cst_100 : f32 to vector<2x64xf32>
    %315 = arith.maximumf %313, %314 : vector<2x64xf32>
    %c880 = arith.constant 880 : index
    %c0_101 = arith.constant 0 : index
    %316 = vector.load %arg1[%c880, %c0_101] : memref<968x256xf32, #tpu.memory_space<vmem>>, vector<64x2xf32>
    %cst_102 = arith.constant dense<0.000000e+00> : vector<2x2xf32>
    %317 = tpu.matmul %315, %316, %cst_102 {dimension_numbers = #tpu.dot_dimension_numbers<[1], [0], [0], [1], [0, 0, 1, 1], [], []>} : vector<2x64xf32>, vector<64x2xf32>, vector<2x2xf32> -> vector<2x2xf32>
    %c963 = arith.constant 963 : index
    %c0_103 = arith.constant 0 : index
    %318 = vector.load %arg1[%c963, %c0_103] : memref<968x256xf32, #tpu.memory_space<vmem>>, vector<1x2xf32>
    %319 = vector.broadcast %318 : vector<1x2xf32> to vector<2x2xf32>
    %320 = arith.addf %317, %319 : vector<2x2xf32>
    %c0_104 = arith.constant 0 : index
    %c0_105 = arith.constant 0 : index
    %321 = vector.load %arg2[%c0_104, %c0_105] : memref<2x2xf32, #tpu.memory_space<vmem>>, vector<2x2xf32>
    tpu.vector_store %arg2[%c0_104, %c0_105], %320 {strides = array<i32>} : memref<2x2xf32, #tpu.memory_space<vmem>>, vector<2x2xf32>,
    return
  }
}

</mosaic_0001>

<llo_original>
// kernel: efficient_vit_forward.1
$region0: #{efficient_vit_forward.1}
  #allocation0 [shape = 'u32[]', space=smem, size = 0x4, offset = 0x4, fixed_abs, tag = 'smem constant byte address 0x4 - core index']
  #allocation1 [shape = 'u32[72,128]{1,0:T(1,128)}', space=vmem, size = 0x9000, scoped, tag = 'internal scratch']
  %s0 = inlined_call_operand.vmem [shape: f32[32,256], index: 0, kind: input, shape index: {}]
  %s1 = inlined_call_operand.vmem [shape: f32[968,256], index: 1, kind: input, shape index: {}]
  %s2 = inlined_call_operand.hbm [shape: f32[2,2], index: 2, kind: output, shape index: {}]
  %s3 = sld [smem:[#allocation0]]
  $region18: #{efficient_vit_forward.1} parent=0
    _
  %s5 = ssub.s32 1, %s3
  %s6 = scalar_select 0, %s5, %s3
  $region1: #{efficient_vit_forward.1} parent=0
    #allocation2 [shape = 'u8[1024]{0}', space=vmem, size = 0x400, scoped, tag = 'output window, operand 0, single buffered']
    #allocation3 [shape = 's32[1]{0}', space=sflag, size = 0x4, scoped, tag = 'scoped memory for efficient_vit_forward.1']
    %7 = vsyncpa [#allocation3], 0
    // Predicated region
    $region2: #{efficient_vit_forward.1} parent=1 // pred_check
      _
    $region3: #{efficient_vit_forward.1} parent=1 // pred_check_branch
      %9 = sbr.rel (0) target = $region5
    $region4: #{efficient_vit_forward.1} parent=1 // pred_region
      _
    $region5: #{efficient_vit_forward.1} parent=1 // pred_fallthru
      _
    // Predicated region
    $region6: #{efficient_vit_forward.1} parent=1 // pred_check
      _
    $region7: #{efficient_vit_forward.1} parent=1 // pred_check_branch
      %11 = sbr.rel (0) target = $region9
    $region8: #{efficient_vit_forward.1} parent=1 // pred_region
      _
    $region9: #{efficient_vit_forward.1} parent=1 // pred_fallthru
      _
    %v12 = vld [vmem:[%s0] sm:$0xff]
    %v13 = vld [vmem:[%s0 + $0x8] sm:$0xff]
    %v14 = vld [vmem:[%s0 + $0x10] sm:$0xff]
    %v15 = vld [vmem:[%s0 + $0x18] sm:$0xff]
    %v16 = vld [vmem:[%s0 + $0x20] sm:$0xff]
    %v17 = vld [vmem:[%s0 + $0x28] sm:$0xff]
    %v18 = vld [vmem:[%s0 + $0x30] sm:$0xff]
    %v19 = vld [vmem:[%s0 + $0x38] sm:$0xff]
    %v20 = vld [vmem:[%s1] sm:$0xff]
    %v21 = vld [vmem:[%s1 + $0x10] sm:$0xff]
    %v22 = vld [vmem:[%s1 + $0x20] sm:$0xff]
    %v23 = vld [vmem:[%s1 + $0x30] sm:$0xff]
    %v24 = vld [vmem:[%s1 + $0x40] sm:$0xff]
    %v25 = vld [vmem:[%s1 + $0x50] sm:$0xff]
    %v26 = vld [vmem:[%s1 + $0x60] sm:$0xff]
    %v27 = vld [vmem:[%s1 + $0x70] sm:$0xff]
    %v28 = vld [vmem:[%s1 + $0x80] sm:$0xff]
    %v29 = vld [vmem:[%s1 + $0x90] sm:$0xff]
    %v30 = vld [vmem:[%s1 + $0xa0] sm:$0xff]
    %v31 = vld [vmem:[%s1 + $0xb0] sm:$0xff]
    %v32 = vld [vmem:[%s1 + $0xc0] sm:$0xff]
    %v33 = vld [vmem:[%s1 + $0xd0] sm:$0xff]
    %v34 = vld [vmem:[%s1 + $0xe0] sm:$0xff]
    %v35 = vld [vmem:[%s1 + $0xf0] sm:$0xff]
    %v36 = vld [vmem:[%s1 + $0x100] sm:$0xff]
    %v37 = vld [vmem:[%s1 + $0x110] sm:$0xff]
    %v38 = vld [vmem:[%s1 + $0x120] sm:$0xff]
    %v39 = vld [vmem:[%s1 + $0x130] sm:$0xff]
    %v40 = vld [vmem:[%s1 + $0x140] sm:$0xff]
    %v41 = vld [vmem:[%s1 + $0x150] sm:$0xff]
    %v42 = vld [vmem:[%s1 + $0x160] sm:$0xff]
    %v43 = vld [vmem:[%s1 + $0x170] sm:$0xff]
    %v44 = vld [vmem:[%s1 + $0x180] sm:$0xff]
    %v45 = vld [vmem:[%s1 + $0x190] sm:$0xff]
    %v46 = vld [vmem:[%s1 + $0x1a0] sm:$0xff]
    %v47 = vld [vmem:[%s1 + $0x1b0] sm:$0xff]
    %v48 = vld [vmem:[%s1 + $0x1c0] sm:$0xff]
    %v49 = vld [vmem:[%s1 + $0x1d0] sm:$0xff]
    %v50 = vld [vmem:[%s1 + $0x1e0] sm:$0xff]
    %v51 = vld [vmem:[%s1 + $0x1f0] sm:$0xff]
    %v52 = vld [vmem:[%s1 + $0x760] ss:$0 sm:$0xff]
    %53 = vmatpush.msra.mxu0 %v35
    %54 = vmatpush.msra.mxu0 %v34
    %55 = vmatpush.msra.mxu0 %v33
    %56 = vmatpush.msra.mxu0 %v32
    %57 = vmatpush.msra.mxu0 %v31
    %58 = vmatpush.msra.mxu0 %v30
    %59 = vmatpush.msra.mxu0 %v29
    %60 = vmatpush.msra.mxu0 %v28
    %61 = vmatpush.msra.mxu0 %v27
    %62 = vmatpush.msra.mxu0 %v26
    %63 = vmatpush.msra.mxu0 %v25
    %64 = vmatpush.msra.mxu0 %v24
    %65 = vmatpush.msra.mxu0 %v23
    %66 = vmatpush.msra.mxu0 %v22
    %67 = vmatpush.msra.mxu0 %v21
    %68 = vmatpush.msra.mxu0 %v20
    %69 = vmatmul.f32.gmra.mxu0 %v12
    %v70 = vpop.f32.mrf.mxu0
    %v71 = vadd.f32 %v52, %v70
    %72 = vmatmul.f32.gmra.mxu0 %v14
    %v73 = vpop.f32.mrf.mxu0
    %v74 = vadd.f32 %v52, %v73
    %75 = vmatmul.f32.gmra.mxu0 %v16
    %v76 = vpop.f32.mrf.mxu0
    %v77 = vadd.f32 %v52, %v76
    %78 = vmatmul.f32.gmra.mxu0 %v18
    %v79 = vpop.f32.mrf.mxu0
    %v80 = vadd.f32 %v52, %v79
    %81 = vdwg.mxu0
    %82 = vmatpush.msra.mxu0 %v51
    %83 = vmatpush.msra.mxu0 %v50
    %84 = vmatpush.msra.mxu0 %v49
    %85 = vmatpush.msra.mxu0 %v48
    %86 = vmatpush.msra.mxu0 %v47
    %87 = vmatpush.msra.mxu0 %v46
    %88 = vmatpush.msra.mxu0 %v45
    %89 = vmatpush.msra.mxu0 %v44
    %90 = vmatpush.msra.mxu0 %v43
    %91 = vmatpush.msra.mxu0 %v42
    %92 = vmatpush.msra.mxu0 %v41
    %93 = vmatpush.msra.mxu0 %v40
    %94 = vmatpush.msra.mxu0 %v39
    %95 = vmatpush.msra.mxu0 %v38
    %96 = vmatpush.msra.mxu0 %v37
    %97 = vmatpush.msra.mxu0 %v36
    %98 = vmatmul.f32.gmra.mxu0 %v13
    %v99 = vpop.f32.mrf.mxu0
    %v100 = vadd.f32 %v71, %v99
    %101 = vmatmul.f32.gmra.mxu0 %v15
    %v102 = vpop.f32.mrf.mxu0
    %v103 = vadd.f32 %v74, %v102
    %104 = vmatmul.f32.gmra.mxu0 %v17
    %v105 = vpop.f32.mrf.mxu0
    %v106 = vadd.f32 %v77, %v105
    %107 = vmatmul.f32.gmra.mxu0 %v19
    %v108 = vpop.f32.mrf.mxu0
    %v109 = vadd.f32 %v80, %v108
    %110 = vdwg.mxu0
    %v111 = vmax.f32 %v100, 0.0
    %v112 = vmax.f32 %v103, 0.0
    %v113 = vmax.f32 %v106, 0.0
    %v114 = vmax.f32 %v109, 0.0
    %v115 = vld [vmem:[%s1 + $0x200] sm:$0xff]
    %v116 = vld [vmem:[%s1 + $0x208] sm:$0xff]
    %v117 = vld [vmem:[%s1 + $0x210] sm:$0xff]
    %v118 = vld [vmem:[%s1 + $0x218] sm:$0xff]
    %s119 = scalar_lea.vmem %s1, 1889
    %v120 = vld [vmem:[%s119] ss:$8 sm:$0x3]
    %v122 = vperm.slane %v120, 0
    %v123 = vperm.slane %v120, 1
    %vm126 = vcmask 130048
    %v128 = vsel %vm126, %v111, 0
    %v131 = vsel %vm126, %v112, 0
    %v134 = vsel %vm126, %v113, 0
    %v137 = vsel %vm126, %v114, 0
    %139 = vmatpush.msra.mxu0 0.0
    %140 = vmatpush.msra.mxu0 0.0
    %141 = vmatpush.msra.mxu0 0.0
    %142 = vmatpush.msra.mxu0 0.0
    %143 = vmatpush.msra.mxu0 0.0
    %144 = vmatpush.msra.mxu0 0.0
    %145 = vmatpush.msra.mxu0 0.0
    %146 = vmatpush.msra.mxu0 0.0
    %147 = vmatpush.msra.mxu0 0.0
    %148 = vmatpush.msra.mxu0 0.0
    %149 = vmatpush.msra.mxu0 0.0
    %150 = vmatpush.msra.mxu0 0.0
    %151 = vmatpush.msra.mxu0 0.0
    %152 = vmatpush.msra.mxu0 0.0
    %153 = vmatpush.msra.mxu0 %v117
    %154 = vmatpush.msra.mxu0 %v115
    %155 = vmatmul.f32.gmra.mxu0 %v128
    %v156 = vpop.f32.mrf.mxu0
    %v157 = vadd.f32 %v122, %v156
    %158 = vmatmul.f32.gmra.mxu0 %v131
    %v159 = vpop.f32.mrf.mxu0
    %v160 = vadd.f32 %v122, %v159
    %161 = vmatmul.f32.gmra.mxu0 %v134
    %v162 = vpop.f32.mrf.mxu0
    %v163 = vadd.f32 %v122, %v162
    %164 = vmatmul.f32.gmra.mxu0 %v137
    %v165 = vpop.f32.mrf.mxu0
    %v166 = vadd.f32 %v122, %v165
    %167 = vdwg.mxu0
    %168 = vmatpush.msra.mxu0 0.0
    %169 = vmatpush.msra.mxu0 0.0
    %170 = vmatpush.msra.mxu0 0.0
    %171 = vmatpush.msra.mxu0 0.0
    %172 = vmatpush.msra.mxu0 0.0
    %173 = vmatpush.msra.mxu0 0.0
    %174 = vmatpush.msra.mxu0 0.0
    %175 = vmatpush.msra.mxu0 0.0
    %176 = vmatpush.msra.mxu0 0.0
    %177 = vmatpush.msra.mxu0 0.0
    %178 = vmatpush.msra.mxu0 0.0
    %179 = vmatpush.msra.mxu0 0.0
    %180 = vmatpush.msra.mxu0 0.0
    %181 = vmatpush.msra.mxu0 0.0
    %182 = vmatpush.msra.mxu0 %v118
    %183 = vmatpush.msra.mxu0 %v116
    %184 = vmatmul.f32.gmra.mxu0 %v128
    %v185 = vpop.f32.mrf.mxu0
    %v186 = vadd.f32 %v123, %v185
    %187 = vmatmul.f32.gmra.mxu0 %v131
    %v188 = vpop.f32.mrf.mxu0
    %v189 = vadd.f32 %v123, %v188
    %190 = vmatmul.f32.gmra.mxu0 %v134
    %v191 = vpop.f32.mrf.mxu0
    %v192 = vadd.f32 %v123, %v191
    %193 = vmatmul.f32.gmra.mxu0 %v137
    %v194 = vpop.f32.mrf.mxu0
    %v195 = vadd.f32 %v123, %v194
    %196 = vdwg.mxu0
    %v197 = vxor.u32 %v157, 2147483648
    %v198 = vxor.u32 %v186, 2147483648
    %v199 = vxor.u32 %v160, 2147483648
    %v200 = vxor.u32 %v189, 2147483648
    %v201 = vxor.u32 %v163, 2147483648
    %v202 = vxor.u32 %v192, 2147483648
    %v203 = vxor.u32 %v166, 2147483648
    %v204 = vxor.u32 %v195, 2147483648
    %v205 = vmul.f32 %v197, 1.442695
    %v206 = vpow.pop %v205
    %v207 = vmul.f32 %v198, 1.442695
    %v208 = vpow.pop %v207
    %v209 = vmul.f32 %v199, 1.442695
    %v210 = vpow.pop %v209
    %v211 = vmul.f32 %v200, 1.442695
    %v212 = vpow.pop %v211
    %v213 = vmul.f32 %v201, 1.442695
    %v214 = vpow.pop %v213
    %v215 = vmul.f32 %v202, 1.442695
    %v216 = vpow.pop %v215
    %v217 = vmul.f32 %v203, 1.442695
    %v218 = vpow.pop %v217
    %v219 = vmul.f32 %v204, 1.442695
    %v220 = vpow.pop %v219
    %v221 = vadd.f32 %v206, 1.0
    %v222 = vadd.f32 %v208, 1.0
    %v223 = vadd.f32 %v210, 1.0
    %v224 = vadd.f32 %v212, 1.0
    %v225 = vadd.f32 %v214, 1.0
    %v226 = vadd.f32 %v216, 1.0
    %v227 = vadd.f32 %v218, 1.0
    %v228 = vadd.f32 %v220, 1.0
    %v229 = vrcp.pop %v221
    %v230 = vmul.f32 %v221, %v229
    %v231 = vsub.f32 1.0, %v230
    %v232 = vmul.f32 %v229, %v231
    %v233 = vadd.f32 %v229, %v232
    %vm234 = vweird.f32 %v221
    %vm235 = vweird.f32 %v229
    %vm236 = vmor %vm234, %vm235
    %v237 = vsel %vm236, %v229, %v233
    %v238 = vand.u32 2147483647, %v221
    %vm239 = vcmp.eq.f32.partialorder %v238, 8.507059e+37
    %v240 = vand.u32 %v221, 2147483648
    %v241 = vor.u32 1.1754944e-38, %v240
    %v242 = vsel %vm239, %v241, %v237
    %v243 = vmul.f32 1.0, %v242
    %v244 = vrcp.pop %v222
    %v245 = vmul.f32 %v222, %v244
    %v246 = vsub.f32 1.0, %v245
    %v247 = vmul.f32 %v244, %v246
    %v248 = vadd.f32 %v244, %v247
    %vm249 = vweird.f32 %v222
    %vm250 = vweird.f32 %v244
    %vm251 = vmor %vm249, %vm250
    %v252 = vsel %vm251, %v244, %v248
    %v253 = vand.u32 2147483647, %v222
    %vm254 = vcmp.eq.f32.partialorder %v253, 8.507059e+37
    %v255 = vand.u32 %v222, 2147483648
    %v256 = vor.u32 1.1754944e-38, %v255
    %v257 = vsel %vm254, %v256, %v252
    %v258 = vmul.f32 1.0, %v257
    %v259 = vrcp.pop %v223
    %v260 = vmul.f32 %v223, %v259
    %v261 = vsub.f32 1.0, %v260
    %v262 = vmul.f32 %v259, %v261
    %v263 = vadd.f32 %v259, %v262
    %vm264 = vweird.f32 %v223
    %vm265 = vweird.f32 %v259
    %vm266 = vmor %vm264, %vm265
    %v267 = vsel %vm266, %v259, %v263
    %v268 = vand.u32 2147483647, %v223
    %vm269 = vcmp.eq.f32.partialorder %v268, 8.507059e+37
    %v270 = vand.u32 %v223, 2147483648
    %v271 = vor.u32 1.1754944e-38, %v270
    %v272 = vsel %vm269, %v271, %v267
    %v273 = vmul.f32 1.0, %v272
    %v274 = vrcp.pop %v224
    %v275 = vmul.f32 %v224, %v274
    %v276 = vsub.f32 1.0, %v275
    %v277 = vmul.f32 %v274, %v276
    %v278 = vadd.f32 %v274, %v277
    %vm279 = vweird.f32 %v224
    %vm280 = vweird.f32 %v274
    %vm281 = vmor %vm279, %vm280
    %v282 = vsel %vm281, %v274, %v278
    %v283 = vand.u32 2147483647, %v224
    %vm284 = vcmp.eq.f32.partialorder %v283, 8.507059e+37
    %v285 = vand.u32 %v224, 2147483648
    %v286 = vor.u32 1.1754944e-38, %v285
    %v287 = vsel %vm284, %v286, %v282
    %v288 = vmul.f32 1.0, %v287
    %v289 = vrcp.pop %v225
    %v290 = vmul.f32 %v225, %v289
    %v291 = vsub.f32 1.0, %v290
    %v292 = vmul.f32 %v289, %v291
    %v293 = vadd.f32 %v289, %v292
    %vm294 = vweird.f32 %v225
    %vm295 = vweird.f32 %v289
    %vm296 = vmor %vm294, %vm295
    %v297 = vsel %vm296, %v289, %v293
    %v298 = vand.u32 2147483647, %v225
    %vm299 = vcmp.eq.f32.partialorder %v298, 8.507059e+37
    %v300 = vand.u32 %v225, 2147483648
    %v301 = vor.u32 1.1754944e-38, %v300
    %v302 = vsel %vm299, %v301, %v297
    %v303 = vmul.f32 1.0, %v302
    %v304 = vrcp.pop %v226
    %v305 = vmul.f32 %v226, %v304
    %v306 = vsub.f32 1.0, %v305
    %v307 = vmul.f32 %v304, %v306
    %v308 = vadd.f32 %v304, %v307
    %vm309 = vweird.f32 %v226
    %vm310 = vweird.f32 %v304
    %vm311 = vmor %vm309, %vm310
    %v312 = vsel %vm311, %v304, %v308
    %v313 = vand.u32 2147483647, %v226
    %vm314 = vcmp.eq.f32.partialorder %v313, 8.507059e+37
    %v315 = vand.u32 %v226, 2147483648
    %v316 = vor.u32 1.1754944e-38, %v315
    %v317 = vsel %vm314, %v316, %v312
    %v318 = vmul.f32 1.0, %v317
    %v319 = vrcp.pop %v227
    %v320 = vmul.f32 %v227, %v319
    %v321 = vsub.f32 1.0, %v320
    %v322 = vmul.f32 %v319, %v321
    %v323 = vadd.f32 %v319, %v322
    %vm324 = vweird.f32 %v227
    %vm325 = vweird.f32 %v319
    %vm326 = vmor %vm324, %vm325
    %v327 = vsel %vm326, %v319, %v323
    %v328 = vand.u32 2147483647, %v227
    %vm329 = vcmp.eq.f32.partialorder %v328, 8.507059e+37
    %v330 = vand.u32 %v227, 2147483648
    %v331 = vor.u32 1.1754944e-38, %v330
    %v332 = vsel %vm329, %v331, %v327
    %v333 = vmul.f32 1.0, %v332
    %v334 = vrcp.pop %v228
    %v335 = vmul.f32 %v228, %v334
    %v336 = vsub.f32 1.0, %v335
    %v337 = vmul.f32 %v334, %v336
    %v338 = vadd.f32 %v334, %v337
    %vm339 = vweird.f32 %v228
    %vm340 = vweird.f32 %v334
    %vm341 = vmor %vm339, %vm340
    %v342 = vsel %vm341, %v334, %v338
    %v343 = vand.u32 2147483647, %v228
    %vm344 = vcmp.eq.f32.partialorder %v343, 8.507059e+37
    %v345 = vand.u32 %v228, 2147483648
    %v346 = vor.u32 1.1754944e-38, %v345
    %v347 = vsel %vm344, %v346, %v342
    %v348 = vmul.f32 1.0, %v347
    %v349 = vmul.f32 %v12, %v243
    %v350 = vmul.f32 %v13, %v258
    %v351 = vmul.f32 %v14, %v273
    %v352 = vmul.f32 %v15, %v288
    %v353 = vmul.f32 %v16, %v303
    %v354 = vmul.f32 %v17, %v318
    %v355 = vmul.f32 %v18, %v333
    %v356 = vmul.f32 %v19, %v348
    %v357 = vld [vmem:[%s1 + $0x220] sm:$0xff]
    %v358 = vld [vmem:[%s1 + $0x230] sm:$0xff]
    %v359 = vld [vmem:[%s1 + $0x240] sm:$0xff]
    %v360 = vld [vmem:[%s1 + $0x250] sm:$0xff]
    %v361 = vld [vmem:[%s1 + $0x260] sm:$0xff]
    %v362 = vld [vmem:[%s1 + $0x270] sm:$0xff]
    %v363 = vld [vmem:[%s1 + $0x280] sm:$0xff]
    %v364 = vld [vmem:[%s1 + $0x290] sm:$0xff]
    %v365 = vld [vmem:[%s1 + $0x2a0] sm:$0xff]
    %v366 = vld [vmem:[%s1 + $0x2b0] sm:$0xff]
    %v367 = vld [vmem:[%s1 + $0x2c0] sm:$0xff]
    %v368 = vld [vmem:[%s1 + $0x2d0] sm:$0xff]
    %v369 = vld [vmem:[%s1 + $0x2e0] sm:$0xff]
    %v370 = vld [vmem:[%s1 + $0x2f0] sm:$0xff]
    %v371 = vld [vmem:[%s1 + $0x300] sm:$0xff]
    %v372 = vld [vmem:[%s1 + $0x310] sm:$0xff]
    %v373 = vld [vmem:[%s1 + $0x320] sm:$0xff]
    %v374 = vld [vmem:[%s1 + $0x330] sm:$0xff]
    %v375 = vld [vmem:[%s1 + $0x340] sm:$0xff]
    %v376 = vld [vmem:[%s1 + $0x350] sm:$0xff]
    %v377 = vld [vmem:[%s1 + $0x360] sm:$0xff]
    %v378 = vld [vmem:[%s1 + $0x370] sm:$0xff]
    %v379 = vld [vmem:[%s1 + $0x380] sm:$0xff]
    %v380 = vld [vmem:[%s1 + $0x390] sm:$0xff]
    %v381 = vld [vmem:[%s1 + $0x3a0] sm:$0xff]
    %v382 = vld [vmem:[%s1 + $0x3b0] sm:$0xff]
    %v383 = vld [vmem:[%s1 + $0x3c0] sm:$0xff]
    %v384 = vld [vmem:[%s1 + $0x3d0] sm:$0xff]
    %v385 = vld [vmem:[%s1 + $0x3e0] sm:$0xff]
    %v386 = vld [vmem:[%s1 + $0x3f0] sm:$0xff]
    %v387 = vld [vmem:[%s1 + $0x400] sm:$0xff]
    %v388 = vld [vmem:[%s1 + $0x410] sm:$0xff]
    %v389 = vld [vmem:[%s1 + $0x762] ss:$0 sm:$0xff]
    %390 = vmatpush.msra.mxu0 %v372
    %391 = vmatpush.msra.mxu0 %v371
    %392 = vmatpush.msra.mxu0 %v370
    %393 = vmatpush.msra.mxu0 %v369
    %394 = vmatpush.msra.mxu0 %v368
    %395 = vmatpush.msra.mxu0 %v367
    %396 = vmatpush.msra.mxu0 %v366
    %397 = vmatpush.msra.mxu0 %v365
    %398 = vmatpush.msra.mxu0 %v364
    %399 = vmatpush.msra.mxu0 %v363
    %400 = vmatpush.msra.mxu0 %v362
    %401 = vmatpush.msra.mxu0 %v361
    %402 = vmatpush.msra.mxu0 %v360
    %403 = vmatpush.msra.mxu0 %v359
    %404 = vmatpush.msra.mxu0 %v358
    %405 = vmatpush.msra.mxu0 %v357
    %406 = vmatmul.f32.gmra.mxu0 %v349
    %v407 = vpop.f32.mrf.mxu0
    %v408 = vadd.f32 %v389, %v407
    %409 = vmatmul.f32.gmra.mxu0 %v351
    %v410 = vpop.f32.mrf.mxu0
    %v411 = vadd.f32 %v389, %v410
    %412 = vmatmul.f32.gmra.mxu0 %v353
    %v413 = vpop.f32.mrf.mxu0
    %v414 = vadd.f32 %v389, %v413
    %415 = vmatmul.f32.gmra.mxu0 %v355
    %v416 = vpop.f32.mrf.mxu0
    %v417 = vadd.f32 %v389, %v416
    %418 = vdwg.mxu0
    %419 = vmatpush.msra.mxu0 %v388
    %420 = vmatpush.msra.mxu0 %v387
    %421 = vmatpush.msra.mxu0 %v386
    %422 = vmatpush.msra.mxu0 %v385
    %423 = vmatpush.msra.mxu0 %v384
    %424 = vmatpush.msra.mxu0 %v383
    %425 = vmatpush.msra.mxu0 %v382
    %426 = vmatpush.msra.mxu0 %v381
    %427 = vmatpush.msra.mxu0 %v380
    %428 = vmatpush.msra.mxu0 %v379
    %429 = vmatpush.msra.mxu0 %v378
    %430 = vmatpush.msra.mxu0 %v377
    %431 = vmatpush.msra.mxu0 %v376
    %432 = vmatpush.msra.mxu0 %v375
    %433 = vmatpush.msra.mxu0 %v374
    %434 = vmatpush.msra.mxu0 %v373
    %435 = vmatmul.f32.gmra.mxu0 %v350
    %v436 = vpop.f32.mrf.mxu0
    %v437 = vadd.f32 %v408, %v436
    %438 = vmatmul.f32.gmra.mxu0 %v352
    %v439 = vpop.f32.mrf.mxu0
    %v440 = vadd.f32 %v411, %v439
    %441 = vmatmul.f32.gmra.mxu0 %v354
    %v442 = vpop.f32.mrf.mxu0
    %v443 = vadd.f32 %v414, %v442
    %444 = vmatmul.f32.gmra.mxu0 %v356
    %v445 = vpop.f32.mrf.mxu0
    %v446 = vadd.f32 %v417, %v445
    %447 = vdwg.mxu0
    %v448 = vld [vmem:[%s1 + $0x763] ss:$0 sm:$0xff]
    %v449 = vld [vmem:[%s1 + $0x784] ss:$0 sm:$0xff]
    %vm452 = vcmask 1040384
    %v453 = vrot.slane %v437, 7
    %v454 = vrot.slane %v440, 7
    %v455 = vsel %vm452, %v453, %v454
    %v459 = vsel %vm452, %v448, %v453
    %v460 = vsel %vm452, %v454, 0.0
    %v461 = vadd.f32 %v459, %v449
    %v462 = vadd.f32 %v455, %v449
    %v463 = vadd.f32 %v460, %v449
    %v464 = vadd.f32 %v449, 0.0
    %v465 = vld [vmem:[%s1 + $0x785] ss:$0 sm:$0xff]
    %v468 = vrot.slane %v443, 7
    %v469 = vrot.slane %v446, 7
    %v470 = vsel %vm452, %v468, %v469
    %v474 = vsel %vm452, %v448, %v468
    %v475 = vsel %vm452, %v469, 0.0
    %v476 = vadd.f32 %v474, %v465
    %v477 = vadd.f32 %v470, %v465
    %v478 = vadd.f32 %v475, %v465
    %v479 = vadd.f32 %v465, 0.0
    %v480 = vlaneseq
    %v481 = vand.u32 %v480, 127
    %vm482 = vcmp.ge.s32.totalorder %v481, 0
    %vm483 = vcmp.lt.s32.totalorder %v481, 8
    %vm484 = vmand %vm482, %vm483
    %v485 = vsel %vm484, 1.0, 0.0
    %vm486 = vcmp.ge.s32.totalorder %v481, 8
    %vm487 = vcmp.lt.s32.totalorder %v481, 16
    %vm488 = vmand %vm486, %vm487
    %v489 = vsel %vm488, 1.0, 0.0
    %vm490 = vcmp.ge.s32.totalorder %v481, 16
    %vm491 = vcmp.lt.s32.totalorder %v481, 24
    %vm492 = vmand %vm490, %vm491
    %v493 = vsel %vm492, 1.0, 0.0
    %vm494 = vcmp.ge.s32.totalorder %v481, 24
    %vm495 = vcmp.lt.s32.totalorder %v481, 32
    %vm496 = vmand %vm494, %vm495
    %v497 = vsel %vm496, 1.0, 0.0
    %vm498 = vcmp.lt.s32.totalorder %v481, 17
    %vm499 = vmand %vm482, %vm498
    %v500 = vsel %vm499, 0.0, -1e+30
    %vm501 = vcmp.ge.s32.totalorder %v481, 32
    %vm502 = vcmp.lt.s32.totalorder %v481, 49
    %vm503 = vmand %vm501, %vm502
    %v504 = vsel %vm503, 0.0, -1e+30
    %v505 = vld [vmem:[%s1 + $0x764] ss:$0 sm:$0xff]
    %v506 = vld [vmem:[%s1 + $0x765] ss:$0 sm:$0xff]
    %vm507 = vcmask 261120
    %v508 = vsel %vm507, %v461, 0.0
    %509 = vadd.xlane.f32.xlu0 %v508
    %v510 = vpop.xlane.xlu0 %509
    %v511 = vsel %vm507, %v462, 0.0
    %512 = vadd.xlane.f32.xlu0 %v511
    %v513 = vpop.xlane.xlu0 %512
    %v514 = vsel %vm507, %v463, 0.0
    %515 = vadd.xlane.f32.xlu0 %v514
    %v516 = vpop.xlane.xlu0 %515
    %v517 = vsel %vm507, %v464, 0.0
    %518 = vadd.xlane.f32.xlu0 %v517
    %v519 = vpop.xlane.xlu0 %518
    %v520 = vsel %vm507, %v476, 0.0
    %521 = vadd.xlane.f32.xlu0 %v520
    %v522 = vpop.xlane.xlu0 %521
    %v523 = vsel %vm507, %v477, 0.0
    %524 = vadd.xlane.f32.xlu0 %v523
    %v525 = vpop.xlane.xlu0 %524
    %v526 = vsel %vm507, %v478, 0.0
    %527 = vadd.xlane.f32.xlu0 %v526
    %v528 = vpop.xlane.xlu0 %527
    %v529 = vsel %vm507, %v479, 0.0
    %530 = vadd.xlane.f32.xlu0 %v529
    %v531 = vpop.xlane.xlu0 %530
    %v532 = vrcp.pop 32.0
    %v533 = vmul.f32 32.0, %v532
    %v534 = vsub.f32 1.0, %v533
    %v535 = vmul.f32 %v532, %v534
    %v536 = vadd.f32 %v532, %v535
    %vm537 = vweird.f32 %v532
    %v538 = vsel %vm537, %v532, %v536
    %v539 = vmul.f32 %v510, %v538
    %v540 = vmul.f32 %v513, %v538
    %v541 = vmul.f32 %v516, %v538
    %v542 = vmul.f32 %v519, %v538
    %v543 = vmul.f32 %v522, %v538
    %v544 = vmul.f32 %v525, %v538
    %v545 = vmul.f32 %v528, %v538
    %v546 = vmul.f32 %v531, %v538
    %v547 = vsub.f32 %v461, %v539
    %v548 = vsub.f32 %v462, %v540
    %v549 = vsub.f32 %v463, %v541
    %v550 = vsub.f32 %v464, %v542
    %v551 = vsub.f32 %v476, %v543
    %v552 = vsub.f32 %v477, %v544
    %v553 = vsub.f32 %v478, %v545
    %v554 = vsub.f32 %v479, %v546
    %v555 = vmul.f32 %v547, %v547
    %v556 = vmul.f32 %v548, %v548
    %v557 = vmul.f32 %v549, %v549
    %v558 = vmul.f32 %v550, %v550
    %v559 = vmul.f32 %v551, %v551
    %v560 = vmul.f32 %v552, %v552
    %v561 = vmul.f32 %v553, %v553
    %v562 = vmul.f32 %v554, %v554
    %v563 = vsel %vm507, %v555, 0.0
    %564 = vadd.xlane.f32.xlu0 %v563
    %v565 = vpop.xlane.xlu0 %564
    %v566 = vsel %vm507, %v556, 0.0
    %567 = vadd.xlane.f32.xlu0 %v566
    %v568 = vpop.xlane.xlu0 %567
    %v569 = vsel %vm507, %v557, 0.0
    %570 = vadd.xlane.f32.xlu0 %v569
    %v571 = vpop.xlane.xlu0 %570
    %v572 = vsel %vm507, %v558, 0.0
    %573 = vadd.xlane.f32.xlu0 %v572
    %v574 = vpop.xlane.xlu0 %573
    %v575 = vsel %vm507, %v559, 0.0
    %576 = vadd.xlane.f32.xlu0 %v575
    %v577 = vpop.xlane.xlu0 %576
    %v578 = vsel %vm507, %v560, 0.0
    %579 = vadd.xlane.f32.xlu0 %v578
    %v580 = vpop.xlane.xlu0 %579
    %v581 = vsel %vm507, %v561, 0.0
    %582 = vadd.xlane.f32.xlu0 %v581
    %v583 = vpop.xlane.xlu0 %582
    %v584 = vsel %vm507, %v562, 0.0
    %585 = vadd.xlane.f32.xlu0 %v584
    %v586 = vpop.xlane.xlu0 %585
    %v587 = vmul.f32 %v565, %v538
    %v588 = vmul.f32 %v568, %v538
    %v589 = vmul.f32 %v571, %v538
    %v590 = vmul.f32 %v574, %v538
    %v591 = vmul.f32 %v577, %v538
    %v592 = vmul.f32 %v580, %v538
    %v593 = vmul.f32 %v583, %v538
    %v594 = vmul.f32 %v586, %v538
    %v595 = vadd.f32 %v587, 1e-05
    %v596 = vadd.f32 %v588, 1e-05
    %v597 = vadd.f32 %v589, 1e-05
    %v598 = vadd.f32 %v590, 1e-05
    %v599 = vadd.f32 %v591, 1e-05
    %v600 = vadd.f32 %v592, 1e-05
    %v601 = vadd.f32 %v593, 1e-05
    %v602 = vadd.f32 %v594, 1e-05
    %v603 = vrsqrt.pop %v595
    %v604 = vmul.f32 %v603, %v595
    %v605 = vmul.f32 %v604, %v603
    %v606 = vmul.f32 0.5, %v605
    %v607 = vsub.f32 1.5, %v606
    %v608 = vmul.f32 %v603, %v607
    %vm609 = vweird.f32 %v595
    %vm610 = vweird.f32 %v603
    %vm611 = vmor %vm609, %vm610
    %v612 = vsel %vm611, %v603, %v608
    %v613 = vrsqrt.pop %v596
    %v614 = vmul.f32 %v613, %v596
    %v615 = vmul.f32 %v614, %v613
    %v616 = vmul.f32 0.5, %v615
    %v617 = vsub.f32 1.5, %v616
    %v618 = vmul.f32 %v613, %v617
    %vm619 = vweird.f32 %v596
    %vm620 = vweird.f32 %v613
    %vm621 = vmor %vm619, %vm620
    %v622 = vsel %vm621, %v613, %v618
    %v623 = vrsqrt.pop %v597
    %v624 = vmul.f32 %v623, %v597
    %v625 = vmul.f32 %v624, %v623
    %v626 = vmul.f32 0.5, %v625
    %v627 = vsub.f32 1.5, %v626
    %v628 = vmul.f32 %v623, %v627
    %vm629 = vweird.f32 %v597
    %vm630 = vweird.f32 %v623
    %vm631 = vmor %vm629, %vm630
    %v632 = vsel %vm631, %v623, %v628
    %v633 = vrsqrt.pop %v598
    %v634 = vmul.f32 %v633, %v598
    %v635 = vmul.f32 %v634, %v633
    %v636 = vmul.f32 0.5, %v635
    %v637 = vsub.f32 1.5, %v636
    %v638 = vmul.f32 %v633, %v637
    %vm639 = vweird.f32 %v598
    %vm640 = vweird.f32 %v633
    %vm641 = vmor %vm639, %vm640
    %v642 = vsel %vm641, %v633, %v638
    %v643 = vrsqrt.pop %v599
    %v644 = vmul.f32 %v643, %v599
    %v645 = vmul.f32 %v644, %v643
    %v646 = vmul.f32 0.5, %v645
    %v647 = vsub.f32 1.5, %v646
    %v648 = vmul.f32 %v643, %v647
    %vm649 = vweird.f32 %v599
    %vm650 = vweird.f32 %v643
    %vm651 = vmor %vm649, %vm650
    %v652 = vsel %vm651, %v643, %v648
    %v653 = vrsqrt.pop %v600
    %v654 = vmul.f32 %v653, %v600
    %v655 = vmul.f32 %v654, %v653
    %v656 = vmul.f32 0.5, %v655
    %v657 = vsub.f32 1.5, %v656
    %v658 = vmul.f32 %v653, %v657
    %vm659 = vweird.f32 %v600
    %vm660 = vweird.f32 %v653
    %vm661 = vmor %vm659, %vm660
    %v662 = vsel %vm661, %v653, %v658
    %v663 = vrsqrt.pop %v601
    %v664 = vmul.f32 %v663, %v601
    %v665 = vmul.f32 %v664, %v663
    %v666 = vmul.f32 0.5, %v665
    %v667 = vsub.f32 1.5, %v666
    %v668 = vmul.f32 %v663, %v667
    %vm669 = vweird.f32 %v601
    %vm670 = vweird.f32 %v663
    %vm671 = vmor %vm669, %vm670
    %v672 = vsel %vm671, %v663, %v668
    %v673 = vrsqrt.pop %v602
    %v674 = vmul.f32 %v673, %v602
    %v675 = vmul.f32 %v674, %v673
    %v676 = vmul.f32 0.5, %v675
    %v677 = vsub.f32 1.5, %v676
    %v678 = vmul.f32 %v673, %v677
    %vm679 = vweird.f32 %v602
    %vm680 = vweird.f32 %v673
    %vm681 = vmor %vm679, %vm680
    %v682 = vsel %vm681, %v673, %v678
    %v683 = vmul.f32 %v547, %v612
    %v684 = vmul.f32 %v548, %v622
    %v685 = vmul.f32 %v549, %v632
    %v686 = vmul.f32 %v550, %v642
    %v687 = vmul.f32 %v551, %v652
    %v688 = vmul.f32 %v552, %v662
    %v689 = vmul.f32 %v553, %v672
    %v690 = vmul.f32 %v554, %v682
    %v691 = vmul.f32 %v683, %v505
    %v692 = vmul.f32 %v684, %v505
    %v693 = vmul.f32 %v685, %v505
    %v694 = vmul.f32 %v686, %v505
    %v695 = vmul.f32 %v687, %v505
    %v696 = vmul.f32 %v688, %v505
    %v697 = vmul.f32 %v689, %v505
    %v698 = vmul.f32 %v690, %v505
    %v699 = vadd.f32 %v691, %v506
    %v700 = vadd.f32 %v692, %v506
    %v701 = vadd.f32 %v693, %v506
    %v702 = vadd.f32 %v694, %v506
    %v703 = vadd.f32 %v695, %v506
    %v704 = vadd.f32 %v696, %v506
    %v705 = vadd.f32 %v697, %v506
    %v706 = vadd.f32 %v698, %v506
    %v707 = vld [vmem:[%s1 + $0x420] sm:$0xff]
    %v708 = vld [vmem:[%s1 + $0x430] sm:$0xff]
    %v709 = vld [vmem:[%s1 + $0x440] sm:$0xff]
    %v710 = vld [vmem:[%s1 + $0x450] sm:$0xff]
    %v712 = vsel %vm507, %v699, 0
    %v715 = vsel %vm507, %v700, 0
    %v718 = vsel %vm507, %v701, 0
    %v721 = vsel %vm507, %v702, 0
    %v724 = vsel %vm507, %v703, 0
    %v727 = vsel %vm507, %v704, 0
    %v730 = vsel %vm507, %v705, 0
    %v733 = vsel %vm507, %v706, 0
    %735 = vmatpush.msra.mxu0 0.0
    %736 = vmatpush.msra.mxu0 0.0
    %737 = vmatpush.msra.mxu0 0.0
    %738 = vmatpush.msra.mxu0 0.0
    %739 = vmatpush.msra.mxu0 0.0
    %740 = vmatpush.msra.mxu0 0.0
    %741 = vmatpush.msra.mxu0 0.0
    %742 = vmatpush.msra.mxu0 0.0
    %743 = vmatpush.msra.mxu0 0.0
    %744 = vmatpush.msra.mxu0 0.0
    %745 = vmatpush.msra.mxu0 0.0
    %746 = vmatpush.msra.mxu0 0.0
    %747 = vmatpush.msra.mxu0 %v710
    %748 = vmatpush.msra.mxu0 %v709
    %749 = vmatpush.msra.mxu0 %v708
    %750 = vmatpush.msra.mxu0 %v707
    %751 = vmatmul.f32.gmra.mxu0 %v712
    %v752 = vpop.f32.mrf.mxu0
    %v753 = vadd.f32 0.0, %v752
    %754 = vmatmul.f32.gmra.mxu0 %v715
    %v755 = vpop.f32.mrf.mxu0
    %v756 = vadd.f32 0.0, %v755
    %757 = vmatmul.f32.gmra.mxu0 %v718
    %v758 = vpop.f32.mrf.mxu0
    %v759 = vadd.f32 0.0, %v758
    %760 = vmatmul.f32.gmra.mxu0 %v721
    %v761 = vpop.f32.mrf.mxu0
    %v762 = vadd.f32 0.0, %v761
    %763 = vmatmul.f32.gmra.mxu0 %v724
    %v764 = vpop.f32.mrf.mxu0
    %v765 = vadd.f32 0.0, %v764
    %766 = vmatmul.f32.gmra.mxu0 %v727
    %v767 = vpop.f32.mrf.mxu0
    %v768 = vadd.f32 0.0, %v767
    %769 = vmatmul.f32.gmra.mxu0 %v730
    %v770 = vpop.f32.mrf.mxu0
    %v771 = vadd.f32 0.0, %v770
    %772 = vmatmul.f32.gmra.mxu0 %v733
    %v773 = vpop.f32.mrf.mxu0
    %v774 = vadd.f32 0.0, %v773
    %775 = vdwg.mxu0
    %v776 = vmul.f32 %v753, %v485
    %v777 = vmul.f32 %v756, %v485
    %v778 = vmul.f32 %v759, %v485
    %v779 = vmul.f32 %v762, %v485
    %v780 = vmul.f32 %v765, %v485
    %v781 = vmul.f32 %v768, %v485
    %v782 = vmul.f32 %v771, %v485
    %v783 = vmul.f32 %v774, %v485
    %v784 = vmul.f32 %v753, %v489
    %v785 = vmul.f32 %v756, %v489
    %v786 = vmul.f32 %v759, %v489
    %v787 = vmul.f32 %v762, %v489
    %v788 = vmul.f32 %v765, %v489
    %v789 = vmul.f32 %v768, %v489
    %v790 = vmul.f32 %v771, %v489
    %v791 = vmul.f32 %v774, %v489
    %v792 = vmul.f32 %v753, %v493
    %v793 = vmul.f32 %v756, %v493
    %v794 = vmul.f32 %v759, %v493
    %v795 = vmul.f32 %v762, %v493
    %v796 = vmul.f32 %v765, %v493
    %v797 = vmul.f32 %v768, %v493
    %v798 = vmul.f32 %v771, %v493
    %v799 = vmul.f32 %v774, %v493
    %v800 = vmul.f32 %v753, %v497
    %v801 = vmul.f32 %v756, %v497
    %v802 = vmul.f32 %v759, %v497
    %v803 = vmul.f32 %v762, %v497
    %v804 = vmul.f32 %v765, %v497
    %v805 = vmul.f32 %v768, %v497
    %v806 = vmul.f32 %v771, %v497
    %v807 = vmul.f32 %v774, %v497
    %816 = vrot.lane.b32.xlu0 %v753, 96
    %v817 = vpop.permute.xlu0 %816
    %818 = vrot.lane.b32.xlu0 %v756, 96
    %v819 = vpop.permute.xlu0 %818
    %820 = vrot.lane.b32.xlu0 %v759, 96
    %v821 = vpop.permute.xlu0 %820
    %822 = vrot.lane.b32.xlu0 %v762, 96
    %v823 = vpop.permute.xlu0 %822
    %824 = vrot.lane.b32.xlu0 %v765, 96
    %v825 = vpop.permute.xlu0 %824
    %826 = vrot.lane.b32.xlu0 %v768, 96
    %v827 = vpop.permute.xlu0 %826
    %828 = vrot.lane.b32.xlu0 %v771, 96
    %v829 = vpop.permute.xlu0 %828
    %830 = vrot.lane.b32.xlu0 %v774, 96
    %v831 = vpop.permute.xlu0 %830
    %v833 = vsel %vm507, %v776, 0
    %v836 = vsel %vm507, %v777, 0
    %v839 = vsel %vm507, %v778, 0
    %v842 = vsel %vm507, %v779, 0
    %v845 = vsel %vm507, %v780, 0
    %v848 = vsel %vm507, %v781, 0
    %v851 = vsel %vm507, %v782, 0
    %v854 = vsel %vm507, %v783, 0
    %v857 = vsel %vm507, %v784, 0
    %v860 = vsel %vm507, %v785, 0
    %v863 = vsel %vm507, %v786, 0
    %v866 = vsel %vm507, %v787, 0
    %v869 = vsel %vm507, %v788, 0
    %v872 = vsel %vm507, %v789, 0
    %v875 = vsel %vm507, %v790, 0
    %v878 = vsel %vm507, %v791, 0
    %v881 = vsel %vm507, %v792, 0
    %v884 = vsel %vm507, %v793, 0
    %v887 = vsel %vm507, %v794, 0
    %v890 = vsel %vm507, %v795, 0
    %v893 = vsel %vm507, %v796, 0
    %v896 = vsel %vm507, %v797, 0
    %v899 = vsel %vm507, %v798, 0
    %v902 = vsel %vm507, %v799, 0
    %v905 = vsel %vm507, %v800, 0
    %v908 = vsel %vm507, %v801, 0
    %v911 = vsel %vm507, %v802, 0
    %v914 = vsel %vm507, %v803, 0
    %v917 = vsel %vm507, %v804, 0
    %v920 = vsel %vm507, %v805, 0
    %v923 = vsel %vm507, %v806, 0
    %v926 = vsel %vm507, %v807, 0
    %v928 = vsel %vm507, %v817, 0
    %v930 = vsel %vm507, %v819, 0
    %v932 = vsel %vm507, %v821, 0
    %v934 = vsel %vm507, %v823, 0
    %v936 = vsel %vm507, %v825, 0
    %v938 = vsel %vm507, %v827, 0
    %v940 = vsel %vm507, %v829, 0
    %v942 = vsel %vm507, %v831, 0
    %944 = vmatpush.xpose.msra.mxu0 0.0
    %945 = vmatpush.xpose.msra.mxu0 0.0
    %946 = vmatpush.xpose.msra.mxu0 0.0
    %947 = vmatpush.xpose.msra.mxu0 0.0
    %948 = vmatpush.xpose.msra.mxu0 0.0
    %949 = vmatpush.xpose.msra.mxu0 0.0
    %950 = vmatpush.xpose.msra.mxu0 0.0
    %951 = vmatpush.xpose.msra.mxu0 0.0
    %952 = vmatpush.xpose.msra.mxu0 %v942
    %953 = vmatpush.xpose.msra.mxu0 %v940
    %954 = vmatpush.xpose.msra.mxu0 %v938
    %955 = vmatpush.xpose.msra.mxu0 %v936
    %956 = vmatpush.xpose.msra.mxu0 %v934
    %957 = vmatpush.xpose.msra.mxu0 %v932
    %958 = vmatpush.xpose.msra.mxu0 %v930
    %959 = vmatpush.xpose.msra.mxu0 %v928
    %960 = vmatmul.f32.gmra.mxu0 %v833
    %v961 = vpop.f32.mrf.mxu0
    %v962 = vadd.f32 %v500, %v961
    %963 = vmatmul.f32.gmra.mxu0 %v836
    %v964 = vpop.f32.mrf.mxu0
    %v965 = vadd.f32 %v500, %v964
    %966 = vmatmul.f32.gmra.mxu0 %v839
    %v967 = vpop.f32.mrf.mxu0
    %v968 = vadd.f32 %v500, %v967
    %969 = vmatmul.f32.gmra.mxu0 %v842
    %v970 = vpop.f32.mrf.mxu0
    %v971 = vadd.f32 %v500, %v970
    %972 = vmatmul.f32.gmra.mxu0 %v845
    %v973 = vpop.f32.mrf.mxu0
    %v974 = vadd.f32 %v504, %v973
    %975 = vmatmul.f32.gmra.mxu0 %v848
    %v976 = vpop.f32.mrf.mxu0
    %v977 = vadd.f32 %v504, %v976
    %978 = vmatmul.f32.gmra.mxu0 %v851
    %v979 = vpop.f32.mrf.mxu0
    %v980 = vadd.f32 %v504, %v979
    %981 = vmatmul.f32.gmra.mxu0 %v854
    %v982 = vpop.f32.mrf.mxu0
    %v983 = vadd.f32 %v504, %v982
    %984 = vmatmul.f32.gmra.mxu0 %v857
    %v985 = vpop.f32.mrf.mxu0
    %v986 = vadd.f32 %v500, %v985
    %987 = vmatmul.f32.gmra.mxu0 %v860
    %v988 = vpop.f32.mrf.mxu0
    %v989 = vadd.f32 %v500, %v988
    %990 = vmatmul.f32.gmra.mxu0 %v863
    %v991 = vpop.f32.mrf.mxu0
    %v992 = vadd.f32 %v500, %v991
    %993 = vmatmul.f32.gmra.mxu0 %v866
    %v994 = vpop.f32.mrf.mxu0
    %v995 = vadd.f32 %v500, %v994
    %996 = vmatmul.f32.gmra.mxu0 %v869
    %v997 = vpop.f32.mrf.mxu0
    %v998 = vadd.f32 %v504, %v997
    %999 = vmatmul.f32.gmra.mxu0 %v872
    %v1000 = vpop.f32.mrf.mxu0
    %v1001 = vadd.f32 %v504, %v1000
    %1002 = vmatmul.f32.gmra.mxu0 %v875
    %v1003 = vpop.f32.mrf.mxu0
    %v1004 = vadd.f32 %v504, %v1003
    %1005 = vmatmul.f32.gmra.mxu0 %v878
    %v1006 = vpop.f32.mrf.mxu0
    %v1007 = vadd.f32 %v504, %v1006
    %1008 = vmatmul.f32.gmra.mxu0 %v881
    %v1009 = vpop.f32.mrf.mxu0
    %v1010 = vadd.f32 %v500, %v1009
    %1011 = vmatmul.f32.gmra.mxu0 %v884
    %v1012 = vpop.f32.mrf.mxu0
    %v1013 = vadd.f32 %v500, %v1012
    %1014 = vmatmul.f32.gmra.mxu0 %v887
    %v1015 = vpop.f32.mrf.mxu0
    %v1016 = vadd.f32 %v500, %v1015
    %1017 = vmatmul.f32.gmra.mxu0 %v890
    %v1018 = vpop.f32.mrf.mxu0
    %v1019 = vadd.f32 %v500, %v1018
    %1020 = vmatmul.f32.gmra.mxu0 %v893
    %v1021 = vpop.f32.mrf.mxu0
    %v1022 = vadd.f32 %v504, %v1021
    %1023 = vmatmul.f32.gmra.mxu0 %v896
    %v1024 = vpop.f32.mrf.mxu0
    %v1025 = vadd.f32 %v504, %v1024
    %1026 = vmatmul.f32.gmra.mxu0 %v899
    %v1027 = vpop.f32.mrf.mxu0
    %v1028 = vadd.f32 %v504, %v1027
    %1029 = vmatmul.f32.gmra.mxu0 %v902
    %v1030 = vpop.f32.mrf.mxu0
    %v1031 = vadd.f32 %v504, %v1030
    %1032 = vmatmul.f32.gmra.mxu0 %v905
    %v1033 = vpop.f32.mrf.mxu0
    %v1034 = vadd.f32 %v500, %v1033
    %1035 = vmatmul.f32.gmra.mxu0 %v908
    %v1036 = vpop.f32.mrf.mxu0
    %v1037 = vadd.f32 %v500, %v1036
    %1038 = vmatmul.f32.gmra.mxu0 %v911
    %v1039 = vpop.f32.mrf.mxu0
    %v1040 = vadd.f32 %v500, %v1039
    %1041 = vmatmul.f32.gmra.mxu0 %v914
    %v1042 = vpop.f32.mrf.mxu0
    %v1043 = vadd.f32 %v500, %v1042
    %1044 = vmatmul.f32.gmra.mxu0 %v917
    %v1045 = vpop.f32.mrf.mxu0
    %v1046 = vadd.f32 %v504, %v1045
    %1047 = vmatmul.f32.gmra.mxu0 %v920
    %v1048 = vpop.f32.mrf.mxu0
    %v1049 = vadd.f32 %v504, %v1048
    %1050 = vmatmul.f32.gmra.mxu0 %v923
    %v1051 = vpop.f32.mrf.mxu0
    %v1052 = vadd.f32 %v504, %v1051
    %1053 = vmatmul.f32.gmra.mxu0 %v926
    %v1054 = vpop.f32.mrf.mxu0
    %v1055 = vadd.f32 %v504, %v1054
    %1056 = vdwg.mxu0
    %vm1057 = vcmask 523264
    %v1058 = vsel %vm1057, %v962, -inf
    %1059 = vmax.xlane.f32.xlu0 %v1058
    %v1060 = vpop.xlane.xlu0 %1059
    %v1061 = vsel %vm1057, %v965, -inf
    %1062 = vmax.xlane.f32.xlu0 %v1061
    %v1063 = vpop.xlane.xlu0 %1062
    %v1064 = vsel %vm1057, %v968, -inf
    %1065 = vmax.xlane.f32.xlu0 %v1064
    %v1066 = vpop.xlane.xlu0 %1065
    %v1067 = vsel %vm1057, %v971, -inf
    %1068 = vmax.xlane.f32.xlu0 %v1067
    %v1069 = vpop.xlane.xlu0 %1068
    %v1070 = vsel %vm1057, %v974, -inf
    %1071 = vmax.xlane.f32.xlu0 %v1070
    %v1072 = vpop.xlane.xlu0 %1071
    %v1073 = vsel %vm1057, %v977, -inf
    %1074 = vmax.xlane.f32.xlu0 %v1073
    %v1075 = vpop.xlane.xlu0 %1074
    %v1076 = vsel %vm1057, %v980, -inf
    %1077 = vmax.xlane.f32.xlu0 %v1076
    %v1078 = vpop.xlane.xlu0 %1077
    %v1079 = vsel %vm1057, %v983, -inf
    %1080 = vmax.xlane.f32.xlu0 %v1079
    %v1081 = vpop.xlane.xlu0 %1080
    %v1082 = vsel %vm1057, %v986, -inf
    %1083 = vmax.xlane.f32.xlu0 %v1082
    %v1084 = vpop.xlane.xlu0 %1083
    %v1085 = vsel %vm1057, %v989, -inf
    %1086 = vmax.xlane.f32.xlu0 %v1085
    %v1087 = vpop.xlane.xlu0 %1086
    %v1088 = vsel %vm1057, %v992, -inf
    %1089 = vmax.xlane.f32.xlu0 %v1088
    %v1090 = vpop.xlane.xlu0 %1089
    %v1091 = vsel %vm1057, %v995, -inf
    %1092 = vmax.xlane.f32.xlu0 %v1091
    %v1093 = vpop.xlane.xlu0 %1092
    %v1094 = vsel %vm1057, %v998, -inf
    %1095 = vmax.xlane.f32.xlu0 %v1094
    %v1096 = vpop.xlane.xlu0 %1095
    %v1097 = vsel %vm1057, %v1001, -inf
    %1098 = vmax.xlane.f32.xlu0 %v1097
    %v1099 = vpop.xlane.xlu0 %1098
    %v1100 = vsel %vm1057, %v1004, -inf
    %1101 = vmax.xlane.f32.xlu0 %v1100
    %v1102 = vpop.xlane.xlu0 %1101
    %v1103 = vsel %vm1057, %v1007, -inf
    %1104 = vmax.xlane.f32.xlu0 %v1103
    %v1105 = vpop.xlane.xlu0 %1104
    %v1106 = vsel %vm1057, %v1010, -inf
    %1107 = vmax.xlane.f32.xlu0 %v1106
    %v1108 = vpop.xlane.xlu0 %1107
    %v1109 = vsel %vm1057, %v1013, -inf
    %1110 = vmax.xlane.f32.xlu0 %v1109
    %v1111 = vpop.xlane.xlu0 %1110
    %v1112 = vsel %vm1057, %v1016, -inf
    %1113 = vmax.xlane.f32.xlu0 %v1112
    %v1114 = vpop.xlane.xlu0 %1113
    %v1115 = vsel %vm1057, %v1019, -inf
    %1116 = vmax.xlane.f32.xlu0 %v1115
    %v1117 = vpop.xlane.xlu0 %1116
    %v1118 = vsel %vm1057, %v1022, -inf
    %1119 = vmax.xlane.f32.xlu0 %v1118
    %v1120 = vpop.xlane.xlu0 %1119
    %v1121 = vsel %vm1057, %v1025, -inf
    %1122 = vmax.xlane.f32.xlu0 %v1121
    %v1123 = vpop.xlane.xlu0 %1122
    %v1124 = vsel %vm1057, %v1028, -inf
    %1125 = vmax.xlane.f32.xlu0 %v1124
    %v1126 = vpop.xlane.xlu0 %1125
    %v1127 = vsel %vm1057, %v1031, -inf
    %1128 = vmax.xlane.f32.xlu0 %v1127
    %v1129 = vpop.xlane.xlu0 %1128
    %v1130 = vsel %vm1057, %v1034, -inf
    %1131 = vmax.xlane.f32.xlu0 %v1130
    %v1132 = vpop.xlane.xlu0 %1131
    %v1133 = vsel %vm1057, %v1037, -inf
    %1134 = vmax.xlane.f32.xlu0 %v1133
    %v1135 = vpop.xlane.xlu0 %1134
    %v1136 = vsel %vm1057, %v1040, -inf
    %1137 = vmax.xlane.f32.xlu0 %v1136
    %v1138 = vpop.xlane.xlu0 %1137
    %v1139 = vsel %vm1057, %v1043, -inf
    %1140 = vmax.xlane.f32.xlu0 %v1139
    %v1141 = vpop.xlane.xlu0 %1140
    %v1142 = vsel %vm1057, %v1046, -inf
    %1143 = vmax.xlane.f32.xlu0 %v1142
    %v1144 = vpop.xlane.xlu0 %1143
    %v1145 = vsel %vm1057, %v1049, -inf
    %1146 = vmax.xlane.f32.xlu0 %v1145
    %v1147 = vpop.xlane.xlu0 %1146
    %v1148 = vsel %vm1057, %v1052, -inf
    %1149 = vmax.xlane.f32.xlu0 %v1148
    %v1150 = vpop.xlane.xlu0 %1149
    %v1151 = vsel %vm1057, %v1055, -inf
    %1152 = vmax.xlane.f32.xlu0 %v1151
    %v1153 = vpop.xlane.xlu0 %1152
    %v1154 = vsub.f32 %v962, %v1060
    %v1155 = vsub.f32 %v965, %v1063
    %v1156 = vsub.f32 %v968, %v1066
    %v1157 = vsub.f32 %v971, %v1069
    %v1158 = vsub.f32 %v974, %v1072
    %v1159 = vsub.f32 %v977, %v1075
    %v1160 = vsub.f32 %v980, %v1078
    %v1161 = vsub.f32 %v983, %v1081
    %v1162 = vsub.f32 %v986, %v1084
    %v1163 = vsub.f32 %v989, %v1087
    %v1164 = vsub.f32 %v992, %v1090
    %v1165 = vsub.f32 %v995, %v1093
    %v1166 = vsub.f32 %v998, %v1096
    %v1167 = vsub.f32 %v1001, %v1099
    %v1168 = vsub.f32 %v1004, %v1102
    %v1169 = vsub.f32 %v1007, %v1105
    %v1170 = vsub.f32 %v1010, %v1108
    %v1171 = vsub.f32 %v1013, %v1111
    %v1172 = vsub.f32 %v1016, %v1114
    %v1173 = vsub.f32 %v1019, %v1117
    %v1174 = vsub.f32 %v1022, %v1120
    %v1175 = vsub.f32 %v1025, %v1123
    %v1176 = vsub.f32 %v1028, %v1126
    %v1177 = vsub.f32 %v1031, %v1129
    %v1178 = vsub.f32 %v1034, %v1132
    %v1179 = vsub.f32 %v1037, %v1135
    %v1180 = vsub.f32 %v1040, %v1138
    %v1181 = vsub.f32 %v1043, %v1141
    %v1182 = vsub.f32 %v1046, %v1144
    %v1183 = vsub.f32 %v1049, %v1147
    %v1184 = vsub.f32 %v1052, %v1150
    %v1185 = vsub.f32 %v1055, %v1153
    %v1186 = vmul.f32 %v1154, 1.442695
    %v1187 = vpow.pop %v1186
    %v1188 = vmul.f32 %v1155, 1.442695
    %v1189 = vpow.pop %v1188
    %v1190 = vmul.f32 %v1156, 1.442695
    %v1191 = vpow.pop %v1190
    %v1192 = vmul.f32 %v1157, 1.442695
    %v1193 = vpow.pop %v1192
    %v1194 = vmul.f32 %v1158, 1.442695
    %v1195 = vpow.pop %v1194
    %v1196 = vmul.f32 %v1159, 1.442695
    %v1197 = vpow.pop %v1196
    %v1198 = vmul.f32 %v1160, 1.442695
    %v1199 = vpow.pop %v1198
    %v1200 = vmul.f32 %v1161, 1.442695
    %v1201 = vpow.pop %v1200
    %v1202 = vmul.f32 %v1162, 1.442695
    %v1203 = vpow.pop %v1202
    %v1204 = vmul.f32 %v1163, 1.442695
    %v1205 = vpow.pop %v1204
    %v1206 = vmul.f32 %v1164, 1.442695
    %v1207 = vpow.pop %v1206
    %v1208 = vmul.f32 %v1165, 1.442695
    %v1209 = vpow.pop %v1208
    %v1210 = vmul.f32 %v1166, 1.442695
    %v1211 = vpow.pop %v1210
    %v1212 = vmul.f32 %v1167, 1.442695
    %v1213 = vpow.pop %v1212
    %v1214 = vmul.f32 %v1168, 1.442695
    %v1215 = vpow.pop %v1214
    %v1216 = vmul.f32 %v1169, 1.442695
    %v1217 = vpow.pop %v1216
    %v1218 = vmul.f32 %v1170, 1.442695
    %v1219 = vpow.pop %v1218
    %v1220 = vmul.f32 %v1171, 1.442695
    %v1221 = vpow.pop %v1220
    %v1222 = vmul.f32 %v1172, 1.442695
    %v1223 = vpow.pop %v1222
    %v1224 = vmul.f32 %v1173, 1.442695
    %v1225 = vpow.pop %v1224
    %v1226 = vmul.f32 %v1174, 1.442695
    %v1227 = vpow.pop %v1226
    %v1228 = vmul.f32 %v1175, 1.442695
    %v1229 = vpow.pop %v1228
    %v1230 = vmul.f32 %v1176, 1.442695
    %v1231 = vpow.pop %v1230
    %v1232 = vmul.f32 %v1177, 1.442695
    %v1233 = vpow.pop %v1232
    %v1234 = vmul.f32 %v1178, 1.442695
    %v1235 = vpow.pop %v1234
    %v1236 = vmul.f32 %v1179, 1.442695
    %v1237 = vpow.pop %v1236
    %v1238 = vmul.f32 %v1180, 1.442695
    %v1239 = vpow.pop %v1238
    %v1240 = vmul.f32 %v1181, 1.442695
    %v1241 = vpow.pop %v1240
    %v1242 = vmul.f32 %v1182, 1.442695
    %v1243 = vpow.pop %v1242
    %v1244 = vmul.f32 %v1183, 1.442695
    %v1245 = vpow.pop %v1244
    %v1246 = vmul.f32 %v1184, 1.442695
    %v1247 = vpow.pop %v1246
    %v1248 = vmul.f32 %v1185, 1.442695
    %v1249 = vpow.pop %v1248
    %v1250 = vsel %vm1057, %v1187, 0.0
    %1251 = vadd.xlane.f32.xlu0 %v1250
    %v1252 = vpop.xlane.xlu0 %1251
    %v1253 = vsel %vm1057, %v1189, 0.0
    %1254 = vadd.xlane.f32.xlu0 %v1253
    %v1255 = vpop.xlane.xlu0 %1254
    %v1256 = vsel %vm1057, %v1191, 0.0
    %1257 = vadd.xlane.f32.xlu0 %v1256
    %v1258 = vpop.xlane.xlu0 %1257
    %v1259 = vsel %vm1057, %v1193, 0.0
    %1260 = vadd.xlane.f32.xlu0 %v1259
    %v1261 = vpop.xlane.xlu0 %1260
    %v1262 = vsel %vm1057, %v1195, 0.0
    %1263 = vadd.xlane.f32.xlu0 %v1262
    %v1264 = vpop.xlane.xlu0 %1263
    %v1265 = vsel %vm1057, %v1197, 0.0
    %1266 = vadd.xlane.f32.xlu0 %v1265
    %v1267 = vpop.xlane.xlu0 %1266
    %v1268 = vsel %vm1057, %v1199, 0.0
    %1269 = vadd.xlane.f32.xlu0 %v1268
    %v1270 = vpop.xlane.xlu0 %1269
    %v1271 = vsel %vm1057, %v1201, 0.0
    %1272 = vadd.xlane.f32.xlu0 %v1271
    %v1273 = vpop.xlane.xlu0 %1272
    %v1274 = vsel %vm1057, %v1203, 0.0
    %1275 = vadd.xlane.f32.xlu0 %v1274
    %v1276 = vpop.xlane.xlu0 %1275
    %v1277 = vsel %vm1057, %v1205, 0.0
    %1278 = vadd.xlane.f32.xlu0 %v1277
    %v1279 = vpop.xlane.xlu0 %1278
    %v1280 = vsel %vm1057, %v1207, 0.0
    %1281 = vadd.xlane.f32.xlu0 %v1280
    %v1282 = vpop.xlane.xlu0 %1281
    %v1283 = vsel %vm1057, %v1209, 0.0
    %1284 = vadd.xlane.f32.xlu0 %v1283
    %v1285 = vpop.xlane.xlu0 %1284
    %v1286 = vsel %vm1057, %v1211, 0.0
    %1287 = vadd.xlane.f32.xlu0 %v1286
    %v1288 = vpop.xlane.xlu0 %1287
    %v1289 = vsel %vm1057, %v1213, 0.0
    %1290 = vadd.xlane.f32.xlu0 %v1289
    %v1291 = vpop.xlane.xlu0 %1290
    %v1292 = vsel %vm1057, %v1215, 0.0
    %1293 = vadd.xlane.f32.xlu0 %v1292
    %v1294 = vpop.xlane.xlu0 %1293
    %v1295 = vsel %vm1057, %v1217, 0.0
    %1296 = vadd.xlane.f32.xlu0 %v1295
    %v1297 = vpop.xlane.xlu0 %1296
    %v1298 = vsel %vm1057, %v1219, 0.0
    %1299 = vadd.xlane.f32.xlu0 %v1298
    %v1300 = vpop.xlane.xlu0 %1299
    %v1301 = vsel %vm1057, %v1221, 0.0
    %1302 = vadd.xlane.f32.xlu0 %v1301
    %v1303 = vpop.xlane.xlu0 %1302
    %v1304 = vsel %vm1057, %v1223, 0.0
    %1305 = vadd.xlane.f32.xlu0 %v1304
    %v1306 = vpop.xlane.xlu0 %1305
    %v1307 = vsel %vm1057, %v1225, 0.0
    %1308 = vadd.xlane.f32.xlu0 %v1307
    %v1309 = vpop.xlane.xlu0 %1308
    %v1310 = vsel %vm1057, %v1227, 0.0
    %1311 = vadd.xlane.f32.xlu0 %v1310
    %v1312 = vpop.xlane.xlu0 %1311
    %v1313 = vsel %vm1057, %v1229, 0.0
    %1314 = vadd.xlane.f32.xlu0 %v1313
    %v1315 = vpop.xlane.xlu0 %1314
    %v1316 = vsel %vm1057, %v1231, 0.0
    %1317 = vadd.xlane.f32.xlu0 %v1316
    %v1318 = vpop.xlane.xlu0 %1317
    %v1319 = vsel %vm1057, %v1233, 0.0
    %1320 = vadd.xlane.f32.xlu0 %v1319
    %v1321 = vpop.xlane.xlu0 %1320
    %v1322 = vsel %vm1057, %v1235, 0.0
    %1323 = vadd.xlane.f32.xlu0 %v1322
    %v1324 = vpop.xlane.xlu0 %1323
    %v1325 = vsel %vm1057, %v1237, 0.0
    %1326 = vadd.xlane.f32.xlu0 %v1325
    %v1327 = vpop.xlane.xlu0 %1326
    %v1328 = vsel %vm1057, %v1239, 0.0
    %1329 = vadd.xlane.f32.xlu0 %v1328
    %v1330 = vpop.xlane.xlu0 %1329
    %v1331 = vsel %vm1057, %v1241, 0.0
    %1332 = vadd.xlane.f32.xlu0 %v1331
    %v1333 = vpop.xlane.xlu0 %1332
    %v1334 = vsel %vm1057, %v1243, 0.0
    %1335 = vadd.xlane.f32.xlu0 %v1334
    %v1336 = vpop.xlane.xlu0 %1335
    %v1337 = vsel %vm1057, %v1245, 0.0
    %1338 = vadd.xlane.f32.xlu0 %v1337
    %v1339 = vpop.xlane.xlu0 %1338
    %v1340 = vsel %vm1057, %v1247, 0.0
    %1341 = vadd.xlane.f32.xlu0 %v1340
    %v1342 = vpop.xlane.xlu0 %1341
    %v1343 = vsel %vm1057, %v1249, 0.0
    %1344 = vadd.xlane.f32.xlu0 %v1343
    %v1345 = vpop.xlane.xlu0 %1344
    %v1346 = vrcp.pop %v1252
    %v1347 = vrcp.pop %v1255
    %v1348 = vrcp.pop %v1258
    %v1349 = vrcp.pop %v1261
    %v1350 = vrcp.pop %v1264
    %v1351 = vrcp.pop %v1267
    %v1352 = vrcp.pop %v1270
    %v1353 = vrcp.pop %v1273
    %v1354 = vrcp.pop %v1276
    %v1355 = vrcp.pop %v1279
    %v1356 = vrcp.pop %v1282
    %v1357 = vrcp.pop %v1285
    %v1358 = vrcp.pop %v1288
    %v1359 = vrcp.pop %v1291
    %v1360 = vrcp.pop %v1294
    %v1361 = vrcp.pop %v1297
    %v1362 = vrcp.pop %v1300
    %v1363 = vrcp.pop %v1303
    %v1364 = vrcp.pop %v1306
    %v1365 = vrcp.pop %v1309
    %v1366 = vrcp.pop %v1312
    %v1367 = vrcp.pop %v1315
    %v1368 = vrcp.pop %v1318
    %v1369 = vrcp.pop %v1321
    %v1370 = vrcp.pop %v1324
    %v1371 = vrcp.pop %v1327
    %v1372 = vrcp.pop %v1330
    %v1373 = vrcp.pop %v1333
    %v1374 = vrcp.pop %v1336
    %v1375 = vrcp.pop %v1339
    %v1376 = vrcp.pop %v1342
    %v1377 = vrcp.pop %v1345
    %v1378 = vmul.f32 %v1187, %v1346
    %v1379 = vmul.f32 %v1189, %v1347
    %v1380 = vmul.f32 %v1191, %v1348
    %v1381 = vmul.f32 %v1193, %v1349
    %v1382 = vmul.f32 %v1195, %v1350
    %v1383 = vmul.f32 %v1197, %v1351
    %v1384 = vmul.f32 %v1199, %v1352
    %v1385 = vmul.f32 %v1201, %v1353
    %v1386 = vmul.f32 %v1203, %v1354
    %v1387 = vmul.f32 %v1205, %v1355
    %v1388 = vmul.f32 %v1207, %v1356
    %v1389 = vmul.f32 %v1209, %v1357
    %v1390 = vmul.f32 %v1211, %v1358
    %v1391 = vmul.f32 %v1213, %v1359
    %v1392 = vmul.f32 %v1215, %v1360
    %v1393 = vmul.f32 %v1217, %v1361
    %v1394 = vmul.f32 %v1219, %v1362
    %v1395 = vmul.f32 %v1221, %v1363
    %v1396 = vmul.f32 %v1223, %v1364
    %v1397 = vmul.f32 %v1225, %v1365
    %v1398 = vmul.f32 %v1227, %v1366
    %v1399 = vmul.f32 %v1229, %v1367
    %v1400 = vmul.f32 %v1231, %v1368
    %v1401 = vmul.f32 %v1233, %v1369
    %v1402 = vmul.f32 %v1235, %v1370
    %v1403 = vmul.f32 %v1237, %v1371
    %v1404 = vmul.f32 %v1239, %v1372
    %v1405 = vmul.f32 %v1241, %v1373
    %v1406 = vmul.f32 %v1243, %v1374
    %v1407 = vmul.f32 %v1245, %v1375
    %v1408 = vmul.f32 %v1247, %v1376
    %v1409 = vmul.f32 %v1249, %v1377
    %1410 = vrot.lane.b32.xlu0 %v753, 64
    %v1411 = vpop.permute.xlu0 %1410
    %1412 = vrot.lane.b32.xlu0 %v756, 64
    %v1413 = vpop.permute.xlu0 %1412
    %1414 = vrot.lane.b32.xlu0 %v759, 64
    %v1415 = vpop.permute.xlu0 %1414
    %1416 = vrot.lane.b32.xlu0 %v762, 64
    %v1417 = vpop.permute.xlu0 %1416
    %1418 = vrot.lane.b32.xlu0 %v765, 64
    %v1419 = vpop.permute.xlu0 %1418
    %1420 = vrot.lane.b32.xlu0 %v768, 64
    %v1421 = vpop.permute.xlu0 %1420
    %1422 = vrot.lane.b32.xlu0 %v771, 64
    %v1423 = vpop.permute.xlu0 %1422
    %1424 = vrot.lane.b32.xlu0 %v774, 64
    %v1425 = vpop.permute.xlu0 %1424
    %v1435 = vsel %vm1057, %v1378, 0
    %v1438 = vsel %vm1057, %v1379, 0
    %v1441 = vsel %vm1057, %v1380, 0
    %v1444 = vsel %vm1057, %v1381, 0
    %v1447 = vsel %vm1057, %v1382, 0
    %v1450 = vsel %vm1057, %v1383, 0
    %v1453 = vsel %vm1057, %v1384, 0
    %v1456 = vsel %vm1057, %v1385, 0
    %v1459 = vsel %vm1057, %v1386, 0
    %v1462 = vsel %vm1057, %v1387, 0
    %v1465 = vsel %vm1057, %v1388, 0
    %v1468 = vsel %vm1057, %v1389, 0
    %v1471 = vsel %vm1057, %v1390, 0
    %v1474 = vsel %vm1057, %v1391, 0
    %v1477 = vsel %vm1057, %v1392, 0
    %v1480 = vsel %vm1057, %v1393, 0
    %v1483 = vsel %vm1057, %v1394, 0
    %v1486 = vsel %vm1057, %v1395, 0
    %v1489 = vsel %vm1057, %v1396, 0
    %v1492 = vsel %vm1057, %v1397, 0
    %v1495 = vsel %vm1057, %v1398, 0
    %v1498 = vsel %vm1057, %v1399, 0
    %v1501 = vsel %vm1057, %v1400, 0
    %v1504 = vsel %vm1057, %v1401, 0
    %v1507 = vsel %vm1057, %v1402, 0
    %v1510 = vsel %vm1057, %v1403, 0
    %v1513 = vsel %vm1057, %v1404, 0
    %v1516 = vsel %vm1057, %v1405, 0
    %v1519 = vsel %vm1057, %v1406, 0
    %v1522 = vsel %vm1057, %v1407, 0
    %v1525 = vsel %vm1057, %v1408, 0
    %v1528 = vsel %vm1057, %v1409, 0
    %1530 = vmatpush.msra.mxu0 0.0
    %1531 = vmatpush.msra.mxu0 0.0
    %1532 = vmatpush.msra.mxu0 0.0
    %1533 = vmatpush.msra.mxu0 0.0
    %1534 = vmatpush.msra.mxu0 0.0
    %1535 = vmatpush.msra.mxu0 0.0
    %1536 = vmatpush.msra.mxu0 0.0
    %1537 = vmatpush.msra.mxu0 0.0
    %1538 = vmatpush.msra.mxu0 %v1425
    %1539 = vmatpush.msra.mxu0 %v1423
    %1540 = vmatpush.msra.mxu0 %v1421
    %1541 = vmatpush.msra.mxu0 %v1419
    %1542 = vmatpush.msra.mxu0 %v1417
    %1543 = vmatpush.msra.mxu0 %v1415
    %1544 = vmatpush.msra.mxu0 %v1413
    %1545 = vmatpush.msra.mxu0 %v1411
    %1546 = vmatmul.f32.gmra.mxu0 %v1435
    %v1547 = vpop.f32.mrf.mxu0
    %v1548 = vadd.f32 0.0, %v1547
    %1549 = vmatmul.f32.gmra.mxu0 %v1438
    %v1550 = vpop.f32.mrf.mxu0
    %v1551 = vadd.f32 0.0, %v1550
    %1552 = vmatmul.f32.gmra.mxu0 %v1441
    %v1553 = vpop.f32.mrf.mxu0
    %v1554 = vadd.f32 0.0, %v1553
    %1555 = vmatmul.f32.gmra.mxu0 %v1444
    %v1556 = vpop.f32.mrf.mxu0
    %v1557 = vadd.f32 0.0, %v1556
    %1558 = vmatmul.f32.gmra.mxu0 %v1447
    %v1559 = vpop.f32.mrf.mxu0
    %v1560 = vadd.f32 0.0, %v1559
    %1561 = vmatmul.f32.gmra.mxu0 %v1450
    %v1562 = vpop.f32.mrf.mxu0
    %v1563 = vadd.f32 0.0, %v1562
    %1564 = vmatmul.f32.gmra.mxu0 %v1453
    %v1565 = vpop.f32.mrf.mxu0
    %v1566 = vadd.f32 0.0, %v1565
    %1567 = vmatmul.f32.gmra.mxu0 %v1456
    %v1568 = vpop.f32.mrf.mxu0
    %v1569 = vadd.f32 0.0, %v1568
    %1570 = vmatmul.f32.gmra.mxu0 %v1459
    %v1571 = vpop.f32.mrf.mxu0
    %v1572 = vadd.f32 0.0, %v1571
    %1573 = vmatmul.f32.gmra.mxu0 %v1462
    %v1574 = vpop.f32.mrf.mxu0
    %v1575 = vadd.f32 0.0, %v1574
    %1576 = vmatmul.f32.gmra.mxu0 %v1465
    %v1577 = vpop.f32.mrf.mxu0
    %v1578 = vadd.f32 0.0, %v1577
    %1579 = vmatmul.f32.gmra.mxu0 %v1468
    %v1580 = vpop.f32.mrf.mxu0
    %v1581 = vadd.f32 0.0, %v1580
    %1582 = vmatmul.f32.gmra.mxu0 %v1471
    %v1583 = vpop.f32.mrf.mxu0
    %v1584 = vadd.f32 0.0, %v1583
    %1585 = vmatmul.f32.gmra.mxu0 %v1474
    %v1586 = vpop.f32.mrf.mxu0
    %v1587 = vadd.f32 0.0, %v1586
    %1588 = vmatmul.f32.gmra.mxu0 %v1477
    %v1589 = vpop.f32.mrf.mxu0
    %v1590 = vadd.f32 0.0, %v1589
    %1591 = vmatmul.f32.gmra.mxu0 %v1480
    %v1592 = vpop.f32.mrf.mxu0
    %v1593 = vadd.f32 0.0, %v1592
    %1594 = vmatmul.f32.gmra.mxu0 %v1483
    %v1595 = vpop.f32.mrf.mxu0
    %v1596 = vadd.f32 0.0, %v1595
    %1597 = vmatmul.f32.gmra.mxu0 %v1486
    %v1598 = vpop.f32.mrf.mxu0
    %v1599 = vadd.f32 0.0, %v1598
    %1600 = vmatmul.f32.gmra.mxu0 %v1489
    %v1601 = vpop.f32.mrf.mxu0
    %v1602 = vadd.f32 0.0, %v1601
    %1603 = vmatmul.f32.gmra.mxu0 %v1492
    %v1604 = vpop.f32.mrf.mxu0
    %v1605 = vadd.f32 0.0, %v1604
    %1606 = vmatmul.f32.gmra.mxu0 %v1495
    %v1607 = vpop.f32.mrf.mxu0
    %v1608 = vadd.f32 0.0, %v1607
    %1609 = vmatmul.f32.gmra.mxu0 %v1498
    %v1610 = vpop.f32.mrf.mxu0
    %v1611 = vadd.f32 0.0, %v1610
    %1612 = vmatmul.f32.gmra.mxu0 %v1501
    %v1613 = vpop.f32.mrf.mxu0
    %v1614 = vadd.f32 0.0, %v1613
    %1615 = vmatmul.f32.gmra.mxu0 %v1504
    %v1616 = vpop.f32.mrf.mxu0
    %v1617 = vadd.f32 0.0, %v1616
    %1618 = vmatmul.f32.gmra.mxu0 %v1507
    %v1619 = vpop.f32.mrf.mxu0
    %v1620 = vadd.f32 0.0, %v1619
    %1621 = vmatmul.f32.gmra.mxu0 %v1510
    %v1622 = vpop.f32.mrf.mxu0
    %v1623 = vadd.f32 0.0, %v1622
    %1624 = vmatmul.f32.gmra.mxu0 %v1513
    %v1625 = vpop.f32.mrf.mxu0
    %v1626 = vadd.f32 0.0, %v1625
    %1627 = vmatmul.f32.gmra.mxu0 %v1516
    %v1628 = vpop.f32.mrf.mxu0
    %v1629 = vadd.f32 0.0, %v1628
    %1630 = vmatmul.f32.gmra.mxu0 %v1519
    %v1631 = vpop.f32.mrf.mxu0
    %v1632 = vadd.f32 0.0, %v1631
    %1633 = vmatmul.f32.gmra.mxu0 %v1522
    %v1634 = vpop.f32.mrf.mxu0
    %v1635 = vadd.f32 0.0, %v1634
    %1636 = vmatmul.f32.gmra.mxu0 %v1525
    %v1637 = vpop.f32.mrf.mxu0
    %v1638 = vadd.f32 0.0, %v1637
    %1639 = vmatmul.f32.gmra.mxu0 %v1528
    %v1640 = vpop.f32.mrf.mxu0
    %v1641 = vadd.f32 0.0, %v1640
    %1642 = vdwg.mxu0
    %v1643 = vmul.f32 %v1548, %v485
    %v1644 = vmul.f32 %v1551, %v485
    %v1645 = vmul.f32 %v1554, %v485
    %v1646 = vmul.f32 %v1557, %v485
    %v1647 = vmul.f32 %v1560, %v485
    %v1648 = vmul.f32 %v1563, %v485
    %v1649 = vmul.f32 %v1566, %v485
    %v1650 = vmul.f32 %v1569, %v485
    %v1651 = vmul.f32 %v1572, %v489
    %v1652 = vmul.f32 %v1575, %v489
    %v1653 = vmul.f32 %v1578, %v489
    %v1654 = vmul.f32 %v1581, %v489
    %v1655 = vmul.f32 %v1584, %v489
    %v1656 = vmul.f32 %v1587, %v489
    %v1657 = vmul.f32 %v1590, %v489
    %v1658 = vmul.f32 %v1593, %v489
    %v1659 = vadd.f32 %v1643, %v1651
    %v1660 = vadd.f32 %v1644, %v1652
    %v1661 = vadd.f32 %v1645, %v1653
    %v1662 = vadd.f32 %v1646, %v1654
    %v1663 = vadd.f32 %v1647, %v1655
    %v1664 = vadd.f32 %v1648, %v1656
    %v1665 = vadd.f32 %v1649, %v1657
    %v1666 = vadd.f32 %v1650, %v1658
    %v1667 = vmul.f32 %v1596, %v493
    %v1668 = vmul.f32 %v1599, %v493
    %v1669 = vmul.f32 %v1602, %v493
    %v1670 = vmul.f32 %v1605, %v493
    %v1671 = vmul.f32 %v1608, %v493
    %v1672 = vmul.f32 %v1611, %v493
    %v1673 = vmul.f32 %v1614, %v493
    %v1674 = vmul.f32 %v1617, %v493
    %v1675 = vadd.f32 %v1659, %v1667
    %v1676 = vadd.f32 %v1660, %v1668
    %v1677 = vadd.f32 %v1661, %v1669
    %v1678 = vadd.f32 %v1662, %v1670
    %v1679 = vadd.f32 %v1663, %v1671
    %v1680 = vadd.f32 %v1664, %v1672
    %v1681 = vadd.f32 %v1665, %v1673
    %v1682 = vadd.f32 %v1666, %v1674
    %v1683 = vmul.f32 %v1620, %v497
    %v1684 = vmul.f32 %v1623, %v497
    %v1685 = vmul.f32 %v1626, %v497
    %v1686 = vmul.f32 %v1629, %v497
    %v1687 = vmul.f32 %v1632, %v497
    %v1688 = vmul.f32 %v1635, %v497
    %v1689 = vmul.f32 %v1638, %v497
    %v1690 = vmul.f32 %v1641, %v497
    %v1691 = vadd.f32 %v1675, %v1683
    %v1692 = vadd.f32 %v1676, %v1684
    %v1693 = vadd.f32 %v1677, %v1685
    %v1694 = vadd.f32 %v1678, %v1686
    %v1695 = vadd.f32 %v1679, %v1687
    %v1696 = vadd.f32 %v1680, %v1688
    %v1697 = vadd.f32 %v1681, %v1689
    %v1698 = vadd.f32 %v1682, %v1690
    %v1699 = vld [vmem:[%s1 + $0x460] sm:$0xff]
    %v1700 = vld [vmem:[%s1 + $0x470] sm:$0xff]
    %v1701 = vld [vmem:[%s1 + $0x480] sm:$0xff]
    %v1702 = vld [vmem:[%s1 + $0x490] sm:$0xff]
    %v1703 = vld [vmem:[%s1 + $0x766] ss:$0 sm:$0xff]
    %v1705 = vsel %vm507, %v1691, 0
    %v1708 = vsel %vm507, %v1692, 0
    %v1711 = vsel %vm507, %v1693, 0
    %v1714 = vsel %vm507, %v1694, 0
    %v1717 = vsel %vm507, %v1695, 0
    %v1720 = vsel %vm507, %v1696, 0
    %v1723 = vsel %vm507, %v1697, 0
    %v1726 = vsel %vm507, %v1698, 0
    %1728 = vmatpush.msra.mxu0 0.0
    %1729 = vmatpush.msra.mxu0 0.0
    %1730 = vmatpush.msra.mxu0 0.0
    %1731 = vmatpush.msra.mxu0 0.0
    %1732 = vmatpush.msra.mxu0 0.0
    %1733 = vmatpush.msra.mxu0 0.0
    %1734 = vmatpush.msra.mxu0 0.0
    %1735 = vmatpush.msra.mxu0 0.0
    %1736 = vmatpush.msra.mxu0 0.0
    %1737 = vmatpush.msra.mxu0 0.0
    %1738 = vmatpush.msra.mxu0 0.0
    %1739 = vmatpush.msra.mxu0 0.0
    %1740 = vmatpush.msra.mxu0 %v1702
    %1741 = vmatpush.msra.mxu0 %v1701
    %1742 = vmatpush.msra.mxu0 %v1700
    %1743 = vmatpush.msra.mxu0 %v1699
    %1744 = vmatmul.f32.gmra.mxu0 %v1705
    %v1745 = vpop.f32.mrf.mxu0
    %v1746 = vadd.f32 %v1703, %v1745
    %1747 = vmatmul.f32.gmra.mxu0 %v1708
    %v1748 = vpop.f32.mrf.mxu0
    %v1749 = vadd.f32 %v1703, %v1748
    %1750 = vmatmul.f32.gmra.mxu0 %v1711
    %v1751 = vpop.f32.mrf.mxu0
    %v1752 = vadd.f32 %v1703, %v1751
    %1753 = vmatmul.f32.gmra.mxu0 %v1714
    %v1754 = vpop.f32.mrf.mxu0
    %v1755 = vadd.f32 %v1703, %v1754
    %1756 = vmatmul.f32.gmra.mxu0 %v1717
    %v1757 = vpop.f32.mrf.mxu0
    %v1758 = vadd.f32 %v1703, %v1757
    %1759 = vmatmul.f32.gmra.mxu0 %v1720
    %v1760 = vpop.f32.mrf.mxu0
    %v1761 = vadd.f32 %v1703, %v1760
    %1762 = vmatmul.f32.gmra.mxu0 %v1723
    %v1763 = vpop.f32.mrf.mxu0
    %v1764 = vadd.f32 %v1703, %v1763
    %1765 = vmatmul.f32.gmra.mxu0 %v1726
    %v1766 = vpop.f32.mrf.mxu0
    %v1767 = vadd.f32 %v1703, %v1766
    %1768 = vdwg.mxu0
    %v1769 = vadd.f32 %v461, %v1746
    %v1770 = vadd.f32 %v462, %v1749
    %v1771 = vadd.f32 %v463, %v1752
    %v1772 = vadd.f32 %v464, %v1755
    %v1773 = vadd.f32 %v476, %v1758
    %v1774 = vadd.f32 %v477, %v1761
    %v1775 = vadd.f32 %v478, %v1764
    %v1776 = vadd.f32 %v479, %v1767
    %v1777 = vld [vmem:[%s1 + $0x767] ss:$0 sm:$0xff]
    %v1778 = vld [vmem:[%s1 + $0x770] ss:$0 sm:$0xff]
    %v1779 = vsel %vm507, %v1769, 0.0
    %1780 = vadd.xlane.f32.xlu0 %v1779
    %v1781 = vpop.xlane.xlu0 %1780
    %v1782 = vsel %vm507, %v1770, 0.0
    %1783 = vadd.xlane.f32.xlu0 %v1782
    %v1784 = vpop.xlane.xlu0 %1783
    %v1785 = vsel %vm507, %v1771, 0.0
    %1786 = vadd.xlane.f32.xlu0 %v1785
    %v1787 = vpop.xlane.xlu0 %1786
    %v1788 = vsel %vm507, %v1772, 0.0
    %1789 = vadd.xlane.f32.xlu0 %v1788
    %v1790 = vpop.xlane.xlu0 %1789
    %v1791 = vsel %vm507, %v1773, 0.0
    %1792 = vadd.xlane.f32.xlu0 %v1791
    %v1793 = vpop.xlane.xlu0 %1792
    %v1794 = vsel %vm507, %v1774, 0.0
    %1795 = vadd.xlane.f32.xlu0 %v1794
    %v1796 = vpop.xlane.xlu0 %1795
    %v1797 = vsel %vm507, %v1775, 0.0
    %1798 = vadd.xlane.f32.xlu0 %v1797
    %v1799 = vpop.xlane.xlu0 %1798
    %v1800 = vsel %vm507, %v1776, 0.0
    %1801 = vadd.xlane.f32.xlu0 %v1800
    %v1802 = vpop.xlane.xlu0 %1801
    %v1803 = vmul.f32 %v1781, %v538
    %v1804 = vmul.f32 %v1784, %v538
    %v1805 = vmul.f32 %v1787, %v538
    %v1806 = vmul.f32 %v1790, %v538
    %v1807 = vmul.f32 %v1793, %v538
    %v1808 = vmul.f32 %v1796, %v538
    %v1809 = vmul.f32 %v1799, %v538
    %v1810 = vmul.f32 %v1802, %v538
    %v1811 = vsub.f32 %v1769, %v1803
    %v1812 = vsub.f32 %v1770, %v1804
    %v1813 = vsub.f32 %v1771, %v1805
    %v1814 = vsub.f32 %v1772, %v1806
    %v1815 = vsub.f32 %v1773, %v1807
    %v1816 = vsub.f32 %v1774, %v1808
    %v1817 = vsub.f32 %v1775, %v1809
    %v1818 = vsub.f32 %v1776, %v1810
    %v1819 = vmul.f32 %v1811, %v1811
    %v1820 = vmul.f32 %v1812, %v1812
    %v1821 = vmul.f32 %v1813, %v1813
    %v1822 = vmul.f32 %v1814, %v1814
    %v1823 = vmul.f32 %v1815, %v1815
    %v1824 = vmul.f32 %v1816, %v1816
    %v1825 = vmul.f32 %v1817, %v1817
    %v1826 = vmul.f32 %v1818, %v1818
    %v1827 = vsel %vm507, %v1819, 0.0
    %1828 = vadd.xlane.f32.xlu0 %v1827
    %v1829 = vpop.xlane.xlu0 %1828
    %v1830 = vsel %vm507, %v1820, 0.0
    %1831 = vadd.xlane.f32.xlu0 %v1830
    %v1832 = vpop.xlane.xlu0 %1831
    %v1833 = vsel %vm507, %v1821, 0.0
    %1834 = vadd.xlane.f32.xlu0 %v1833
    %v1835 = vpop.xlane.xlu0 %1834
    %v1836 = vsel %vm507, %v1822, 0.0
    %1837 = vadd.xlane.f32.xlu0 %v1836
    %v1838 = vpop.xlane.xlu0 %1837
    %v1839 = vsel %vm507, %v1823, 0.0
    %1840 = vadd.xlane.f32.xlu0 %v1839
    %v1841 = vpop.xlane.xlu0 %1840
    %v1842 = vsel %vm507, %v1824, 0.0
    %1843 = vadd.xlane.f32.xlu0 %v1842
    %v1844 = vpop.xlane.xlu0 %1843
    %v1845 = vsel %vm507, %v1825, 0.0
    %1846 = vadd.xlane.f32.xlu0 %v1845
    %v1847 = vpop.xlane.xlu0 %1846
    %v1848 = vsel %vm507, %v1826, 0.0
    %1849 = vadd.xlane.f32.xlu0 %v1848
    %v1850 = vpop.xlane.xlu0 %1849
    %v1851 = vmul.f32 %v1829, %v538
    %v1852 = vmul.f32 %v1832, %v538
    %v1853 = vmul.f32 %v1835, %v538
    %v1854 = vmul.f32 %v1838, %v538
    %v1855 = vmul.f32 %v1841, %v538
    %v1856 = vmul.f32 %v1844, %v538
    %v1857 = vmul.f32 %v1847, %v538
    %v1858 = vmul.f32 %v1850, %v538
    %v1859 = vadd.f32 %v1851, 1e-05
    %v1860 = vadd.f32 %v1852, 1e-05
    %v1861 = vadd.f32 %v1853, 1e-05
    %v1862 = vadd.f32 %v1854, 1e-05
    %v1863 = vadd.f32 %v1855, 1e-05
    %v1864 = vadd.f32 %v1856, 1e-05
    %v1865 = vadd.f32 %v1857, 1e-05
    %v1866 = vadd.f32 %v1858, 1e-05
    %v1867 = vrsqrt.pop %v1859
    %v1868 = vmul.f32 %v1867, %v1859
    %v1869 = vmul.f32 %v1868, %v1867
    %v1870 = vmul.f32 0.5, %v1869
    %v1871 = vsub.f32 1.5, %v1870
    %v1872 = vmul.f32 %v1867, %v1871
    %vm1873 = vweird.f32 %v1859
    %vm1874 = vweird.f32 %v1867
    %vm1875 = vmor %vm1873, %vm1874
    %v1876 = vsel %vm1875, %v1867, %v1872
    %v1877 = vrsqrt.pop %v1860
    %v1878 = vmul.f32 %v1877, %v1860
    %v1879 = vmul.f32 %v1878, %v1877
    %v1880 = vmul.f32 0.5, %v1879
    %v1881 = vsub.f32 1.5, %v1880
    %v1882 = vmul.f32 %v1877, %v1881
    %vm1883 = vweird.f32 %v1860
    %vm1884 = vweird.f32 %v1877
    %vm1885 = vmor %vm1883, %vm1884
    %v1886 = vsel %vm1885, %v1877, %v1882
    %v1887 = vrsqrt.pop %v1861
    %v1888 = vmul.f32 %v1887, %v1861
    %v1889 = vmul.f32 %v1888, %v1887
    %v1890 = vmul.f32 0.5, %v1889
    %v1891 = vsub.f32 1.5, %v1890
    %v1892 = vmul.f32 %v1887, %v1891
    %vm1893 = vweird.f32 %v1861
    %vm1894 = vweird.f32 %v1887
    %vm1895 = vmor %vm1893, %vm1894
    %v1896 = vsel %vm1895, %v1887, %v1892
    %v1897 = vrsqrt.pop %v1862
    %v1898 = vmul.f32 %v1897, %v1862
    %v1899 = vmul.f32 %v1898, %v1897
    %v1900 = vmul.f32 0.5, %v1899
    %v1901 = vsub.f32 1.5, %v1900
    %v1902 = vmul.f32 %v1897, %v1901
    %vm1903 = vweird.f32 %v1862
    %vm1904 = vweird.f32 %v1897
    %vm1905 = vmor %vm1903, %vm1904
    %v1906 = vsel %vm1905, %v1897, %v1902
    %v1907 = vrsqrt.pop %v1863
    %v1908 = vmul.f32 %v1907, %v1863
    %v1909 = vmul.f32 %v1908, %v1907
    %v1910 = vmul.f32 0.5, %v1909
    %v1911 = vsub.f32 1.5, %v1910
    %v1912 = vmul.f32 %v1907, %v1911
    %vm1913 = vweird.f32 %v1863
    %vm1914 = vweird.f32 %v1907
    %vm1915 = vmor %vm1913, %vm1914
    %v1916 = vsel %vm1915, %v1907, %v1912
    %v1917 = vrsqrt.pop %v1864
    %v1918 = vmul.f32 %v1917, %v1864
    %v1919 = vmul.f32 %v1918, %v1917
    %v1920 = vmul.f32 0.5, %v1919
    %v1921 = vsub.f32 1.5, %v1920
    %v1922 = vmul.f32 %v1917, %v1921
    %vm1923 = vweird.f32 %v1864
    %vm1924 = vweird.f32 %v1917
    %vm1925 = vmor %vm1923, %vm1924
    %v1926 = vsel %vm1925, %v1917, %v1922
    %v1927 = vrsqrt.pop %v1865
    %v1928 = vmul.f32 %v1927, %v1865
    %v1929 = vmul.f32 %v1928, %v1927
    %v1930 = vmul.f32 0.5, %v1929
    %v1931 = vsub.f32 1.5, %v1930
    %v1932 = vmul.f32 %v1927, %v1931
    %vm1933 = vweird.f32 %v1865
    %vm1934 = vweird.f32 %v1927
    %vm1935 = vmor %vm1933, %vm1934
    %v1936 = vsel %vm1935, %v1927, %v1932
    %v1937 = vrsqrt.pop %v1866
    %v1938 = vmul.f32 %v1937, %v1866
    %v1939 = vmul.f32 %v1938, %v1937
    %v1940 = vmul.f32 0.5, %v1939
    %v1941 = vsub.f32 1.5, %v1940
    %v1942 = vmul.f32 %v1937, %v1941
    %vm1943 = vweird.f32 %v1866
    %vm1944 = vweird.f32 %v1937
    %vm1945 = vmor %vm1943, %vm1944
    %v1946 = vsel %vm1945, %v1937, %v1942
    %v1947 = vmul.f32 %v1811, %v1876
    %v1948 = vmul.f32 %v1812, %v1886
    %v1949 = vmul.f32 %v1813, %v1896
    %v1950 = vmul.f32 %v1814, %v1906
    %v1951 = vmul.f32 %v1815, %v1916
    %v1952 = vmul.f32 %v1816, %v1926
    %v1953 = vmul.f32 %v1817, %v1936
    %v1954 = vmul.f32 %v1818, %v1946
    %v1955 = vmul.f32 %v1947, %v1777
    %v1956 = vmul.f32 %v1948, %v1777
    %v1957 = vmul.f32 %v1949, %v1777
    %v1958 = vmul.f32 %v1950, %v1777
    %v1959 = vmul.f32 %v1951, %v1777
    %v1960 = vmul.f32 %v1952, %v1777
    %v1961 = vmul.f32 %v1953, %v1777
    %v1962 = vmul.f32 %v1954, %v1777
    %v1963 = vadd.f32 %v1955, %v1778
    %v1964 = vadd.f32 %v1956, %v1778
    %v1965 = vadd.f32 %v1957, %v1778
    %v1966 = vadd.f32 %v1958, %v1778
    %v1967 = vadd.f32 %v1959, %v1778
    %v1968 = vadd.f32 %v1960, %v1778
    %v1969 = vadd.f32 %v1961, %v1778
    %v1970 = vadd.f32 %v1962, %v1778
    %v1971 = vld [vmem:[%s1 + $0x4a0] sm:$0xff]
    %v1972 = vld [vmem:[%s1 + $0x4b0] sm:$0xff]
    %v1973 = vld [vmem:[%s1 + $0x4c0] sm:$0xff]
    %v1974 = vld [vmem:[%s1 + $0x4d0] sm:$0xff]
    %v1975 = vld [vmem:[%s1 + $0x771] ss:$0 sm:$0xff]
    %v1977 = vsel %vm507, %v1963, 0
    %v1980 = vsel %vm507, %v1964, 0
    %v1983 = vsel %vm507, %v1965, 0
    %v1986 = vsel %vm507, %v1966, 0
    %v1989 = vsel %vm507, %v1967, 0
    %v1992 = vsel %vm507, %v1968, 0
    %v1995 = vsel %vm507, %v1969, 0
    %v1998 = vsel %vm507, %v1970, 0
    %2000 = vmatpush.msra.mxu0 0.0
    %2001 = vmatpush.msra.mxu0 0.0
    %2002 = vmatpush.msra.mxu0 0.0
    %2003 = vmatpush.msra.mxu0 0.0
    %2004 = vmatpush.msra.mxu0 0.0
    %2005 = vmatpush.msra.mxu0 0.0
    %2006 = vmatpush.msra.mxu0 0.0
    %2007 = vmatpush.msra.mxu0 0.0
    %2008 = vmatpush.msra.mxu0 0.0
    %2009 = vmatpush.msra.mxu0 0.0
    %2010 = vmatpush.msra.mxu0 0.0
    %2011 = vmatpush.msra.mxu0 0.0
    %2012 = vmatpush.msra.mxu0 %v1974
    %2013 = vmatpush.msra.mxu0 %v1973
    %2014 = vmatpush.msra.mxu0 %v1972
    %2015 = vmatpush.msra.mxu0 %v1971
    %2016 = vmatmul.f32.gmra.mxu0 %v1977
    %v2017 = vpop.f32.mrf.mxu0
    %v2018 = vadd.f32 %v1975, %v2017
    %2019 = vmatmul.f32.gmra.mxu0 %v1980
    %v2020 = vpop.f32.mrf.mxu0
    %v2021 = vadd.f32 %v1975, %v2020
    %2022 = vmatmul.f32.gmra.mxu0 %v1983
    %v2023 = vpop.f32.mrf.mxu0
    %v2024 = vadd.f32 %v1975, %v2023
    %2025 = vmatmul.f32.gmra.mxu0 %v1986
    %v2026 = vpop.f32.mrf.mxu0
    %v2027 = vadd.f32 %v1975, %v2026
    %2028 = vmatmul.f32.gmra.mxu0 %v1989
    %v2029 = vpop.f32.mrf.mxu0
    %v2030 = vadd.f32 %v1975, %v2029
    %2031 = vmatmul.f32.gmra.mxu0 %v1992
    %v2032 = vpop.f32.mrf.mxu0
    %v2033 = vadd.f32 %v1975, %v2032
    %2034 = vmatmul.f32.gmra.mxu0 %v1995
    %v2035 = vpop.f32.mrf.mxu0
    %v2036 = vadd.f32 %v1975, %v2035
    %2037 = vmatmul.f32.gmra.mxu0 %v1998
    %v2038 = vpop.f32.mrf.mxu0
    %v2039 = vadd.f32 %v1975, %v2038
    %2040 = vdwg.mxu0
    %v2041 = vmul.f32 %v2018, 0.5
    %v2042 = vmul.f32 %v2021, 0.5
    %v2043 = vmul.f32 %v2024, 0.5
    %v2044 = vmul.f32 %v2027, 0.5
    %v2045 = vmul.f32 %v2030, 0.5
    %v2046 = vmul.f32 %v2033, 0.5
    %v2047 = vmul.f32 %v2036, 0.5
    %v2048 = vmul.f32 %v2039, 0.5
    %v2049 = vmul.f32 %v2018, 0.70710677
    %v2050 = vmul.f32 %v2021, 0.70710677
    %v2051 = vmul.f32 %v2024, 0.70710677
    %v2052 = vmul.f32 %v2027, 0.70710677
    %v2053 = vmul.f32 %v2030, 0.70710677
    %v2054 = vmul.f32 %v2033, 0.70710677
    %v2055 = vmul.f32 %v2036, 0.70710677
    %v2056 = vmul.f32 %v2039, 0.70710677
    %v2057 = vmul.f32 %v2049, %v2049
    %v2058 = vmin.f32 16.0, %v2057
    %v2059 = vmul.f32 %v2058, 2.1237322e-06
    %v2060 = vadd.f32 %v2059, 0.00028619796
    %v2061 = vmul.f32 %v2058, %v2060
    %v2062 = vadd.f32 %v2061, 0.0036580483
    %v2063 = vmul.f32 %v2058, %v2062
    %v2064 = vadd.f32 %v2063, 0.05243302
    %v2065 = vmul.f32 %v2058, %v2064
    %v2066 = vadd.f32 %v2065, 0.18741608
    %v2067 = vmul.f32 %v2058, %v2066
    %v2068 = vadd.f32 %v2067, 1.1283791
    %v2069 = vmul.f32 %v2049, %v2068
    %v2070 = vmul.f32 %v2058, 3.8918573e-05
    %v2071 = vadd.f32 %v2070, 0.001143296
    %v2072 = vmul.f32 %v2058, %v2071
    %v2073 = vadd.f32 %v2072, 0.014752088
    %v2074 = vmul.f32 %v2058, %v2073
    %v2075 = vadd.f32 %v2074, 0.112945676
    %v2076 = vmul.f32 %v2058, %v2075
    %v2077 = vadd.f32 %v2076, 0.4994258
    %v2078 = vmul.f32 %v2058, %v2077
    %v2079 = vadd.f32 %v2078, 1.0
    %v2080 = vrcp.pop %v2079
    %v2081 = vmul.f32 %v2079, %v2080
    %v2082 = vsub.f32 1.0, %v2081
    %v2083 = vmul.f32 %v2080, %v2082
    %v2084 = vadd.f32 %v2080, %v2083
    %vm2085 = vweird.f32 %v2079
    %vm2086 = vweird.f32 %v2080
    %vm2087 = vmor %vm2085, %vm2086
    %v2088 = vsel %vm2087, %v2080, %v2084
    %v2089 = vand.u32 2147483647, %v2079
    %vm2090 = vcmp.eq.f32.partialorder %v2089, 8.507059e+37
    %v2091 = vand.u32 %v2079, 2147483648
    %v2092 = vor.u32 1.1754944e-38, %v2091
    %v2093 = vsel %vm2090, %v2092, %v2088
    %v2094 = vmul.f32 %v2069, %v2093
    %v2095 = vmin.f32 %v2094, 1.0
    %v2096 = vmax.f32 %v2095, -1.0
    %v2097 = vmul.f32 %v2050, %v2050
    %v2098 = vmin.f32 16.0, %v2097
    %v2099 = vmul.f32 %v2098, 2.1237322e-06
    %v2100 = vadd.f32 %v2099, 0.00028619796
    %v2101 = vmul.f32 %v2098, %v2100
    %v2102 = vadd.f32 %v2101, 0.0036580483
    %v2103 = vmul.f32 %v2098, %v2102
    %v2104 = vadd.f32 %v2103, 0.05243302
    %v2105 = vmul.f32 %v2098, %v2104
    %v2106 = vadd.f32 %v2105, 0.18741608
    %v2107 = vmul.f32 %v2098, %v2106
    %v2108 = vadd.f32 %v2107, 1.1283791
    %v2109 = vmul.f32 %v2050, %v2108
    %v2110 = vmul.f32 %v2098, 3.8918573e-05
    %v2111 = vadd.f32 %v2110, 0.001143296
    %v2112 = vmul.f32 %v2098, %v2111
    %v2113 = vadd.f32 %v2112, 0.014752088
    %v2114 = vmul.f32 %v2098, %v2113
    %v2115 = vadd.f32 %v2114, 0.112945676
    %v2116 = vmul.f32 %v2098, %v2115
    %v2117 = vadd.f32 %v2116, 0.4994258
    %v2118 = vmul.f32 %v2098, %v2117
    %v2119 = vadd.f32 %v2118, 1.0
    %v2120 = vrcp.pop %v2119
    %v2121 = vmul.f32 %v2119, %v2120
    %v2122 = vsub.f32 1.0, %v2121
    %v2123 = vmul.f32 %v2120, %v2122
    %v2124 = vadd.f32 %v2120, %v2123
    %vm2125 = vweird.f32 %v2119
    %vm2126 = vweird.f32 %v2120
    %vm2127 = vmor %vm2125, %vm2126
    %v2128 = vsel %vm2127, %v2120, %v2124
    %v2129 = vand.u32 2147483647, %v2119
    %vm2130 = vcmp.eq.f32.partialorder %v2129, 8.507059e+37
    %v2131 = vand.u32 %v2119, 2147483648
    %v2132 = vor.u32 1.1754944e-38, %v2131
    %v2133 = vsel %vm2130, %v2132, %v2128
    %v2134 = vmul.f32 %v2109, %v2133
    %v2135 = vmin.f32 %v2134, 1.0
    %v2136 = vmax.f32 %v2135, -1.0
    %v2137 = vmul.f32 %v2051, %v2051
    %v2138 = vmin.f32 16.0, %v2137
    %v2139 = vmul.f32 %v2138, 2.1237322e-06
    %v2140 = vadd.f32 %v2139, 0.00028619796
    %v2141 = vmul.f32 %v2138, %v2140
    %v2142 = vadd.f32 %v2141, 0.0036580483
    %v2143 = vmul.f32 %v2138, %v2142
    %v2144 = vadd.f32 %v2143, 0.05243302
    %v2145 = vmul.f32 %v2138, %v2144
    %v2146 = vadd.f32 %v2145, 0.18741608
    %v2147 = vmul.f32 %v2138, %v2146
    %v2148 = vadd.f32 %v2147, 1.1283791
    %v2149 = vmul.f32 %v2051, %v2148
    %v2150 = vmul.f32 %v2138, 3.8918573e-05
    %v2151 = vadd.f32 %v2150, 0.001143296
    %v2152 = vmul.f32 %v2138, %v2151
    %v2153 = vadd.f32 %v2152, 0.014752088
    %v2154 = vmul.f32 %v2138, %v2153
    %v2155 = vadd.f32 %v2154, 0.112945676
    %v2156 = vmul.f32 %v2138, %v2155
    %v2157 = vadd.f32 %v2156, 0.4994258
    %v2158 = vmul.f32 %v2138, %v2157
    %v2159 = vadd.f32 %v2158, 1.0
    %v2160 = vrcp.pop %v2159
    %v2161 = vmul.f32 %v2159, %v2160
    %v2162 = vsub.f32 1.0, %v2161
    %v2163 = vmul.f32 %v2160, %v2162
    %v2164 = vadd.f32 %v2160, %v2163
    %vm2165 = vweird.f32 %v2159
    %vm2166 = vweird.f32 %v2160
    %vm2167 = vmor %vm2165, %vm2166
    %v2168 = vsel %vm2167, %v2160, %v2164
    %v2169 = vand.u32 2147483647, %v2159
    %vm2170 = vcmp.eq.f32.partialorder %v2169, 8.507059e+37
    %v2171 = vand.u32 %v2159, 2147483648
    %v2172 = vor.u32 1.1754944e-38, %v2171
    %v2173 = vsel %vm2170, %v2172, %v2168
    %v2174 = vmul.f32 %v2149, %v2173
    %v2175 = vmin.f32 %v2174, 1.0
    %v2176 = vmax.f32 %v2175, -1.0
    %v2177 = vmul.f32 %v2052, %v2052
    %v2178 = vmin.f32 16.0, %v2177
    %v2179 = vmul.f32 %v2178, 2.1237322e-06
    %v2180 = vadd.f32 %v2179, 0.00028619796
    %v2181 = vmul.f32 %v2178, %v2180
    %v2182 = vadd.f32 %v2181, 0.0036580483
    %v2183 = vmul.f32 %v2178, %v2182
    %v2184 = vadd.f32 %v2183, 0.05243302
    %v2185 = vmul.f32 %v2178, %v2184
    %v2186 = vadd.f32 %v2185, 0.18741608
    %v2187 = vmul.f32 %v2178, %v2186
    %v2188 = vadd.f32 %v2187, 1.1283791
    %v2189 = vmul.f32 %v2052, %v2188
    %v2190 = vmul.f32 %v2178, 3.8918573e-05
    %v2191 = vadd.f32 %v2190, 0.001143296
    %v2192 = vmul.f32 %v2178, %v2191
    %v2193 = vadd.f32 %v2192, 0.014752088
    %v2194 = vmul.f32 %v2178, %v2193
    %v2195 = vadd.f32 %v2194, 0.112945676
    %v2196 = vmul.f32 %v2178, %v2195
    %v2197 = vadd.f32 %v2196, 0.4994258
    %v2198 = vmul.f32 %v2178, %v2197
    %v2199 = vadd.f32 %v2198, 1.0
    %v2200 = vrcp.pop %v2199
    %v2201 = vmul.f32 %v2199, %v2200
    %v2202 = vsub.f32 1.0, %v2201
    %v2203 = vmul.f32 %v2200, %v2202
    %v2204 = vadd.f32 %v2200, %v2203
    %vm2205 = vweird.f32 %v2199
    %vm2206 = vweird.f32 %v2200
    %vm2207 = vmor %vm2205, %vm2206
    %v2208 = vsel %vm2207, %v2200, %v2204
    %v2209 = vand.u32 2147483647, %v2199
    %vm2210 = vcmp.eq.f32.partialorder %v2209, 8.507059e+37
    %v2211 = vand.u32 %v2199, 2147483648
    %v2212 = vor.u32 1.1754944e-38, %v2211
    %v2213 = vsel %vm2210, %v2212, %v2208
    %v2214 = vmul.f32 %v2189, %v2213
    %v2215 = vmin.f32 %v2214, 1.0
    %v2216 = vmax.f32 %v2215, -1.0
    %v2217 = vmul.f32 %v2053, %v2053
    %v2218 = vmin.f32 16.0, %v2217
    %v2219 = vmul.f32 %v2218, 2.1237322e-06
    %v2220 = vadd.f32 %v2219, 0.00028619796
    %v2221 = vmul.f32 %v2218, %v2220
    %v2222 = vadd.f32 %v2221, 0.0036580483
    %v2223 = vmul.f32 %v2218, %v2222
    %v2224 = vadd.f32 %v2223, 0.05243302
    %v2225 = vmul.f32 %v2218, %v2224
    %v2226 = vadd.f32 %v2225, 0.18741608
    %v2227 = vmul.f32 %v2218, %v2226
    %v2228 = vadd.f32 %v2227, 1.1283791
    %v2229 = vmul.f32 %v2053, %v2228
    %v2230 = vmul.f32 %v2218, 3.8918573e-05
    %v2231 = vadd.f32 %v2230, 0.001143296
    %v2232 = vmul.f32 %v2218, %v2231
    %v2233 = vadd.f32 %v2232, 0.014752088
    %v2234 = vmul.f32 %v2218, %v2233
    %v2235 = vadd.f32 %v2234, 0.112945676
    %v2236 = vmul.f32 %v2218, %v2235
    %v2237 = vadd.f32 %v2236, 0.4994258
    %v2238 = vmul.f32 %v2218, %v2237
    %v2239 = vadd.f32 %v2238, 1.0
    %v2240 = vrcp.pop %v2239
    %v2241 = vmul.f32 %v2239, %v2240
    %v2242 = vsub.f32 1.0, %v2241
    %v2243 = vmul.f32 %v2240, %v2242
    %v2244 = vadd.f32 %v2240, %v2243
    %vm2245 = vweird.f32 %v2239
    %vm2246 = vweird.f32 %v2240
    %vm2247 = vmor %vm2245, %vm2246
    %v2248 = vsel %vm2247, %v2240, %v2244
    %v2249 = vand.u32 2147483647, %v2239
    %vm2250 = vcmp.eq.f32.partialorder %v2249, 8.507059e+37
    %v2251 = vand.u32 %v2239, 2147483648
    %v2252 = vor.u32 1.1754944e-38, %v2251
    %v2253 = vsel %vm2250, %v2252, %v2248
    %v2254 = vmul.f32 %v2229, %v2253
    %v2255 = vmin.f32 %v2254, 1.0
    %v2256 = vmax.f32 %v2255, -1.0
    %v2257 = vmul.f32 %v2054, %v2054
    %v2258 = vmin.f32 16.0, %v2257
    %v2259 = vmul.f32 %v2258, 2.1237322e-06
    %v2260 = vadd.f32 %v2259, 0.00028619796
    %v2261 = vmul.f32 %v2258, %v2260
    %v2262 = vadd.f32 %v2261, 0.0036580483
    %v2263 = vmul.f32 %v2258, %v2262
    %v2264 = vadd.f32 %v2263, 0.05243302
    %v2265 = vmul.f32 %v2258, %v2264
    %v2266 = vadd.f32 %v2265, 0.18741608
    %v2267 = vmul.f32 %v2258, %v2266
    %v2268 = vadd.f32 %v2267, 1.1283791
    %v2269 = vmul.f32 %v2054, %v2268
    %v2270 = vmul.f32 %v2258, 3.8918573e-05
    %v2271 = vadd.f32 %v2270, 0.001143296
    %v2272 = vmul.f32 %v2258, %v2271
    %v2273 = vadd.f32 %v2272, 0.014752088
    %v2274 = vmul.f32 %v2258, %v2273
    %v2275 = vadd.f32 %v2274, 0.112945676
    %v2276 = vmul.f32 %v2258, %v2275
    %v2277 = vadd.f32 %v2276, 0.4994258
    %v2278 = vmul.f32 %v2258, %v2277
    %v2279 = vadd.f32 %v2278, 1.0
    %v2280 = vrcp.pop %v2279
    %v2281 = vmul.f32 %v2279, %v2280
    %v2282 = vsub.f32 1.0, %v2281
    %v2283 = vmul.f32 %v2280, %v2282
    %v2284 = vadd.f32 %v2280, %v2283
    %vm2285 = vweird.f32 %v2279
    %vm2286 = vweird.f32 %v2280
    %vm2287 = vmor %vm2285, %vm2286
    %v2288 = vsel %vm2287, %v2280, %v2284
    %v2289 = vand.u32 2147483647, %v2279
    %vm2290 = vcmp.eq.f32.partialorder %v2289, 8.507059e+37
    %v2291 = vand.u32 %v2279, 2147483648
    %v2292 = vor.u32 1.1754944e-38, %v2291
    %v2293 = vsel %vm2290, %v2292, %v2288
    %v2294 = vmul.f32 %v2269, %v2293
    %v2295 = vmin.f32 %v2294, 1.0
    %v2296 = vmax.f32 %v2295, -1.0
    %v2297 = vmul.f32 %v2055, %v2055
    %v2298 = vmin.f32 16.0, %v2297
    %v2299 = vmul.f32 %v2298, 2.1237322e-06
    %v2300 = vadd.f32 %v2299, 0.00028619796
    %v2301 = vmul.f32 %v2298, %v2300
    %v2302 = vadd.f32 %v2301, 0.0036580483
    %v2303 = vmul.f32 %v2298, %v2302
    %v2304 = vadd.f32 %v2303, 0.05243302
    %v2305 = vmul.f32 %v2298, %v2304
    %v2306 = vadd.f32 %v2305, 0.18741608
    %v2307 = vmul.f32 %v2298, %v2306
    %v2308 = vadd.f32 %v2307, 1.1283791
    %v2309 = vmul.f32 %v2055, %v2308
    %v2310 = vmul.f32 %v2298, 3.8918573e-05
    %v2311 = vadd.f32 %v2310, 0.001143296
    %v2312 = vmul.f32 %v2298, %v2311
    %v2313 = vadd.f32 %v2312, 0.014752088
    %v2314 = vmul.f32 %v2298, %v2313
    %v2315 = vadd.f32 %v2314, 0.112945676
    %v2316 = vmul.f32 %v2298, %v2315
    %v2317 = vadd.f32 %v2316, 0.4994258
    %v2318 = vmul.f32 %v2298, %v2317
    %v2319 = vadd.f32 %v2318, 1.0
    %v2320 = vrcp.pop %v2319
    %v2321 = vmul.f32 %v2319, %v2320
    %v2322 = vsub.f32 1.0, %v2321
    %v2323 = vmul.f32 %v2320, %v2322
    %v2324 = vadd.f32 %v2320, %v2323
    %vm2325 = vweird.f32 %v2319
    %vm2326 = vweird.f32 %v2320
    %vm2327 = vmor %vm2325, %vm2326
    %v2328 = vsel %vm2327, %v2320, %v2324
    %v2329 = vand.u32 2147483647, %v2319
    %vm2330 = vcmp.eq.f32.partialorder %v2329, 8.507059e+37
    %v2331 = vand.u32 %v2319, 2147483648
    %v2332 = vor.u32 1.1754944e-38, %v2331
    %v2333 = vsel %vm2330, %v2332, %v2328
    %v2334 = vmul.f32 %v2309, %v2333
    %v2335 = vmin.f32 %v2334, 1.0
    %v2336 = vmax.f32 %v2335, -1.0
    %v2337 = vmul.f32 %v2056, %v2056
    %v2338 = vmin.f32 16.0, %v2337
    %v2339 = vmul.f32 %v2338, 2.1237322e-06
    %v2340 = vadd.f32 %v2339, 0.00028619796
    %v2341 = vmul.f32 %v2338, %v2340
    %v2342 = vadd.f32 %v2341, 0.0036580483
    %v2343 = vmul.f32 %v2338, %v2342
    %v2344 = vadd.f32 %v2343, 0.05243302
    %v2345 = vmul.f32 %v2338, %v2344
    %v2346 = vadd.f32 %v2345, 0.18741608
    %v2347 = vmul.f32 %v2338, %v2346
    %v2348 = vadd.f32 %v2347, 1.1283791
    %v2349 = vmul.f32 %v2056, %v2348
    %v2350 = vmul.f32 %v2338, 3.8918573e-05
    %v2351 = vadd.f32 %v2350, 0.001143296
    %v2352 = vmul.f32 %v2338, %v2351
    %v2353 = vadd.f32 %v2352, 0.014752088
    %v2354 = vmul.f32 %v2338, %v2353
    %v2355 = vadd.f32 %v2354, 0.112945676
    %v2356 = vmul.f32 %v2338, %v2355
    %v2357 = vadd.f32 %v2356, 0.4994258
    %v2358 = vmul.f32 %v2338, %v2357
    %v2359 = vadd.f32 %v2358, 1.0
    %v2360 = vrcp.pop %v2359
    %v2361 = vmul.f32 %v2359, %v2360
    %v2362 = vsub.f32 1.0, %v2361
    %v2363 = vmul.f32 %v2360, %v2362
    %v2364 = vadd.f32 %v2360, %v2363
    %vm2365 = vweird.f32 %v2359
    %vm2366 = vweird.f32 %v2360
    %vm2367 = vmor %vm2365, %vm2366
    %v2368 = vsel %vm2367, %v2360, %v2364
    %v2369 = vand.u32 2147483647, %v2359
    %vm2370 = vcmp.eq.f32.partialorder %v2369, 8.507059e+37
    %v2371 = vand.u32 %v2359, 2147483648
    %v2372 = vor.u32 1.1754944e-38, %v2371
    %v2373 = vsel %vm2370, %v2372, %v2368
    %v2374 = vmul.f32 %v2349, %v2373
    %v2375 = vmin.f32 %v2374, 1.0
    %v2376 = vmax.f32 %v2375, -1.0
    %v2377 = vadd.f32 %v2096, 1.0
    %v2378 = vadd.f32 %v2136, 1.0
    %v2379 = vadd.f32 %v2176, 1.0
    %v2380 = vadd.f32 %v2216, 1.0
    %v2381 = vadd.f32 %v2256, 1.0
    %v2382 = vadd.f32 %v2296, 1.0
    %v2383 = vadd.f32 %v2336, 1.0
    %v2384 = vadd.f32 %v2376, 1.0
    %v2385 = vmul.f32 %v2041, %v2377
    %v2386 = vmul.f32 %v2042, %v2378
    %v2387 = vmul.f32 %v2043, %v2379
    %v2388 = vmul.f32 %v2044, %v2380
    %v2389 = vmul.f32 %v2045, %v2381
    %v2390 = vmul.f32 %v2046, %v2382
    %v2391 = vmul.f32 %v2047, %v2383
    %v2392 = vmul.f32 %v2048, %v2384
    %v2393 = vld [vmem:[%s1 + $0x4e0] sm:$0xff]
    %v2394 = vld [vmem:[%s1 + $0x4f0] sm:$0xff]
    %v2395 = vld [vmem:[%s1 + $0x500] sm:$0xff]
    %v2396 = vld [vmem:[%s1 + $0x510] sm:$0xff]
    %v2397 = vld [vmem:[%s1 + $0x520] sm:$0xff]
    %v2398 = vld [vmem:[%s1 + $0x530] sm:$0xff]
    %v2399 = vld [vmem:[%s1 + $0x540] sm:$0xff]
    %v2400 = vld [vmem:[%s1 + $0x550] sm:$0xff]
    %v2401 = vld [vmem:[%s1 + $0x772] ss:$0 sm:$0xff]
    %v2403 = vsel %vm1057, %v2385, 0
    %v2406 = vsel %vm1057, %v2386, 0
    %v2409 = vsel %vm1057, %v2387, 0
    %v2412 = vsel %vm1057, %v2388, 0
    %v2415 = vsel %vm1057, %v2389, 0
    %v2418 = vsel %vm1057, %v2390, 0
    %v2421 = vsel %vm1057, %v2391, 0
    %v2424 = vsel %vm1057, %v2392, 0
    %2426 = vmatpush.msra.mxu0 0.0
    %2427 = vmatpush.msra.mxu0 0.0
    %2428 = vmatpush.msra.mxu0 0.0
    %2429 = vmatpush.msra.mxu0 0.0
    %2430 = vmatpush.msra.mxu0 0.0
    %2431 = vmatpush.msra.mxu0 0.0
    %2432 = vmatpush.msra.mxu0 0.0
    %2433 = vmatpush.msra.mxu0 0.0
    %2434 = vmatpush.msra.mxu0 %v2400
    %2435 = vmatpush.msra.mxu0 %v2399
    %2436 = vmatpush.msra.mxu0 %v2398
    %2437 = vmatpush.msra.mxu0 %v2397
    %2438 = vmatpush.msra.mxu0 %v2396
    %2439 = vmatpush.msra.mxu0 %v2395
    %2440 = vmatpush.msra.mxu0 %v2394
    %2441 = vmatpush.msra.mxu0 %v2393
    %2442 = vmatmul.f32.gmra.mxu0 %v2403
    %v2443 = vpop.f32.mrf.mxu0
    %v2444 = vadd.f32 %v2401, %v2443
    %2445 = vmatmul.f32.gmra.mxu0 %v2406
    %v2446 = vpop.f32.mrf.mxu0
    %v2447 = vadd.f32 %v2401, %v2446
    %2448 = vmatmul.f32.gmra.mxu0 %v2409
    %v2449 = vpop.f32.mrf.mxu0
    %v2450 = vadd.f32 %v2401, %v2449
    %2451 = vmatmul.f32.gmra.mxu0 %v2412
    %v2452 = vpop.f32.mrf.mxu0
    %v2453 = vadd.f32 %v2401, %v2452
    %2454 = vmatmul.f32.gmra.mxu0 %v2415
    %v2455 = vpop.f32.mrf.mxu0
    %v2456 = vadd.f32 %v2401, %v2455
    %2457 = vmatmul.f32.gmra.mxu0 %v2418
    %v2458 = vpop.f32.mrf.mxu0
    %v2459 = vadd.f32 %v2401, %v2458
    %2460 = vmatmul.f32.gmra.mxu0 %v2421
    %v2461 = vpop.f32.mrf.mxu0
    %v2462 = vadd.f32 %v2401, %v2461
    %2463 = vmatmul.f32.gmra.mxu0 %v2424
    %v2464 = vpop.f32.mrf.mxu0
    %v2465 = vadd.f32 %v2401, %v2464
    %2466 = vdwg.mxu0
    %v2467 = vadd.f32 %v1769, %v2444
    %v2468 = vadd.f32 %v1770, %v2447
    %v2469 = vadd.f32 %v1771, %v2450
    %v2470 = vadd.f32 %v1772, %v2453
    %v2471 = vadd.f32 %v1773, %v2456
    %v2472 = vadd.f32 %v1774, %v2459
    %v2473 = vadd.f32 %v1775, %v2462
    %v2474 = vadd.f32 %v1776, %v2465
    %v2475 = vld [vmem:[%s1 + $0x773] ss:$0 sm:$0xff]
    %v2476 = vld [vmem:[%s1 + $0x774] ss:$0 sm:$0xff]
    %v2477 = vsel %vm507, %v2467, 0.0
    %2478 = vadd.xlane.f32.xlu0 %v2477
    %v2479 = vpop.xlane.xlu0 %2478
    %v2480 = vsel %vm507, %v2468, 0.0
    %2481 = vadd.xlane.f32.xlu0 %v2480
    %v2482 = vpop.xlane.xlu0 %2481
    %v2483 = vsel %vm507, %v2469, 0.0
    %2484 = vadd.xlane.f32.xlu0 %v2483
    %v2485 = vpop.xlane.xlu0 %2484
    %v2486 = vsel %vm507, %v2470, 0.0
    %2487 = vadd.xlane.f32.xlu0 %v2486
    %v2488 = vpop.xlane.xlu0 %2487
    %v2489 = vsel %vm507, %v2471, 0.0
    %2490 = vadd.xlane.f32.xlu0 %v2489
    %v2491 = vpop.xlane.xlu0 %2490
    %v2492 = vsel %vm507, %v2472, 0.0
    %2493 = vadd.xlane.f32.xlu0 %v2492
    %v2494 = vpop.xlane.xlu0 %2493
    %v2495 = vsel %vm507, %v2473, 0.0
    %2496 = vadd.xlane.f32.xlu0 %v2495
    %v2497 = vpop.xlane.xlu0 %2496
    %v2498 = vsel %vm507, %v2474, 0.0
    %2499 = vadd.xlane.f32.xlu0 %v2498
    %v2500 = vpop.xlane.xlu0 %2499
    %v2501 = vmul.f32 %v2479, %v538
    %v2502 = vmul.f32 %v2482, %v538
    %v2503 = vmul.f32 %v2485, %v538
    %v2504 = vmul.f32 %v2488, %v538
    %v2505 = vmul.f32 %v2491, %v538
    %v2506 = vmul.f32 %v2494, %v538
    %v2507 = vmul.f32 %v2497, %v538
    %v2508 = vmul.f32 %v2500, %v538
    %v2509 = vsub.f32 %v2467, %v2501
    %v2510 = vsub.f32 %v2468, %v2502
    %v2511 = vsub.f32 %v2469, %v2503
    %v2512 = vsub.f32 %v2470, %v2504
    %v2513 = vsub.f32 %v2471, %v2505
    %v2514 = vsub.f32 %v2472, %v2506
    %v2515 = vsub.f32 %v2473, %v2507
    %v2516 = vsub.f32 %v2474, %v2508
    %v2517 = vmul.f32 %v2509, %v2509
    %v2518 = vmul.f32 %v2510, %v2510
    %v2519 = vmul.f32 %v2511, %v2511
    %v2520 = vmul.f32 %v2512, %v2512
    %v2521 = vmul.f32 %v2513, %v2513
    %v2522 = vmul.f32 %v2514, %v2514
    %v2523 = vmul.f32 %v2515, %v2515
    %v2524 = vmul.f32 %v2516, %v2516
    %v2525 = vsel %vm507, %v2517, 0.0
    %2526 = vadd.xlane.f32.xlu0 %v2525
    %v2527 = vpop.xlane.xlu0 %2526
    %v2528 = vsel %vm507, %v2518, 0.0
    %2529 = vadd.xlane.f32.xlu0 %v2528
    %v2530 = vpop.xlane.xlu0 %2529
    %v2531 = vsel %vm507, %v2519, 0.0
    %2532 = vadd.xlane.f32.xlu0 %v2531
    %v2533 = vpop.xlane.xlu0 %2532
    %v2534 = vsel %vm507, %v2520, 0.0
    %2535 = vadd.xlane.f32.xlu0 %v2534
    %v2536 = vpop.xlane.xlu0 %2535
    %v2537 = vsel %vm507, %v2521, 0.0
    %2538 = vadd.xlane.f32.xlu0 %v2537
    %v2539 = vpop.xlane.xlu0 %2538
    %v2540 = vsel %vm507, %v2522, 0.0
    %2541 = vadd.xlane.f32.xlu0 %v2540
    %v2542 = vpop.xlane.xlu0 %2541
    %v2543 = vsel %vm507, %v2523, 0.0
    %2544 = vadd.xlane.f32.xlu0 %v2543
    %v2545 = vpop.xlane.xlu0 %2544
    %v2546 = vsel %vm507, %v2524, 0.0
    %2547 = vadd.xlane.f32.xlu0 %v2546
    %v2548 = vpop.xlane.xlu0 %2547
    %v2549 = vmul.f32 %v2527, %v538
    %v2550 = vmul.f32 %v2530, %v538
    %v2551 = vmul.f32 %v2533, %v538
    %v2552 = vmul.f32 %v2536, %v538
    %v2553 = vmul.f32 %v2539, %v538
    %v2554 = vmul.f32 %v2542, %v538
    %v2555 = vmul.f32 %v2545, %v538
    %v2556 = vmul.f32 %v2548, %v538
    %v2557 = vadd.f32 %v2549, 1e-05
    %v2558 = vadd.f32 %v2550, 1e-05
    %v2559 = vadd.f32 %v2551, 1e-05
    %v2560 = vadd.f32 %v2552, 1e-05
    %v2561 = vadd.f32 %v2553, 1e-05
    %v2562 = vadd.f32 %v2554, 1e-05
    %v2563 = vadd.f32 %v2555, 1e-05
    %v2564 = vadd.f32 %v2556, 1e-05
    %v2565 = vrsqrt.pop %v2557
    %v2566 = vmul.f32 %v2565, %v2557
    %v2567 = vmul.f32 %v2566, %v2565
    %v2568 = vmul.f32 0.5, %v2567
    %v2569 = vsub.f32 1.5, %v2568
    %v2570 = vmul.f32 %v2565, %v2569
    %vm2571 = vweird.f32 %v2557
    %vm2572 = vweird.f32 %v2565
    %vm2573 = vmor %vm2571, %vm2572
    %v2574 = vsel %vm2573, %v2565, %v2570
    %v2575 = vrsqrt.pop %v2558
    %v2576 = vmul.f32 %v2575, %v2558
    %v2577 = vmul.f32 %v2576, %v2575
    %v2578 = vmul.f32 0.5, %v2577
    %v2579 = vsub.f32 1.5, %v2578
    %v2580 = vmul.f32 %v2575, %v2579
    %vm2581 = vweird.f32 %v2558
    %vm2582 = vweird.f32 %v2575
    %vm2583 = vmor %vm2581, %vm2582
    %v2584 = vsel %vm2583, %v2575, %v2580
    %v2585 = vrsqrt.pop %v2559
    %v2586 = vmul.f32 %v2585, %v2559
    %v2587 = vmul.f32 %v2586, %v2585
    %v2588 = vmul.f32 0.5, %v2587
    %v2589 = vsub.f32 1.5, %v2588
    %v2590 = vmul.f32 %v2585, %v2589
    %vm2591 = vweird.f32 %v2559
    %vm2592 = vweird.f32 %v2585
    %vm2593 = vmor %vm2591, %vm2592
    %v2594 = vsel %vm2593, %v2585, %v2590
    %v2595 = vrsqrt.pop %v2560
    %v2596 = vmul.f32 %v2595, %v2560
    %v2597 = vmul.f32 %v2596, %v2595
    %v2598 = vmul.f32 0.5, %v2597
    %v2599 = vsub.f32 1.5, %v2598
    %v2600 = vmul.f32 %v2595, %v2599
    %vm2601 = vweird.f32 %v2560
    %vm2602 = vweird.f32 %v2595
    %vm2603 = vmor %vm2601, %vm2602
    %v2604 = vsel %vm2603, %v2595, %v2600
    %v2605 = vrsqrt.pop %v2561
    %v2606 = vmul.f32 %v2605, %v2561
    %v2607 = vmul.f32 %v2606, %v2605
    %v2608 = vmul.f32 0.5, %v2607
    %v2609 = vsub.f32 1.5, %v2608
    %v2610 = vmul.f32 %v2605, %v2609
    %vm2611 = vweird.f32 %v2561
    %vm2612 = vweird.f32 %v2605
    %vm2613 = vmor %vm2611, %vm2612
    %v2614 = vsel %vm2613, %v2605, %v2610
    %v2615 = vrsqrt.pop %v2562
    %v2616 = vmul.f32 %v2615, %v2562
    %v2617 = vmul.f32 %v2616, %v2615
    %v2618 = vmul.f32 0.5, %v2617
    %v2619 = vsub.f32 1.5, %v2618
    %v2620 = vmul.f32 %v2615, %v2619
    %vm2621 = vweird.f32 %v2562
    %vm2622 = vweird.f32 %v2615
    %vm2623 = vmor %vm2621, %vm2622
    %v2624 = vsel %vm2623, %v2615, %v2620
    %v2625 = vrsqrt.pop %v2563
    %v2626 = vmul.f32 %v2625, %v2563
    %v2627 = vmul.f32 %v2626, %v2625
    %v2628 = vmul.f32 0.5, %v2627
    %v2629 = vsub.f32 1.5, %v2628
    %v2630 = vmul.f32 %v2625, %v2629
    %vm2631 = vweird.f32 %v2563
    %vm2632 = vweird.f32 %v2625
    %vm2633 = vmor %vm2631, %vm2632
    %v2634 = vsel %vm2633, %v2625, %v2630
    %v2635 = vrsqrt.pop %v2564
    %v2636 = vmul.f32 %v2635, %v2564
    %v2637 = vmul.f32 %v2636, %v2635
    %v2638 = vmul.f32 0.5, %v2637
    %v2639 = vsub.f32 1.5, %v2638
    %v2640 = vmul.f32 %v2635, %v2639
    %vm2641 = vweird.f32 %v2564
    %vm2642 = vweird.f32 %v2635
    %vm2643 = vmor %vm2641, %vm2642
    %v2644 = vsel %vm2643, %v2635, %v2640
    %v2645 = vmul.f32 %v2509, %v2574
    %v2646 = vmul.f32 %v2510, %v2584
    %v2647 = vmul.f32 %v2511, %v2594
    %v2648 = vmul.f32 %v2512, %v2604
    %v2649 = vmul.f32 %v2513, %v2614
    %v2650 = vmul.f32 %v2514, %v2624
    %v2651 = vmul.f32 %v2515, %v2634
    %v2652 = vmul.f32 %v2516, %v2644
    %v2653 = vmul.f32 %v2645, %v2475
    %v2654 = vmul.f32 %v2646, %v2475
    %v2655 = vmul.f32 %v2647, %v2475
    %v2656 = vmul.f32 %v2648, %v2475
    %v2657 = vmul.f32 %v2649, %v2475
    %v2658 = vmul.f32 %v2650, %v2475
    %v2659 = vmul.f32 %v2651, %v2475
    %v2660 = vmul.f32 %v2652, %v2475
    %v2661 = vadd.f32 %v2653, %v2476
    %v2662 = vadd.f32 %v2654, %v2476
    %v2663 = vadd.f32 %v2655, %v2476
    %v2664 = vadd.f32 %v2656, %v2476
    %v2665 = vadd.f32 %v2657, %v2476
    %v2666 = vadd.f32 %v2658, %v2476
    %v2667 = vadd.f32 %v2659, %v2476
    %v2668 = vadd.f32 %v2660, %v2476
    %v2669 = vld [vmem:[%s1 + $0x560] sm:$0xff]
    %v2670 = vld [vmem:[%s1 + $0x570] sm:$0xff]
    %v2671 = vld [vmem:[%s1 + $0x580] sm:$0xff]
    %v2672 = vld [vmem:[%s1 + $0x590] sm:$0xff]
    %v2674 = vsel %vm507, %v2661, 0
    %v2677 = vsel %vm507, %v2662, 0
    %v2680 = vsel %vm507, %v2663, 0
    %v2683 = vsel %vm507, %v2664, 0
    %v2686 = vsel %vm507, %v2665, 0
    %v2689 = vsel %vm507, %v2666, 0
    %v2692 = vsel %vm507, %v2667, 0
    %v2695 = vsel %vm507, %v2668, 0
    %2697 = vmatpush.msra.mxu0 0.0
    %2698 = vmatpush.msra.mxu0 0.0
    %2699 = vmatpush.msra.mxu0 0.0
    %2700 = vmatpush.msra.mxu0 0.0
    %2701 = vmatpush.msra.mxu0 0.0
    %2702 = vmatpush.msra.mxu0 0.0
    %2703 = vmatpush.msra.mxu0 0.0
    %2704 = vmatpush.msra.mxu0 0.0
    %2705 = vmatpush.msra.mxu0 0.0
    %2706 = vmatpush.msra.mxu0 0.0
    %2707 = vmatpush.msra.mxu0 0.0
    %2708 = vmatpush.msra.mxu0 0.0
    %2709 = vmatpush.msra.mxu0 %v2672
    %2710 = vmatpush.msra.mxu0 %v2671
    %2711 = vmatpush.msra.mxu0 %v2670
    %2712 = vmatpush.msra.mxu0 %v2669
    %2713 = vmatmul.f32.gmra.mxu0 %v2674
    %v2714 = vpop.f32.mrf.mxu0
    %v2715 = vadd.f32 0.0, %v2714
    %2716 = vmatmul.f32.gmra.mxu0 %v2677
    %v2717 = vpop.f32.mrf.mxu0
    %v2718 = vadd.f32 0.0, %v2717
    %2719 = vmatmul.f32.gmra.mxu0 %v2680
    %v2720 = vpop.f32.mrf.mxu0
    %v2721 = vadd.f32 0.0, %v2720
    %2722 = vmatmul.f32.gmra.mxu0 %v2683
    %v2723 = vpop.f32.mrf.mxu0
    %v2724 = vadd.f32 0.0, %v2723
    %2725 = vmatmul.f32.gmra.mxu0 %v2686
    %v2726 = vpop.f32.mrf.mxu0
    %v2727 = vadd.f32 0.0, %v2726
    %2728 = vmatmul.f32.gmra.mxu0 %v2689
    %v2729 = vpop.f32.mrf.mxu0
    %v2730 = vadd.f32 0.0, %v2729
    %2731 = vmatmul.f32.gmra.mxu0 %v2692
    %v2732 = vpop.f32.mrf.mxu0
    %v2733 = vadd.f32 0.0, %v2732
    %2734 = vmatmul.f32.gmra.mxu0 %v2695
    %v2735 = vpop.f32.mrf.mxu0
    %v2736 = vadd.f32 0.0, %v2735
    %2737 = vdwg.mxu0
    %v2738 = vmul.f32 %v2715, %v485
    %v2739 = vmul.f32 %v2718, %v485
    %v2740 = vmul.f32 %v2721, %v485
    %v2741 = vmul.f32 %v2724, %v485
    %v2742 = vmul.f32 %v2727, %v485
    %v2743 = vmul.f32 %v2730, %v485
    %v2744 = vmul.f32 %v2733, %v485
    %v2745 = vmul.f32 %v2736, %v485
    %v2746 = vmul.f32 %v2715, %v489
    %v2747 = vmul.f32 %v2718, %v489
    %v2748 = vmul.f32 %v2721, %v489
    %v2749 = vmul.f32 %v2724, %v489
    %v2750 = vmul.f32 %v2727, %v489
    %v2751 = vmul.f32 %v2730, %v489
    %v2752 = vmul.f32 %v2733, %v489
    %v2753 = vmul.f32 %v2736, %v489
    %v2754 = vmul.f32 %v2715, %v493
    %v2755 = vmul.f32 %v2718, %v493
    %v2756 = vmul.f32 %v2721, %v493
    %v2757 = vmul.f32 %v2724, %v493
    %v2758 = vmul.f32 %v2727, %v493
    %v2759 = vmul.f32 %v2730, %v493
    %v2760 = vmul.f32 %v2733, %v493
    %v2761 = vmul.f32 %v2736, %v493
    %v2762 = vmul.f32 %v2715, %v497
    %v2763 = vmul.f32 %v2718, %v497
    %v2764 = vmul.f32 %v2721, %v497
    %v2765 = vmul.f32 %v2724, %v497
    %v2766 = vmul.f32 %v2727, %v497
    %v2767 = vmul.f32 %v2730, %v497
    %v2768 = vmul.f32 %v2733, %v497
    %v2769 = vmul.f32 %v2736, %v497
    %2778 = vrot.lane.b32.xlu0 %v2715, 96
    %v2779 = vpop.permute.xlu0 %2778
    %2780 = vrot.lane.b32.xlu0 %v2718, 96
    %v2781 = vpop.permute.xlu0 %2780
    %2782 = vrot.lane.b32.xlu0 %v2721, 96
    %v2783 = vpop.permute.xlu0 %2782
    %2784 = vrot.lane.b32.xlu0 %v2724, 96
    %v2785 = vpop.permute.xlu0 %2784
    %2786 = vrot.lane.b32.xlu0 %v2727, 96
    %v2787 = vpop.permute.xlu0 %2786
    %2788 = vrot.lane.b32.xlu0 %v2730, 96
    %v2789 = vpop.permute.xlu0 %2788
    %2790 = vrot.lane.b32.xlu0 %v2733, 96
    %v2791 = vpop.permute.xlu0 %2790
    %2792 = vrot.lane.b32.xlu0 %v2736, 96
    %v2793 = vpop.permute.xlu0 %2792
    %v2795 = vsel %vm507, %v2738, 0
    %v2798 = vsel %vm507, %v2739, 0
    %v2801 = vsel %vm507, %v2740, 0
    %v2804 = vsel %vm507, %v2741, 0
    %v2807 = vsel %vm507, %v2742, 0
    %v2810 = vsel %vm507, %v2743, 0
    %v2813 = vsel %vm507, %v2744, 0
    %v2816 = vsel %vm507, %v2745, 0
    %v2819 = vsel %vm507, %v2746, 0
    %v2822 = vsel %vm507, %v2747, 0
    %v2825 = vsel %vm507, %v2748, 0
    %v2828 = vsel %vm507, %v2749, 0
    %v2831 = vsel %vm507, %v2750, 0
    %v2834 = vsel %vm507, %v2751, 0
    %v2837 = vsel %vm507, %v2752, 0
    %v2840 = vsel %vm507, %v2753, 0
    %v2843 = vsel %vm507, %v2754, 0
    %v2846 = vsel %vm507, %v2755, 0
    %v2849 = vsel %vm507, %v2756, 0
    %v2852 = vsel %vm507, %v2757, 0
    %v2855 = vsel %vm507, %v2758, 0
    %v2858 = vsel %vm507, %v2759, 0
    %v2861 = vsel %vm507, %v2760, 0
    %v2864 = vsel %vm507, %v2761, 0
    %v2867 = vsel %vm507, %v2762, 0
    %v2870 = vsel %vm507, %v2763, 0
    %v2873 = vsel %vm507, %v2764, 0
    %v2876 = vsel %vm507, %v2765, 0
    %v2879 = vsel %vm507, %v2766, 0
    %v2882 = vsel %vm507, %v2767, 0
    %v2885 = vsel %vm507, %v2768, 0
    %v2888 = vsel %vm507, %v2769, 0
    %v2890 = vsel %vm507, %v2779, 0
    %v2892 = vsel %vm507, %v2781, 0
    %v2894 = vsel %vm507, %v2783, 0
    %v2896 = vsel %vm507, %v2785, 0
    %v2898 = vsel %vm507, %v2787, 0
    %v2900 = vsel %vm507, %v2789, 0
    %v2902 = vsel %vm507, %v2791, 0
    %v2904 = vsel %vm507, %v2793, 0
    %2906 = vmatpush.xpose.msra.mxu0 0.0
    %2907 = vmatpush.xpose.msra.mxu0 0.0
    %2908 = vmatpush.xpose.msra.mxu0 0.0
    %2909 = vmatpush.xpose.msra.mxu0 0.0
    %2910 = vmatpush.xpose.msra.mxu0 0.0
    %2911 = vmatpush.xpose.msra.mxu0 0.0
    %2912 = vmatpush.xpose.msra.mxu0 0.0
    %2913 = vmatpush.xpose.msra.mxu0 0.0
    %2914 = vmatpush.xpose.msra.mxu0 %v2904
    %2915 = vmatpush.xpose.msra.mxu0 %v2902
    %2916 = vmatpush.xpose.msra.mxu0 %v2900
    %2917 = vmatpush.xpose.msra.mxu0 %v2898
    %2918 = vmatpush.xpose.msra.mxu0 %v2896
    %2919 = vmatpush.xpose.msra.mxu0 %v2894
    %2920 = vmatpush.xpose.msra.mxu0 %v2892
    %2921 = vmatpush.xpose.msra.mxu0 %v2890
    %2922 = vmatmul.f32.gmra.mxu0 %v2795
    %v2923 = vpop.f32.mrf.mxu0
    %v2924 = vadd.f32 %v500, %v2923
    %2925 = vmatmul.f32.gmra.mxu0 %v2798
    %v2926 = vpop.f32.mrf.mxu0
    %v2927 = vadd.f32 %v500, %v2926
    %2928 = vmatmul.f32.gmra.mxu0 %v2801
    %v2929 = vpop.f32.mrf.mxu0
    %v2930 = vadd.f32 %v500, %v2929
    %2931 = vmatmul.f32.gmra.mxu0 %v2804
    %v2932 = vpop.f32.mrf.mxu0
    %v2933 = vadd.f32 %v500, %v2932
    %2934 = vmatmul.f32.gmra.mxu0 %v2807
    %v2935 = vpop.f32.mrf.mxu0
    %v2936 = vadd.f32 %v504, %v2935
    %2937 = vmatmul.f32.gmra.mxu0 %v2810
    %v2938 = vpop.f32.mrf.mxu0
    %v2939 = vadd.f32 %v504, %v2938
    %2940 = vmatmul.f32.gmra.mxu0 %v2813
    %v2941 = vpop.f32.mrf.mxu0
    %v2942 = vadd.f32 %v504, %v2941
    %2943 = vmatmul.f32.gmra.mxu0 %v2816
    %v2944 = vpop.f32.mrf.mxu0
    %v2945 = vadd.f32 %v504, %v2944
    %2946 = vmatmul.f32.gmra.mxu0 %v2819
    %v2947 = vpop.f32.mrf.mxu0
    %v2948 = vadd.f32 %v500, %v2947
    %2949 = vmatmul.f32.gmra.mxu0 %v2822
    %v2950 = vpop.f32.mrf.mxu0
    %v2951 = vadd.f32 %v500, %v2950
    %2952 = vmatmul.f32.gmra.mxu0 %v2825
    %v2953 = vpop.f32.mrf.mxu0
    %v2954 = vadd.f32 %v500, %v2953
    %2955 = vmatmul.f32.gmra.mxu0 %v2828
    %v2956 = vpop.f32.mrf.mxu0
    %v2957 = vadd.f32 %v500, %v2956
    %2958 = vmatmul.f32.gmra.mxu0 %v2831
    %v2959 = vpop.f32.mrf.mxu0
    %v2960 = vadd.f32 %v504, %v2959
    %2961 = vmatmul.f32.gmra.mxu0 %v2834
    %v2962 = vpop.f32.mrf.mxu0
    %v2963 = vadd.f32 %v504, %v2962
    %2964 = vmatmul.f32.gmra.mxu0 %v2837
    %v2965 = vpop.f32.mrf.mxu0
    %v2966 = vadd.f32 %v504, %v2965
    %2967 = vmatmul.f32.gmra.mxu0 %v2840
    %v2968 = vpop.f32.mrf.mxu0
    %v2969 = vadd.f32 %v504, %v2968
    %2970 = vmatmul.f32.gmra.mxu0 %v2843
    %v2971 = vpop.f32.mrf.mxu0
    %v2972 = vadd.f32 %v500, %v2971
    %2973 = vmatmul.f32.gmra.mxu0 %v2846
    %v2974 = vpop.f32.mrf.mxu0
    %v2975 = vadd.f32 %v500, %v2974
    %2976 = vmatmul.f32.gmra.mxu0 %v2849
    %v2977 = vpop.f32.mrf.mxu0
    %v2978 = vadd.f32 %v500, %v2977
    %2979 = vmatmul.f32.gmra.mxu0 %v2852
    %v2980 = vpop.f32.mrf.mxu0
    %v2981 = vadd.f32 %v500, %v2980
    %2982 = vmatmul.f32.gmra.mxu0 %v2855
    %v2983 = vpop.f32.mrf.mxu0
    %v2984 = vadd.f32 %v504, %v2983
    %2985 = vmatmul.f32.gmra.mxu0 %v2858
    %v2986 = vpop.f32.mrf.mxu0
    %v2987 = vadd.f32 %v504, %v2986
    %2988 = vmatmul.f32.gmra.mxu0 %v2861
    %v2989 = vpop.f32.mrf.mxu0
    %v2990 = vadd.f32 %v504, %v2989
    %2991 = vmatmul.f32.gmra.mxu0 %v2864
    %v2992 = vpop.f32.mrf.mxu0
    %v2993 = vadd.f32 %v504, %v2992
    %2994 = vmatmul.f32.gmra.mxu0 %v2867
    %v2995 = vpop.f32.mrf.mxu0
    %v2996 = vadd.f32 %v500, %v2995
    %2997 = vmatmul.f32.gmra.mxu0 %v2870
    %v2998 = vpop.f32.mrf.mxu0
    %v2999 = vadd.f32 %v500, %v2998
    %3000 = vmatmul.f32.gmra.mxu0 %v2873
    %v3001 = vpop.f32.mrf.mxu0
    %v3002 = vadd.f32 %v500, %v3001
    %3003 = vmatmul.f32.gmra.mxu0 %v2876
    %v3004 = vpop.f32.mrf.mxu0
    %v3005 = vadd.f32 %v500, %v3004
    %3006 = vmatmul.f32.gmra.mxu0 %v2879
    %v3007 = vpop.f32.mrf.mxu0
    %v3008 = vadd.f32 %v504, %v3007
    %3009 = vmatmul.f32.gmra.mxu0 %v2882
    %v3010 = vpop.f32.mrf.mxu0
    %v3011 = vadd.f32 %v504, %v3010
    %3012 = vmatmul.f32.gmra.mxu0 %v2885
    %v3013 = vpop.f32.mrf.mxu0
    %v3014 = vadd.f32 %v504, %v3013
    %3015 = vmatmul.f32.gmra.mxu0 %v2888
    %v3016 = vpop.f32.mrf.mxu0
    %v3017 = vadd.f32 %v504, %v3016
    %3018 = vdwg.mxu0
    %v3019 = vsel %vm1057, %v2924, -inf
    %3020 = vmax.xlane.f32.xlu0 %v3019
    %v3021 = vpop.xlane.xlu0 %3020
    %v3022 = vsel %vm1057, %v2927, -inf
    %3023 = vmax.xlane.f32.xlu0 %v3022
    %v3024 = vpop.xlane.xlu0 %3023
    %v3025 = vsel %vm1057, %v2930, -inf
    %3026 = vmax.xlane.f32.xlu0 %v3025
    %v3027 = vpop.xlane.xlu0 %3026
    %v3028 = vsel %vm1057, %v2933, -inf
    %3029 = vmax.xlane.f32.xlu0 %v3028
    %v3030 = vpop.xlane.xlu0 %3029
    %v3031 = vsel %vm1057, %v2936, -inf
    %3032 = vmax.xlane.f32.xlu0 %v3031
    %v3033 = vpop.xlane.xlu0 %3032
    %v3034 = vsel %vm1057, %v2939, -inf
    %3035 = vmax.xlane.f32.xlu0 %v3034
    %v3036 = vpop.xlane.xlu0 %3035
    %v3037 = vsel %vm1057, %v2942, -inf
    %3038 = vmax.xlane.f32.xlu0 %v3037
    %v3039 = vpop.xlane.xlu0 %3038
    %v3040 = vsel %vm1057, %v2945, -inf
    %3041 = vmax.xlane.f32.xlu0 %v3040
    %v3042 = vpop.xlane.xlu0 %3041
    %v3043 = vsel %vm1057, %v2948, -inf
    %3044 = vmax.xlane.f32.xlu0 %v3043
    %v3045 = vpop.xlane.xlu0 %3044
    %v3046 = vsel %vm1057, %v2951, -inf
    %3047 = vmax.xlane.f32.xlu0 %v3046
    %v3048 = vpop.xlane.xlu0 %3047
    %v3049 = vsel %vm1057, %v2954, -inf
    %3050 = vmax.xlane.f32.xlu0 %v3049
    %v3051 = vpop.xlane.xlu0 %3050
    %v3052 = vsel %vm1057, %v2957, -inf
    %3053 = vmax.xlane.f32.xlu0 %v3052
    %v3054 = vpop.xlane.xlu0 %3053
    %v3055 = vsel %vm1057, %v2960, -inf
    %3056 = vmax.xlane.f32.xlu0 %v3055
    %v3057 = vpop.xlane.xlu0 %3056
    %v3058 = vsel %vm1057, %v2963, -inf
    %3059 = vmax.xlane.f32.xlu0 %v3058
    %v3060 = vpop.xlane.xlu0 %3059
    %v3061 = vsel %vm1057, %v2966, -inf
    %3062 = vmax.xlane.f32.xlu0 %v3061
    %v3063 = vpop.xlane.xlu0 %3062
    %v3064 = vsel %vm1057, %v2969, -inf
    %3065 = vmax.xlane.f32.xlu0 %v3064
    %v3066 = vpop.xlane.xlu0 %3065
    %v3067 = vsel %vm1057, %v2972, -inf
    %3068 = vmax.xlane.f32.xlu0 %v3067
    %v3069 = vpop.xlane.xlu0 %3068
    %v3070 = vsel %vm1057, %v2975, -inf
    %3071 = vmax.xlane.f32.xlu0 %v3070
    %v3072 = vpop.xlane.xlu0 %3071
    %v3073 = vsel %vm1057, %v2978, -inf
    %3074 = vmax.xlane.f32.xlu0 %v3073
    %v3075 = vpop.xlane.xlu0 %3074
    %v3076 = vsel %vm1057, %v2981, -inf
    %3077 = vmax.xlane.f32.xlu0 %v3076
    %v3078 = vpop.xlane.xlu0 %3077
    %v3079 = vsel %vm1057, %v2984, -inf
    %3080 = vmax.xlane.f32.xlu0 %v3079
    %v3081 = vpop.xlane.xlu0 %3080
    %v3082 = vsel %vm1057, %v2987, -inf
    %3083 = vmax.xlane.f32.xlu0 %v3082
    %v3084 = vpop.xlane.xlu0 %3083
    %v3085 = vsel %vm1057, %v2990, -inf
    %3086 = vmax.xlane.f32.xlu0 %v3085
    %v3087 = vpop.xlane.xlu0 %3086
    %v3088 = vsel %vm1057, %v2993, -inf
    %3089 = vmax.xlane.f32.xlu0 %v3088
    %v3090 = vpop.xlane.xlu0 %3089
    %v3091 = vsel %vm1057, %v2996, -inf
    %3092 = vmax.xlane.f32.xlu0 %v3091
    %v3093 = vpop.xlane.xlu0 %3092
    %v3094 = vsel %vm1057, %v2999, -inf
    %3095 = vmax.xlane.f32.xlu0 %v3094
    %v3096 = vpop.xlane.xlu0 %3095
    %v3097 = vsel %vm1057, %v3002, -inf
    %3098 = vmax.xlane.f32.xlu0 %v3097
    %v3099 = vpop.xlane.xlu0 %3098
    %v3100 = vsel %vm1057, %v3005, -inf
    %3101 = vmax.xlane.f32.xlu0 %v3100
    %v3102 = vpop.xlane.xlu0 %3101
    %v3103 = vsel %vm1057, %v3008, -inf
    %3104 = vmax.xlane.f32.xlu0 %v3103
    %v3105 = vpop.xlane.xlu0 %3104
    %v3106 = vsel %vm1057, %v3011, -inf
    %3107 = vmax.xlane.f32.xlu0 %v3106
    %v3108 = vpop.xlane.xlu0 %3107
    %v3109 = vsel %vm1057, %v3014, -inf
    %3110 = vmax.xlane.f32.xlu0 %v3109
    %v3111 = vpop.xlane.xlu0 %3110
    %v3112 = vsel %vm1057, %v3017, -inf
    %3113 = vmax.xlane.f32.xlu0 %v3112
    %v3114 = vpop.xlane.xlu0 %3113
    %v3115 = vsub.f32 %v2924, %v3021
    %v3116 = vsub.f32 %v2927, %v3024
    %v3117 = vsub.f32 %v2930, %v3027
    %v3118 = vsub.f32 %v2933, %v3030
    %v3119 = vsub.f32 %v2936, %v3033
    %v3120 = vsub.f32 %v2939, %v3036
    %v3121 = vsub.f32 %v2942, %v3039
    %v3122 = vsub.f32 %v2945, %v3042
    %v3123 = vsub.f32 %v2948, %v3045
    %v3124 = vsub.f32 %v2951, %v3048
    %v3125 = vsub.f32 %v2954, %v3051
    %v3126 = vsub.f32 %v2957, %v3054
    %v3127 = vsub.f32 %v2960, %v3057
    %v3128 = vsub.f32 %v2963, %v3060
    %v3129 = vsub.f32 %v2966, %v3063
    %v3130 = vsub.f32 %v2969, %v3066
    %v3131 = vsub.f32 %v2972, %v3069
    %v3132 = vsub.f32 %v2975, %v3072
    %v3133 = vsub.f32 %v2978, %v3075
    %v3134 = vsub.f32 %v2981, %v3078
    %v3135 = vsub.f32 %v2984, %v3081
    %v3136 = vsub.f32 %v2987, %v3084
    %v3137 = vsub.f32 %v2990, %v3087
    %v3138 = vsub.f32 %v2993, %v3090
    %v3139 = vsub.f32 %v2996, %v3093
    %v3140 = vsub.f32 %v2999, %v3096
    %v3141 = vsub.f32 %v3002, %v3099
    %v3142 = vsub.f32 %v3005, %v3102
    %v3143 = vsub.f32 %v3008, %v3105
    %v3144 = vsub.f32 %v3011, %v3108
    %v3145 = vsub.f32 %v3014, %v3111
    %v3146 = vsub.f32 %v3017, %v3114
    %v3147 = vmul.f32 %v3115, 1.442695
    %v3148 = vpow.pop %v3147
    %v3149 = vmul.f32 %v3116, 1.442695
    %v3150 = vpow.pop %v3149
    %v3151 = vmul.f32 %v3117, 1.442695
    %v3152 = vpow.pop %v3151
    %v3153 = vmul.f32 %v3118, 1.442695
    %v3154 = vpow.pop %v3153
    %v3155 = vmul.f32 %v3119, 1.442695
    %v3156 = vpow.pop %v3155
    %v3157 = vmul.f32 %v3120, 1.442695
    %v3158 = vpow.pop %v3157
    %v3159 = vmul.f32 %v3121, 1.442695
    %v3160 = vpow.pop %v3159
    %v3161 = vmul.f32 %v3122, 1.442695
    %v3162 = vpow.pop %v3161
    %v3163 = vmul.f32 %v3123, 1.442695
    %v3164 = vpow.pop %v3163
    %v3165 = vmul.f32 %v3124, 1.442695
    %v3166 = vpow.pop %v3165
    %v3167 = vmul.f32 %v3125, 1.442695
    %v3168 = vpow.pop %v3167
    %v3169 = vmul.f32 %v3126, 1.442695
    %v3170 = vpow.pop %v3169
    %v3171 = vmul.f32 %v3127, 1.442695
    %v3172 = vpow.pop %v3171
    %v3173 = vmul.f32 %v3128, 1.442695
    %v3174 = vpow.pop %v3173
    %v3175 = vmul.f32 %v3129, 1.442695
    %v3176 = vpow.pop %v3175
    %v3177 = vmul.f32 %v3130, 1.442695
    %v3178 = vpow.pop %v3177
    %v3179 = vmul.f32 %v3131, 1.442695
    %v3180 = vpow.pop %v3179
    %v3181 = vmul.f32 %v3132, 1.442695
    %v3182 = vpow.pop %v3181
    %v3183 = vmul.f32 %v3133, 1.442695
    %v3184 = vpow.pop %v3183
    %v3185 = vmul.f32 %v3134, 1.442695
    %v3186 = vpow.pop %v3185
    %v3187 = vmul.f32 %v3135, 1.442695
    %v3188 = vpow.pop %v3187
    %v3189 = vmul.f32 %v3136, 1.442695
    %v3190 = vpow.pop %v3189
    %v3191 = vmul.f32 %v3137, 1.442695
    %v3192 = vpow.pop %v3191
    %v3193 = vmul.f32 %v3138, 1.442695
    %v3194 = vpow.pop %v3193
    %v3195 = vmul.f32 %v3139, 1.442695
    %v3196 = vpow.pop %v3195
    %v3197 = vmul.f32 %v3140, 1.442695
    %v3198 = vpow.pop %v3197
    %v3199 = vmul.f32 %v3141, 1.442695
    %v3200 = vpow.pop %v3199
    %v3201 = vmul.f32 %v3142, 1.442695
    %v3202 = vpow.pop %v3201
    %v3203 = vmul.f32 %v3143, 1.442695
    %v3204 = vpow.pop %v3203
    %v3205 = vmul.f32 %v3144, 1.442695
    %v3206 = vpow.pop %v3205
    %v3207 = vmul.f32 %v3145, 1.442695
    %v3208 = vpow.pop %v3207
    %v3209 = vmul.f32 %v3146, 1.442695
    %v3210 = vpow.pop %v3209
    %v3211 = vsel %vm1057, %v3148, 0.0
    %3212 = vadd.xlane.f32.xlu0 %v3211
    %v3213 = vpop.xlane.xlu0 %3212
    %v3214 = vsel %vm1057, %v3150, 0.0
    %3215 = vadd.xlane.f32.xlu0 %v3214
    %v3216 = vpop.xlane.xlu0 %3215
    %v3217 = vsel %vm1057, %v3152, 0.0
    %3218 = vadd.xlane.f32.xlu0 %v3217
    %v3219 = vpop.xlane.xlu0 %3218
    %v3220 = vsel %vm1057, %v3154, 0.0
    %3221 = vadd.xlane.f32.xlu0 %v3220
    %v3222 = vpop.xlane.xlu0 %3221
    %v3223 = vsel %vm1057, %v3156, 0.0
    %3224 = vadd.xlane.f32.xlu0 %v3223
    %v3225 = vpop.xlane.xlu0 %3224
    %v3226 = vsel %vm1057, %v3158, 0.0
    %3227 = vadd.xlane.f32.xlu0 %v3226
    %v3228 = vpop.xlane.xlu0 %3227
    %v3229 = vsel %vm1057, %v3160, 0.0
    %3230 = vadd.xlane.f32.xlu0 %v3229
    %v3231 = vpop.xlane.xlu0 %3230
    %v3232 = vsel %vm1057, %v3162, 0.0
    %3233 = vadd.xlane.f32.xlu0 %v3232
    %v3234 = vpop.xlane.xlu0 %3233
    %v3235 = vsel %vm1057, %v3164, 0.0
    %3236 = vadd.xlane.f32.xlu0 %v3235
    %v3237 = vpop.xlane.xlu0 %3236
    %v3238 = vsel %vm1057, %v3166, 0.0
    %3239 = vadd.xlane.f32.xlu0 %v3238
    %v3240 = vpop.xlane.xlu0 %3239
    %v3241 = vsel %vm1057, %v3168, 0.0
    %3242 = vadd.xlane.f32.xlu0 %v3241
    %v3243 = vpop.xlane.xlu0 %3242
    %v3244 = vsel %vm1057, %v3170, 0.0
    %3245 = vadd.xlane.f32.xlu0 %v3244
    %v3246 = vpop.xlane.xlu0 %3245
    %v3247 = vsel %vm1057, %v3172, 0.0
    %3248 = vadd.xlane.f32.xlu0 %v3247
    %v3249 = vpop.xlane.xlu0 %3248
    %v3250 = vsel %vm1057, %v3174, 0.0
    %3251 = vadd.xlane.f32.xlu0 %v3250
    %v3252 = vpop.xlane.xlu0 %3251
    %v3253 = vsel %vm1057, %v3176, 0.0
    %3254 = vadd.xlane.f32.xlu0 %v3253
    %v3255 = vpop.xlane.xlu0 %3254
    %v3256 = vsel %vm1057, %v3178, 0.0
    %3257 = vadd.xlane.f32.xlu0 %v3256
    %v3258 = vpop.xlane.xlu0 %3257
    %v3259 = vsel %vm1057, %v3180, 0.0
    %3260 = vadd.xlane.f32.xlu0 %v3259
    %v3261 = vpop.xlane.xlu0 %3260
    %v3262 = vsel %vm1057, %v3182, 0.0
    %3263 = vadd.xlane.f32.xlu0 %v3262
    %v3264 = vpop.xlane.xlu0 %3263
    %v3265 = vsel %vm1057, %v3184, 0.0
    %3266 = vadd.xlane.f32.xlu0 %v3265
    %v3267 = vpop.xlane.xlu0 %3266
    %v3268 = vsel %vm1057, %v3186, 0.0
    %3269 = vadd.xlane.f32.xlu0 %v3268
    %v3270 = vpop.xlane.xlu0 %3269
    %v3271 = vsel %vm1057, %v3188, 0.0
    %3272 = vadd.xlane.f32.xlu0 %v3271
    %v3273 = vpop.xlane.xlu0 %3272
    %v3274 = vsel %vm1057, %v3190, 0.0
    %3275 = vadd.xlane.f32.xlu0 %v3274
    %v3276 = vpop.xlane.xlu0 %3275
    %v3277 = vsel %vm1057, %v3192, 0.0
    %3278 = vadd.xlane.f32.xlu0 %v3277
    %v3279 = vpop.xlane.xlu0 %3278
    %v3280 = vsel %vm1057, %v3194, 0.0
    %3281 = vadd.xlane.f32.xlu0 %v3280
    %v3282 = vpop.xlane.xlu0 %3281
    %v3283 = vsel %vm1057, %v3196, 0.0
    %3284 = vadd.xlane.f32.xlu0 %v3283
    %v3285 = vpop.xlane.xlu0 %3284
    %v3286 = vsel %vm1057, %v3198, 0.0
    %3287 = vadd.xlane.f32.xlu0 %v3286
    %v3288 = vpop.xlane.xlu0 %3287
    %v3289 = vsel %vm1057, %v3200, 0.0
    %3290 = vadd.xlane.f32.xlu0 %v3289
    %v3291 = vpop.xlane.xlu0 %3290
    %v3292 = vsel %vm1057, %v3202, 0.0
    %3293 = vadd.xlane.f32.xlu0 %v3292
    %v3294 = vpop.xlane.xlu0 %3293
    %v3295 = vsel %vm1057, %v3204, 0.0
    %3296 = vadd.xlane.f32.xlu0 %v3295
    %v3297 = vpop.xlane.xlu0 %3296
    %v3298 = vsel %vm1057, %v3206, 0.0
    %3299 = vadd.xlane.f32.xlu0 %v3298
    %v3300 = vpop.xlane.xlu0 %3299
    %v3301 = vsel %vm1057, %v3208, 0.0
    %3302 = vadd.xlane.f32.xlu0 %v3301
    %v3303 = vpop.xlane.xlu0 %3302
    %v3304 = vsel %vm1057, %v3210, 0.0
    %3305 = vadd.xlane.f32.xlu0 %v3304
    %v3306 = vpop.xlane.xlu0 %3305
    %v3307 = vrcp.pop %v3213
    %v3308 = vrcp.pop %v3216
    %v3309 = vrcp.pop %v3219
    %v3310 = vrcp.pop %v3222
    %v3311 = vrcp.pop %v3225
    %v3312 = vrcp.pop %v3228
    %v3313 = vrcp.pop %v3231
    %v3314 = vrcp.pop %v3234
    %v3315 = vrcp.pop %v3237
    %v3316 = vrcp.pop %v3240
    %v3317 = vrcp.pop %v3243
    %v3318 = vrcp.pop %v3246
    %v3319 = vrcp.pop %v3249
    %v3320 = vrcp.pop %v3252
    %v3321 = vrcp.pop %v3255
    %v3322 = vrcp.pop %v3258
    %v3323 = vrcp.pop %v3261
    %v3324 = vrcp.pop %v3264
    %v3325 = vrcp.pop %v3267
    %v3326 = vrcp.pop %v3270
    %v3327 = vrcp.pop %v3273
    %v3328 = vrcp.pop %v3276
    %v3329 = vrcp.pop %v3279
    %v3330 = vrcp.pop %v3282
    %v3331 = vrcp.pop %v3285
    %v3332 = vrcp.pop %v3288
    %v3333 = vrcp.pop %v3291
    %v3334 = vrcp.pop %v3294
    %v3335 = vrcp.pop %v3297
    %v3336 = vrcp.pop %v3300
    %v3337 = vrcp.pop %v3303
    %v3338 = vrcp.pop %v3306
    %v3339 = vmul.f32 %v3148, %v3307
    %v3340 = vmul.f32 %v3150, %v3308
    %v3341 = vmul.f32 %v3152, %v3309
    %v3342 = vmul.f32 %v3154, %v3310
    %v3343 = vmul.f32 %v3156, %v3311
    %v3344 = vmul.f32 %v3158, %v3312
    %v3345 = vmul.f32 %v3160, %v3313
    %v3346 = vmul.f32 %v3162, %v3314
    %v3347 = vmul.f32 %v3164, %v3315
    %v3348 = vmul.f32 %v3166, %v3316
    %v3349 = vmul.f32 %v3168, %v3317
    %v3350 = vmul.f32 %v3170, %v3318
    %v3351 = vmul.f32 %v3172, %v3319
    %v3352 = vmul.f32 %v3174, %v3320
    %v3353 = vmul.f32 %v3176, %v3321
    %v3354 = vmul.f32 %v3178, %v3322
    %v3355 = vmul.f32 %v3180, %v3323
    %v3356 = vmul.f32 %v3182, %v3324
    %v3357 = vmul.f32 %v3184, %v3325
    %v3358 = vmul.f32 %v3186, %v3326
    %v3359 = vmul.f32 %v3188, %v3327
    %v3360 = vmul.f32 %v3190, %v3328
    %v3361 = vmul.f32 %v3192, %v3329
    %v3362 = vmul.f32 %v3194, %v3330
    %v3363 = vmul.f32 %v3196, %v3331
    %v3364 = vmul.f32 %v3198, %v3332
    %v3365 = vmul.f32 %v3200, %v3333
    %v3366 = vmul.f32 %v3202, %v3334
    %v3367 = vmul.f32 %v3204, %v3335
    %v3368 = vmul.f32 %v3206, %v3336
    %v3369 = vmul.f32 %v3208, %v3337
    %v3370 = vmul.f32 %v3210, %v3338
    %3371 = vrot.lane.b32.xlu0 %v2715, 64
    %v3372 = vpop.permute.xlu0 %3371
    %3373 = vrot.lane.b32.xlu0 %v2718, 64
    %v3374 = vpop.permute.xlu0 %3373
    %3375 = vrot.lane.b32.xlu0 %v2721, 64
    %v3376 = vpop.permute.xlu0 %3375
    %3377 = vrot.lane.b32.xlu0 %v2724, 64
    %v3378 = vpop.permute.xlu0 %3377
    %3379 = vrot.lane.b32.xlu0 %v2727, 64
    %v3380 = vpop.permute.xlu0 %3379
    %3381 = vrot.lane.b32.xlu0 %v2730, 64
    %v3382 = vpop.permute.xlu0 %3381
    %3383 = vrot.lane.b32.xlu0 %v2733, 64
    %v3384 = vpop.permute.xlu0 %3383
    %3385 = vrot.lane.b32.xlu0 %v2736, 64
    %v3386 = vpop.permute.xlu0 %3385
    %v3396 = vsel %vm1057, %v3339, 0
    %v3399 = vsel %vm1057, %v3340, 0
    %v3402 = vsel %vm1057, %v3341, 0
    %v3405 = vsel %vm1057, %v3342, 0
    %v3408 = vsel %vm1057, %v3343, 0
    %v3411 = vsel %vm1057, %v3344, 0
    %v3414 = vsel %vm1057, %v3345, 0
    %v3417 = vsel %vm1057, %v3346, 0
    %v3420 = vsel %vm1057, %v3347, 0
    %v3423 = vsel %vm1057, %v3348, 0
    %v3426 = vsel %vm1057, %v3349, 0
    %v3429 = vsel %vm1057, %v3350, 0
    %v3432 = vsel %vm1057, %v3351, 0
    %v3435 = vsel %vm1057, %v3352, 0
    %v3438 = vsel %vm1057, %v3353, 0
    %v3441 = vsel %vm1057, %v3354, 0
    %v3444 = vsel %vm1057, %v3355, 0
    %v3447 = vsel %vm1057, %v3356, 0
    %v3450 = vsel %vm1057, %v3357, 0
    %v3453 = vsel %vm1057, %v3358, 0
    %v3456 = vsel %vm1057, %v3359, 0
    %v3459 = vsel %vm1057, %v3360, 0
    %v3462 = vsel %vm1057, %v3361, 0
    %v3465 = vsel %vm1057, %v3362, 0
    %v3468 = vsel %vm1057, %v3363, 0
    %v3471 = vsel %vm1057, %v3364, 0
    %v3474 = vsel %vm1057, %v3365, 0
    %v3477 = vsel %vm1057, %v3366, 0
    %v3480 = vsel %vm1057, %v3367, 0
    %v3483 = vsel %vm1057, %v3368, 0
    %v3486 = vsel %vm1057, %v3369, 0
    %v3489 = vsel %vm1057, %v3370, 0
    %3491 = vmatpush.msra.mxu0 0.0
    %3492 = vmatpush.msra.mxu0 0.0
    %3493 = vmatpush.msra.mxu0 0.0
    %3494 = vmatpush.msra.mxu0 0.0
    %3495 = vmatpush.msra.mxu0 0.0
    %3496 = vmatpush.msra.mxu0 0.0
    %3497 = vmatpush.msra.mxu0 0.0
    %3498 = vmatpush.msra.mxu0 0.0
    %3499 = vmatpush.msra.mxu0 %v3386
    %3500 = vmatpush.msra.mxu0 %v3384
    %3501 = vmatpush.msra.mxu0 %v3382
    %3502 = vmatpush.msra.mxu0 %v3380
    %3503 = vmatpush.msra.mxu0 %v3378
    %3504 = vmatpush.msra.mxu0 %v3376
    %3505 = vmatpush.msra.mxu0 %v3374
    %3506 = vmatpush.msra.mxu0 %v3372
    %3507 = vmatmul.f32.gmra.mxu0 %v3396
    %v3508 = vpop.f32.mrf.mxu0
    %v3509 = vadd.f32 0.0, %v3508
    %3510 = vmatmul.f32.gmra.mxu0 %v3399
    %v3511 = vpop.f32.mrf.mxu0
    %v3512 = vadd.f32 0.0, %v3511
    %3513 = vmatmul.f32.gmra.mxu0 %v3402
    %v3514 = vpop.f32.mrf.mxu0
    %v3515 = vadd.f32 0.0, %v3514
    %3516 = vmatmul.f32.gmra.mxu0 %v3405
    %v3517 = vpop.f32.mrf.mxu0
    %v3518 = vadd.f32 0.0, %v3517
    %3519 = vmatmul.f32.gmra.mxu0 %v3408
    %v3520 = vpop.f32.mrf.mxu0
    %v3521 = vadd.f32 0.0, %v3520
    %3522 = vmatmul.f32.gmra.mxu0 %v3411
    %v3523 = vpop.f32.mrf.mxu0
    %v3524 = vadd.f32 0.0, %v3523
    %3525 = vmatmul.f32.gmra.mxu0 %v3414
    %v3526 = vpop.f32.mrf.mxu0
    %v3527 = vadd.f32 0.0, %v3526
    %3528 = vmatmul.f32.gmra.mxu0 %v3417
    %v3529 = vpop.f32.mrf.mxu0
    %v3530 = vadd.f32 0.0, %v3529
    %3531 = vmatmul.f32.gmra.mxu0 %v3420
    %v3532 = vpop.f32.mrf.mxu0
    %v3533 = vadd.f32 0.0, %v3532
    %3534 = vmatmul.f32.gmra.mxu0 %v3423
    %v3535 = vpop.f32.mrf.mxu0
    %v3536 = vadd.f32 0.0, %v3535
    %3537 = vmatmul.f32.gmra.mxu0 %v3426
    %v3538 = vpop.f32.mrf.mxu0
    %v3539 = vadd.f32 0.0, %v3538
    %3540 = vmatmul.f32.gmra.mxu0 %v3429
    %v3541 = vpop.f32.mrf.mxu0
    %v3542 = vadd.f32 0.0, %v3541
    %3543 = vmatmul.f32.gmra.mxu0 %v3432
    %v3544 = vpop.f32.mrf.mxu0
    %v3545 = vadd.f32 0.0, %v3544
    %3546 = vmatmul.f32.gmra.mxu0 %v3435
    %v3547 = vpop.f32.mrf.mxu0
    %v3548 = vadd.f32 0.0, %v3547
    %3549 = vmatmul.f32.gmra.mxu0 %v3438
    %v3550 = vpop.f32.mrf.mxu0
    %v3551 = vadd.f32 0.0, %v3550
    %3552 = vmatmul.f32.gmra.mxu0 %v3441
    %v3553 = vpop.f32.mrf.mxu0
    %v3554 = vadd.f32 0.0, %v3553
    %3555 = vmatmul.f32.gmra.mxu0 %v3444
    %v3556 = vpop.f32.mrf.mxu0
    %v3557 = vadd.f32 0.0, %v3556
    %3558 = vmatmul.f32.gmra.mxu0 %v3447
    %v3559 = vpop.f32.mrf.mxu0
    %v3560 = vadd.f32 0.0, %v3559
    %3561 = vmatmul.f32.gmra.mxu0 %v3450
    %v3562 = vpop.f32.mrf.mxu0
    %v3563 = vadd.f32 0.0, %v3562
    %3564 = vmatmul.f32.gmra.mxu0 %v3453
    %v3565 = vpop.f32.mrf.mxu0
    %v3566 = vadd.f32 0.0, %v3565
    %3567 = vmatmul.f32.gmra.mxu0 %v3456
    %v3568 = vpop.f32.mrf.mxu0
    %v3569 = vadd.f32 0.0, %v3568
    %3570 = vmatmul.f32.gmra.mxu0 %v3459
    %v3571 = vpop.f32.mrf.mxu0
    %v3572 = vadd.f32 0.0, %v3571
    %3573 = vmatmul.f32.gmra.mxu0 %v3462
    %v3574 = vpop.f32.mrf.mxu0
    %v3575 = vadd.f32 0.0, %v3574
    %3576 = vmatmul.f32.gmra.mxu0 %v3465
    %v3577 = vpop.f32.mrf.mxu0
    %v3578 = vadd.f32 0.0, %v3577
    %3579 = vmatmul.f32.gmra.mxu0 %v3468
    %v3580 = vpop.f32.mrf.mxu0
    %v3581 = vadd.f32 0.0, %v3580
    %3582 = vmatmul.f32.gmra.mxu0 %v3471
    %v3583 = vpop.f32.mrf.mxu0
    %v3584 = vadd.f32 0.0, %v3583
    %3585 = vmatmul.f32.gmra.mxu0 %v3474
    %v3586 = vpop.f32.mrf.mxu0
    %v3587 = vadd.f32 0.0, %v3586
    %3588 = vmatmul.f32.gmra.mxu0 %v3477
    %v3589 = vpop.f32.mrf.mxu0
    %v3590 = vadd.f32 0.0, %v3589
    %3591 = vmatmul.f32.gmra.mxu0 %v3480
    %v3592 = vpop.f32.mrf.mxu0
    %v3593 = vadd.f32 0.0, %v3592
    %3594 = vmatmul.f32.gmra.mxu0 %v3483
    %v3595 = vpop.f32.mrf.mxu0
    %v3596 = vadd.f32 0.0, %v3595
    %3597 = vmatmul.f32.gmra.mxu0 %v3486
    %v3598 = vpop.f32.mrf.mxu0
    %v3599 = vadd.f32 0.0, %v3598
    %3600 = vmatmul.f32.gmra.mxu0 %v3489
    %v3601 = vpop.f32.mrf.mxu0
    %v3602 = vadd.f32 0.0, %v3601
    %3603 = vdwg.mxu0
    %v3604 = vmul.f32 %v3509, %v485
    %v3605 = vmul.f32 %v3512, %v485
    %v3606 = vmul.f32 %v3515, %v485
    %v3607 = vmul.f32 %v3518, %v485
    %v3608 = vmul.f32 %v3521, %v485
    %v3609 = vmul.f32 %v3524, %v485
    %v3610 = vmul.f32 %v3527, %v485
    %v3611 = vmul.f32 %v3530, %v485
    %v3612 = vmul.f32 %v3533, %v489
    %v3613 = vmul.f32 %v3536, %v489
    %v3614 = vmul.f32 %v3539, %v489
    %v3615 = vmul.f32 %v3542, %v489
    %v3616 = vmul.f32 %v3545, %v489
    %v3617 = vmul.f32 %v3548, %v489
    %v3618 = vmul.f32 %v3551, %v489
    %v3619 = vmul.f32 %v3554, %v489
    %v3620 = vadd.f32 %v3604, %v3612
    %v3621 = vadd.f32 %v3605, %v3613
    %v3622 = vadd.f32 %v3606, %v3614
    %v3623 = vadd.f32 %v3607, %v3615
    %v3624 = vadd.f32 %v3608, %v3616
    %v3625 = vadd.f32 %v3609, %v3617
    %v3626 = vadd.f32 %v3610, %v3618
    %v3627 = vadd.f32 %v3611, %v3619
    %v3628 = vmul.f32 %v3557, %v493
    %v3629 = vmul.f32 %v3560, %v493
    %v3630 = vmul.f32 %v3563, %v493
    %v3631 = vmul.f32 %v3566, %v493
    %v3632 = vmul.f32 %v3569, %v493
    %v3633 = vmul.f32 %v3572, %v493
    %v3634 = vmul.f32 %v3575, %v493
    %v3635 = vmul.f32 %v3578, %v493
    %v3636 = vadd.f32 %v3620, %v3628
    %v3637 = vadd.f32 %v3621, %v3629
    %v3638 = vadd.f32 %v3622, %v3630
    %v3639 = vadd.f32 %v3623, %v3631
    %v3640 = vadd.f32 %v3624, %v3632
    %v3641 = vadd.f32 %v3625, %v3633
    %v3642 = vadd.f32 %v3626, %v3634
    %v3643 = vadd.f32 %v3627, %v3635
    %v3644 = vmul.f32 %v3581, %v497
    %v3645 = vmul.f32 %v3584, %v497
    %v3646 = vmul.f32 %v3587, %v497
    %v3647 = vmul.f32 %v3590, %v497
    %v3648 = vmul.f32 %v3593, %v497
    %v3649 = vmul.f32 %v3596, %v497
    %v3650 = vmul.f32 %v3599, %v497
    %v3651 = vmul.f32 %v3602, %v497
    %v3652 = vadd.f32 %v3636, %v3644
    %v3653 = vadd.f32 %v3637, %v3645
    %v3654 = vadd.f32 %v3638, %v3646
    %v3655 = vadd.f32 %v3639, %v3647
    %v3656 = vadd.f32 %v3640, %v3648
    %v3657 = vadd.f32 %v3641, %v3649
    %v3658 = vadd.f32 %v3642, %v3650
    %v3659 = vadd.f32 %v3643, %v3651
    %v3660 = vld [vmem:[%s1 + $0x5a0] sm:$0xff]
    %v3661 = vld [vmem:[%s1 + $0x5b0] sm:$0xff]
    %v3662 = vld [vmem:[%s1 + $0x5c0] sm:$0xff]
    %v3663 = vld [vmem:[%s1 + $0x5d0] sm:$0xff]
    %v3664 = vld [vmem:[%s1 + $0x775] ss:$0 sm:$0xff]
    %v3666 = vsel %vm507, %v3652, 0
    %v3669 = vsel %vm507, %v3653, 0
    %v3672 = vsel %vm507, %v3654, 0
    %v3675 = vsel %vm507, %v3655, 0
    %v3678 = vsel %vm507, %v3656, 0
    %v3681 = vsel %vm507, %v3657, 0
    %v3684 = vsel %vm507, %v3658, 0
    %v3687 = vsel %vm507, %v3659, 0
    %3689 = vmatpush.msra.mxu0 0.0
    %3690 = vmatpush.msra.mxu0 0.0
    %3691 = vmatpush.msra.mxu0 0.0
    %3692 = vmatpush.msra.mxu0 0.0
    %3693 = vmatpush.msra.mxu0 0.0
    %3694 = vmatpush.msra.mxu0 0.0
    %3695 = vmatpush.msra.mxu0 0.0
    %3696 = vmatpush.msra.mxu0 0.0
    %3697 = vmatpush.msra.mxu0 0.0
    %3698 = vmatpush.msra.mxu0 0.0
    %3699 = vmatpush.msra.mxu0 0.0
    %3700 = vmatpush.msra.mxu0 0.0
    %3701 = vmatpush.msra.mxu0 %v3663
    %3702 = vmatpush.msra.mxu0 %v3662
    %3703 = vmatpush.msra.mxu0 %v3661
    %3704 = vmatpush.msra.mxu0 %v3660
    %3705 = vmatmul.f32.gmra.mxu0 %v3666
    %v3706 = vpop.f32.mrf.mxu0
    %v3707 = vadd.f32 %v3664, %v3706
    %3708 = vmatmul.f32.gmra.mxu0 %v3669
    %v3709 = vpop.f32.mrf.mxu0
    %v3710 = vadd.f32 %v3664, %v3709
    %3711 = vmatmul.f32.gmra.mxu0 %v3672
    %v3712 = vpop.f32.mrf.mxu0
    %v3713 = vadd.f32 %v3664, %v3712
    %3714 = vmatmul.f32.gmra.mxu0 %v3675
    %v3715 = vpop.f32.mrf.mxu0
    %v3716 = vadd.f32 %v3664, %v3715
    %3717 = vmatmul.f32.gmra.mxu0 %v3678
    %v3718 = vpop.f32.mrf.mxu0
    %v3719 = vadd.f32 %v3664, %v3718
    %3720 = vmatmul.f32.gmra.mxu0 %v3681
    %v3721 = vpop.f32.mrf.mxu0
    %v3722 = vadd.f32 %v3664, %v3721
    %3723 = vmatmul.f32.gmra.mxu0 %v3684
    %v3724 = vpop.f32.mrf.mxu0
    %v3725 = vadd.f32 %v3664, %v3724
    %3726 = vmatmul.f32.gmra.mxu0 %v3687
    %v3727 = vpop.f32.mrf.mxu0
    %v3728 = vadd.f32 %v3664, %v3727
    %3729 = vdwg.mxu0
    %v3730 = vadd.f32 %v2467, %v3707
    %v3731 = vadd.f32 %v2468, %v3710
    %v3732 = vadd.f32 %v2469, %v3713
    %v3733 = vadd.f32 %v2470, %v3716
    %v3734 = vadd.f32 %v2471, %v3719
    %v3735 = vadd.f32 %v2472, %v3722
    %v3736 = vadd.f32 %v2473, %v3725
    %v3737 = vadd.f32 %v2474, %v3728
    %v3738 = vld [vmem:[%s1 + $0x776] ss:$0 sm:$0xff]
    %v3739 = vld [vmem:[%s1 + $0x777] ss:$0 sm:$0xff]
    %v3740 = vsel %vm507, %v3730, 0.0
    %3741 = vadd.xlane.f32.xlu0 %v3740
    %v3742 = vpop.xlane.xlu0 %3741
    %v3743 = vsel %vm507, %v3731, 0.0
    %3744 = vadd.xlane.f32.xlu0 %v3743
    %v3745 = vpop.xlane.xlu0 %3744
    %v3746 = vsel %vm507, %v3732, 0.0
    %3747 = vadd.xlane.f32.xlu0 %v3746
    %v3748 = vpop.xlane.xlu0 %3747
    %v3749 = vsel %vm507, %v3733, 0.0
    %3750 = vadd.xlane.f32.xlu0 %v3749
    %v3751 = vpop.xlane.xlu0 %3750
    %v3752 = vsel %vm507, %v3734, 0.0
    %3753 = vadd.xlane.f32.xlu0 %v3752
    %v3754 = vpop.xlane.xlu0 %3753
    %v3755 = vsel %vm507, %v3735, 0.0
    %3756 = vadd.xlane.f32.xlu0 %v3755
    %v3757 = vpop.xlane.xlu0 %3756
    %v3758 = vsel %vm507, %v3736, 0.0
    %3759 = vadd.xlane.f32.xlu0 %v3758
    %v3760 = vpop.xlane.xlu0 %3759
    %v3761 = vsel %vm507, %v3737, 0.0
    %3762 = vadd.xlane.f32.xlu0 %v3761
    %v3763 = vpop.xlane.xlu0 %3762
    %v3764 = vmul.f32 %v3742, %v538
    %v3765 = vmul.f32 %v3745, %v538
    %v3766 = vmul.f32 %v3748, %v538
    %v3767 = vmul.f32 %v3751, %v538
    %v3768 = vmul.f32 %v3754, %v538
    %v3769 = vmul.f32 %v3757, %v538
    %v3770 = vmul.f32 %v3760, %v538
    %v3771 = vmul.f32 %v3763, %v538
    %v3772 = vsub.f32 %v3730, %v3764
    %v3773 = vsub.f32 %v3731, %v3765
    %v3774 = vsub.f32 %v3732, %v3766
    %v3775 = vsub.f32 %v3733, %v3767
    %v3776 = vsub.f32 %v3734, %v3768
    %v3777 = vsub.f32 %v3735, %v3769
    %v3778 = vsub.f32 %v3736, %v3770
    %v3779 = vsub.f32 %v3737, %v3771
    %v3780 = vmul.f32 %v3772, %v3772
    %v3781 = vmul.f32 %v3773, %v3773
    %v3782 = vmul.f32 %v3774, %v3774
    %v3783 = vmul.f32 %v3775, %v3775
    %v3784 = vmul.f32 %v3776, %v3776
    %v3785 = vmul.f32 %v3777, %v3777
    %v3786 = vmul.f32 %v3778, %v3778
    %v3787 = vmul.f32 %v3779, %v3779
    %v3788 = vsel %vm507, %v3780, 0.0
    %3789 = vadd.xlane.f32.xlu0 %v3788
    %v3790 = vpop.xlane.xlu0 %3789
    %v3791 = vsel %vm507, %v3781, 0.0
    %3792 = vadd.xlane.f32.xlu0 %v3791
    %v3793 = vpop.xlane.xlu0 %3792
    %v3794 = vsel %vm507, %v3782, 0.0
    %3795 = vadd.xlane.f32.xlu0 %v3794
    %v3796 = vpop.xlane.xlu0 %3795
    %v3797 = vsel %vm507, %v3783, 0.0
    %3798 = vadd.xlane.f32.xlu0 %v3797
    %v3799 = vpop.xlane.xlu0 %3798
    %v3800 = vsel %vm507, %v3784, 0.0
    %3801 = vadd.xlane.f32.xlu0 %v3800
    %v3802 = vpop.xlane.xlu0 %3801
    %v3803 = vsel %vm507, %v3785, 0.0
    %3804 = vadd.xlane.f32.xlu0 %v3803
    %v3805 = vpop.xlane.xlu0 %3804
    %v3806 = vsel %vm507, %v3786, 0.0
    %3807 = vadd.xlane.f32.xlu0 %v3806
    %v3808 = vpop.xlane.xlu0 %3807
    %v3809 = vsel %vm507, %v3787, 0.0
    %3810 = vadd.xlane.f32.xlu0 %v3809
    %v3811 = vpop.xlane.xlu0 %3810
    %v3812 = vmul.f32 %v3790, %v538
    %v3813 = vmul.f32 %v3793, %v538
    %v3814 = vmul.f32 %v3796, %v538
    %v3815 = vmul.f32 %v3799, %v538
    %v3816 = vmul.f32 %v3802, %v538
    %v3817 = vmul.f32 %v3805, %v538
    %v3818 = vmul.f32 %v3808, %v538
    %v3819 = vmul.f32 %v3811, %v538
    %v3820 = vadd.f32 %v3812, 1e-05
    %v3821 = vadd.f32 %v3813, 1e-05
    %v3822 = vadd.f32 %v3814, 1e-05
    %v3823 = vadd.f32 %v3815, 1e-05
    %v3824 = vadd.f32 %v3816, 1e-05
    %v3825 = vadd.f32 %v3817, 1e-05
    %v3826 = vadd.f32 %v3818, 1e-05
    %v3827 = vadd.f32 %v3819, 1e-05
    %v3828 = vrsqrt.pop %v3820
    %v3829 = vmul.f32 %v3828, %v3820
    %v3830 = vmul.f32 %v3829, %v3828
    %v3831 = vmul.f32 0.5, %v3830
    %v3832 = vsub.f32 1.5, %v3831
    %v3833 = vmul.f32 %v3828, %v3832
    %vm3834 = vweird.f32 %v3820
    %vm3835 = vweird.f32 %v3828
    %vm3836 = vmor %vm3834, %vm3835
    %v3837 = vsel %vm3836, %v3828, %v3833
    %v3838 = vrsqrt.pop %v3821
    %v3839 = vmul.f32 %v3838, %v3821
    %v3840 = vmul.f32 %v3839, %v3838
    %v3841 = vmul.f32 0.5, %v3840
    %v3842 = vsub.f32 1.5, %v3841
    %v3843 = vmul.f32 %v3838, %v3842
    %vm3844 = vweird.f32 %v3821
    %vm3845 = vweird.f32 %v3838
    %vm3846 = vmor %vm3844, %vm3845
    %v3847 = vsel %vm3846, %v3838, %v3843
    %v3848 = vrsqrt.pop %v3822
    %v3849 = vmul.f32 %v3848, %v3822
    %v3850 = vmul.f32 %v3849, %v3848
    %v3851 = vmul.f32 0.5, %v3850
    %v3852 = vsub.f32 1.5, %v3851
    %v3853 = vmul.f32 %v3848, %v3852
    %vm3854 = vweird.f32 %v3822
    %vm3855 = vweird.f32 %v3848
    %vm3856 = vmor %vm3854, %vm3855
    %v3857 = vsel %vm3856, %v3848, %v3853
    %v3858 = vrsqrt.pop %v3823
    %v3859 = vmul.f32 %v3858, %v3823
    %v3860 = vmul.f32 %v3859, %v3858
    %v3861 = vmul.f32 0.5, %v3860
    %v3862 = vsub.f32 1.5, %v3861
    %v3863 = vmul.f32 %v3858, %v3862
    %vm3864 = vweird.f32 %v3823
    %vm3865 = vweird.f32 %v3858
    %vm3866 = vmor %vm3864, %vm3865
    %v3867 = vsel %vm3866, %v3858, %v3863
    %v3868 = vrsqrt.pop %v3824
    %v3869 = vmul.f32 %v3868, %v3824
    %v3870 = vmul.f32 %v3869, %v3868
    %v3871 = vmul.f32 0.5, %v3870
    %v3872 = vsub.f32 1.5, %v3871
    %v3873 = vmul.f32 %v3868, %v3872
    %vm3874 = vweird.f32 %v3824
    %vm3875 = vweird.f32 %v3868
    %vm3876 = vmor %vm3874, %vm3875
    %v3877 = vsel %vm3876, %v3868, %v3873
    %v3878 = vrsqrt.pop %v3825
    %v3879 = vmul.f32 %v3878, %v3825
    %v3880 = vmul.f32 %v3879, %v3878
    %v3881 = vmul.f32 0.5, %v3880
    %v3882 = vsub.f32 1.5, %v3881
    %v3883 = vmul.f32 %v3878, %v3882
    %vm3884 = vweird.f32 %v3825
    %vm3885 = vweird.f32 %v3878
    %vm3886 = vmor %vm3884, %vm3885
    %v3887 = vsel %vm3886, %v3878, %v3883
    %v3888 = vrsqrt.pop %v3826
    %v3889 = vmul.f32 %v3888, %v3826
    %v3890 = vmul.f32 %v3889, %v3888
    %v3891 = vmul.f32 0.5, %v3890
    %v3892 = vsub.f32 1.5, %v3891
    %v3893 = vmul.f32 %v3888, %v3892
    %vm3894 = vweird.f32 %v3826
    %vm3895 = vweird.f32 %v3888
    %vm3896 = vmor %vm3894, %vm3895
    %v3897 = vsel %vm3896, %v3888, %v3893
    %v3898 = vrsqrt.pop %v3827
    %v3899 = vmul.f32 %v3898, %v3827
    %v3900 = vmul.f32 %v3899, %v3898
    %v3901 = vmul.f32 0.5, %v3900
    %v3902 = vsub.f32 1.5, %v3901
    %v3903 = vmul.f32 %v3898, %v3902
    %vm3904 = vweird.f32 %v3827
    %vm3905 = vweird.f32 %v3898
    %vm3906 = vmor %vm3904, %vm3905
    %v3907 = vsel %vm3906, %v3898, %v3903
    %v3908 = vmul.f32 %v3772, %v3837
    %v3909 = vmul.f32 %v3773, %v3847
    %v3910 = vmul.f32 %v3774, %v3857
    %v3911 = vmul.f32 %v3775, %v3867
    %v3912 = vmul.f32 %v3776, %v3877
    %v3913 = vmul.f32 %v3777, %v3887
    %v3914 = vmul.f32 %v3778, %v3897
    %v3915 = vmul.f32 %v3779, %v3907
    %v3916 = vmul.f32 %v3908, %v3738
    %v3917 = vmul.f32 %v3909, %v3738
    %v3918 = vmul.f32 %v3910, %v3738
    %v3919 = vmul.f32 %v3911, %v3738
    %v3920 = vmul.f32 %v3912, %v3738
    %v3921 = vmul.f32 %v3913, %v3738
    %v3922 = vmul.f32 %v3914, %v3738
    %v3923 = vmul.f32 %v3915, %v3738
    %v3924 = vadd.f32 %v3916, %v3739
    %v3925 = vadd.f32 %v3917, %v3739
    %v3926 = vadd.f32 %v3918, %v3739
    %v3927 = vadd.f32 %v3919, %v3739
    %v3928 = vadd.f32 %v3920, %v3739
    %v3929 = vadd.f32 %v3921, %v3739
    %v3930 = vadd.f32 %v3922, %v3739
    %v3931 = vadd.f32 %v3923, %v3739
    %v3932 = vld [vmem:[%s1 + $0x5e0] sm:$0xff]
    %v3933 = vld [vmem:[%s1 + $0x5f0] sm:$0xff]
    %v3934 = vld [vmem:[%s1 + $0x600] sm:$0xff]
    %v3935 = vld [vmem:[%s1 + $0x610] sm:$0xff]
    %v3936 = vld [vmem:[%s1 + $0x780] ss:$0 sm:$0xff]
    %v3938 = vsel %vm507, %v3924, 0
    %v3941 = vsel %vm507, %v3925, 0
    %v3944 = vsel %vm507, %v3926, 0
    %v3947 = vsel %vm507, %v3927, 0
    %v3950 = vsel %vm507, %v3928, 0
    %v3953 = vsel %vm507, %v3929, 0
    %v3956 = vsel %vm507, %v3930, 0
    %v3959 = vsel %vm507, %v3931, 0
    %3961 = vmatpush.msra.mxu0 0.0
    %3962 = vmatpush.msra.mxu0 0.0
    %3963 = vmatpush.msra.mxu0 0.0
    %3964 = vmatpush.msra.mxu0 0.0
    %3965 = vmatpush.msra.mxu0 0.0
    %3966 = vmatpush.msra.mxu0 0.0
    %3967 = vmatpush.msra.mxu0 0.0
    %3968 = vmatpush.msra.mxu0 0.0
    %3969 = vmatpush.msra.mxu0 0.0
    %3970 = vmatpush.msra.mxu0 0.0
    %3971 = vmatpush.msra.mxu0 0.0
    %3972 = vmatpush.msra.mxu0 0.0
    %3973 = vmatpush.msra.mxu0 %v3935
    %3974 = vmatpush.msra.mxu0 %v3934
    %3975 = vmatpush.msra.mxu0 %v3933
    %3976 = vmatpush.msra.mxu0 %v3932
    %3977 = vmatmul.f32.gmra.mxu0 %v3938
    %v3978 = vpop.f32.mrf.mxu0
    %v3979 = vadd.f32 %v3936, %v3978
    %3980 = vmatmul.f32.gmra.mxu0 %v3941
    %v3981 = vpop.f32.mrf.mxu0
    %v3982 = vadd.f32 %v3936, %v3981
    %3983 = vmatmul.f32.gmra.mxu0 %v3944
    %v3984 = vpop.f32.mrf.mxu0
    %v3985 = vadd.f32 %v3936, %v3984
    %3986 = vmatmul.f32.gmra.mxu0 %v3947
    %v3987 = vpop.f32.mrf.mxu0
    %v3988 = vadd.f32 %v3936, %v3987
    %3989 = vmatmul.f32.gmra.mxu0 %v3950
    %v3990 = vpop.f32.mrf.mxu0
    %v3991 = vadd.f32 %v3936, %v3990
    %3992 = vmatmul.f32.gmra.mxu0 %v3953
    %v3993 = vpop.f32.mrf.mxu0
    %v3994 = vadd.f32 %v3936, %v3993
    %3995 = vmatmul.f32.gmra.mxu0 %v3956
    %v3996 = vpop.f32.mrf.mxu0
    %v3997 = vadd.f32 %v3936, %v3996
    %3998 = vmatmul.f32.gmra.mxu0 %v3959
    %v3999 = vpop.f32.mrf.mxu0
    %v4000 = vadd.f32 %v3936, %v3999
    %4001 = vdwg.mxu0
    %v4002 = vmul.f32 %v3979, 0.5
    %v4003 = vmul.f32 %v3982, 0.5
    %v4004 = vmul.f32 %v3985, 0.5
    %v4005 = vmul.f32 %v3988, 0.5
    %v4006 = vmul.f32 %v3991, 0.5
    %v4007 = vmul.f32 %v3994, 0.5
    %v4008 = vmul.f32 %v3997, 0.5
    %v4009 = vmul.f32 %v4000, 0.5
    %v4010 = vmul.f32 %v3979, 0.70710677
    %v4011 = vmul.f32 %v3982, 0.70710677
    %v4012 = vmul.f32 %v3985, 0.70710677
    %v4013 = vmul.f32 %v3988, 0.70710677
    %v4014 = vmul.f32 %v3991, 0.70710677
    %v4015 = vmul.f32 %v3994, 0.70710677
    %v4016 = vmul.f32 %v3997, 0.70710677
    %v4017 = vmul.f32 %v4000, 0.70710677
    %v4018 = vmul.f32 %v4010, %v4010
    %v4019 = vmin.f32 16.0, %v4018
    %v4020 = vmul.f32 %v4019, 2.1237322e-06
    %v4021 = vadd.f32 %v4020, 0.00028619796
    %v4022 = vmul.f32 %v4019, %v4021
    %v4023 = vadd.f32 %v4022, 0.0036580483
    %v4024 = vmul.f32 %v4019, %v4023
    %v4025 = vadd.f32 %v4024, 0.05243302
    %v4026 = vmul.f32 %v4019, %v4025
    %v4027 = vadd.f32 %v4026, 0.18741608
    %v4028 = vmul.f32 %v4019, %v4027
    %v4029 = vadd.f32 %v4028, 1.1283791
    %v4030 = vmul.f32 %v4010, %v4029
    %v4031 = vmul.f32 %v4019, 3.8918573e-05
    %v4032 = vadd.f32 %v4031, 0.001143296
    %v4033 = vmul.f32 %v4019, %v4032
    %v4034 = vadd.f32 %v4033, 0.014752088
    %v4035 = vmul.f32 %v4019, %v4034
    %v4036 = vadd.f32 %v4035, 0.112945676
    %v4037 = vmul.f32 %v4019, %v4036
    %v4038 = vadd.f32 %v4037, 0.4994258
    %v4039 = vmul.f32 %v4019, %v4038
    %v4040 = vadd.f32 %v4039, 1.0
    %v4041 = vrcp.pop %v4040
    %v4042 = vmul.f32 %v4040, %v4041
    %v4043 = vsub.f32 1.0, %v4042
    %v4044 = vmul.f32 %v4041, %v4043
    %v4045 = vadd.f32 %v4041, %v4044
    %vm4046 = vweird.f32 %v4040
    %vm4047 = vweird.f32 %v4041
    %vm4048 = vmor %vm4046, %vm4047
    %v4049 = vsel %vm4048, %v4041, %v4045
    %v4050 = vand.u32 2147483647, %v4040
    %vm4051 = vcmp.eq.f32.partialorder %v4050, 8.507059e+37
    %v4052 = vand.u32 %v4040, 2147483648
    %v4053 = vor.u32 1.1754944e-38, %v4052
    %v4054 = vsel %vm4051, %v4053, %v4049
    %v4055 = vmul.f32 %v4030, %v4054
    %v4056 = vmin.f32 %v4055, 1.0
    %v4057 = vmax.f32 %v4056, -1.0
    %v4058 = vmul.f32 %v4011, %v4011
    %v4059 = vmin.f32 16.0, %v4058
    %v4060 = vmul.f32 %v4059, 2.1237322e-06
    %v4061 = vadd.f32 %v4060, 0.00028619796
    %v4062 = vmul.f32 %v4059, %v4061
    %v4063 = vadd.f32 %v4062, 0.0036580483
    %v4064 = vmul.f32 %v4059, %v4063
    %v4065 = vadd.f32 %v4064, 0.05243302
    %v4066 = vmul.f32 %v4059, %v4065
    %v4067 = vadd.f32 %v4066, 0.18741608
    %v4068 = vmul.f32 %v4059, %v4067
    %v4069 = vadd.f32 %v4068, 1.1283791
    %v4070 = vmul.f32 %v4011, %v4069
    %v4071 = vmul.f32 %v4059, 3.8918573e-05
    %v4072 = vadd.f32 %v4071, 0.001143296
    %v4073 = vmul.f32 %v4059, %v4072
    %v4074 = vadd.f32 %v4073, 0.014752088
    %v4075 = vmul.f32 %v4059, %v4074
    %v4076 = vadd.f32 %v4075, 0.112945676
    %v4077 = vmul.f32 %v4059, %v4076
    %v4078 = vadd.f32 %v4077, 0.4994258
    %v4079 = vmul.f32 %v4059, %v4078
    %v4080 = vadd.f32 %v4079, 1.0
    %v4081 = vrcp.pop %v4080
    %v4082 = vmul.f32 %v4080, %v4081
    %v4083 = vsub.f32 1.0, %v4082
    %v4084 = vmul.f32 %v4081, %v4083
    %v4085 = vadd.f32 %v4081, %v4084
    %vm4086 = vweird.f32 %v4080
    %vm4087 = vweird.f32 %v4081
    %vm4088 = vmor %vm4086, %vm4087
    %v4089 = vsel %vm4088, %v4081, %v4085
    %v4090 = vand.u32 2147483647, %v4080
    %vm4091 = vcmp.eq.f32.partialorder %v4090, 8.507059e+37
    %v4092 = vand.u32 %v4080, 2147483648
    %v4093 = vor.u32 1.1754944e-38, %v4092
    %v4094 = vsel %vm4091, %v4093, %v4089
    %v4095 = vmul.f32 %v4070, %v4094
    %v4096 = vmin.f32 %v4095, 1.0
    %v4097 = vmax.f32 %v4096, -1.0
    %v4098 = vmul.f32 %v4012, %v4012
    %v4099 = vmin.f32 16.0, %v4098
    %v4100 = vmul.f32 %v4099, 2.1237322e-06
    %v4101 = vadd.f32 %v4100, 0.00028619796
    %v4102 = vmul.f32 %v4099, %v4101
    %v4103 = vadd.f32 %v4102, 0.0036580483
    %v4104 = vmul.f32 %v4099, %v4103
    %v4105 = vadd.f32 %v4104, 0.05243302
    %v4106 = vmul.f32 %v4099, %v4105
    %v4107 = vadd.f32 %v4106, 0.18741608
    %v4108 = vmul.f32 %v4099, %v4107
    %v4109 = vadd.f32 %v4108, 1.1283791
    %v4110 = vmul.f32 %v4012, %v4109
    %v4111 = vmul.f32 %v4099, 3.8918573e-05
    %v4112 = vadd.f32 %v4111, 0.001143296
    %v4113 = vmul.f32 %v4099, %v4112
    %v4114 = vadd.f32 %v4113, 0.014752088
    %v4115 = vmul.f32 %v4099, %v4114
    %v4116 = vadd.f32 %v4115, 0.112945676
    %v4117 = vmul.f32 %v4099, %v4116
    %v4118 = vadd.f32 %v4117, 0.4994258
    %v4119 = vmul.f32 %v4099, %v4118
    %v4120 = vadd.f32 %v4119, 1.0
    %v4121 = vrcp.pop %v4120
    %v4122 = vmul.f32 %v4120, %v4121
    %v4123 = vsub.f32 1.0, %v4122
    %v4124 = vmul.f32 %v4121, %v4123
    %v4125 = vadd.f32 %v4121, %v4124
    %vm4126 = vweird.f32 %v4120
    %vm4127 = vweird.f32 %v4121
    %vm4128 = vmor %vm4126, %vm4127
    %v4129 = vsel %vm4128, %v4121, %v4125
    %v4130 = vand.u32 2147483647, %v4120
    %vm4131 = vcmp.eq.f32.partialorder %v4130, 8.507059e+37
    %v4132 = vand.u32 %v4120, 2147483648
    %v4133 = vor.u32 1.1754944e-38, %v4132
    %v4134 = vsel %vm4131, %v4133, %v4129
    %v4135 = vmul.f32 %v4110, %v4134
    %v4136 = vmin.f32 %v4135, 1.0
    %v4137 = vmax.f32 %v4136, -1.0
    %v4138 = vmul.f32 %v4013, %v4013
    %v4139 = vmin.f32 16.0, %v4138
    %v4140 = vmul.f32 %v4139, 2.1237322e-06
    %v4141 = vadd.f32 %v4140, 0.00028619796
    %v4142 = vmul.f32 %v4139, %v4141
    %v4143 = vadd.f32 %v4142, 0.0036580483
    %v4144 = vmul.f32 %v4139, %v4143
    %v4145 = vadd.f32 %v4144, 0.05243302
    %v4146 = vmul.f32 %v4139, %v4145
    %v4147 = vadd.f32 %v4146, 0.18741608
    %v4148 = vmul.f32 %v4139, %v4147
    %v4149 = vadd.f32 %v4148, 1.1283791
    %v4150 = vmul.f32 %v4013, %v4149
    %v4151 = vmul.f32 %v4139, 3.8918573e-05
    %v4152 = vadd.f32 %v4151, 0.001143296
    %v4153 = vmul.f32 %v4139, %v4152
    %v4154 = vadd.f32 %v4153, 0.014752088
    %v4155 = vmul.f32 %v4139, %v4154
    %v4156 = vadd.f32 %v4155, 0.112945676
    %v4157 = vmul.f32 %v4139, %v4156
    %v4158 = vadd.f32 %v4157, 0.4994258
    %v4159 = vmul.f32 %v4139, %v4158
    %v4160 = vadd.f32 %v4159, 1.0
    %v4161 = vrcp.pop %v4160
    %v4162 = vmul.f32 %v4160, %v4161
    %v4163 = vsub.f32 1.0, %v4162
    %v4164 = vmul.f32 %v4161, %v4163
    %v4165 = vadd.f32 %v4161, %v4164
    %vm4166 = vweird.f32 %v4160
    %vm4167 = vweird.f32 %v4161
    %vm4168 = vmor %vm4166, %vm4167
    %v4169 = vsel %vm4168, %v4161, %v4165
    %v4170 = vand.u32 2147483647, %v4160
    %vm4171 = vcmp.eq.f32.partialorder %v4170, 8.507059e+37
    %v4172 = vand.u32 %v4160, 2147483648
    %v4173 = vor.u32 1.1754944e-38, %v4172
    %v4174 = vsel %vm4171, %v4173, %v4169
    %v4175 = vmul.f32 %v4150, %v4174
    %v4176 = vmin.f32 %v4175, 1.0
    %v4177 = vmax.f32 %v4176, -1.0
    %v4178 = vmul.f32 %v4014, %v4014
    %v4179 = vmin.f32 16.0, %v4178
    %v4180 = vmul.f32 %v4179, 2.1237322e-06
    %v4181 = vadd.f32 %v4180, 0.00028619796
    %v4182 = vmul.f32 %v4179, %v4181
    %v4183 = vadd.f32 %v4182, 0.0036580483
    %v4184 = vmul.f32 %v4179, %v4183
    %v4185 = vadd.f32 %v4184, 0.05243302
    %v4186 = vmul.f32 %v4179, %v4185
    %v4187 = vadd.f32 %v4186, 0.18741608
    %v4188 = vmul.f32 %v4179, %v4187
    %v4189 = vadd.f32 %v4188, 1.1283791
    %v4190 = vmul.f32 %v4014, %v4189
    %v4191 = vmul.f32 %v4179, 3.8918573e-05
    %v4192 = vadd.f32 %v4191, 0.001143296
    %v4193 = vmul.f32 %v4179, %v4192
    %v4194 = vadd.f32 %v4193, 0.014752088
    %v4195 = vmul.f32 %v4179, %v4194
    %v4196 = vadd.f32 %v4195, 0.112945676
    %v4197 = vmul.f32 %v4179, %v4196
    %v4198 = vadd.f32 %v4197, 0.4994258
    %v4199 = vmul.f32 %v4179, %v4198
    %v4200 = vadd.f32 %v4199, 1.0
    %v4201 = vrcp.pop %v4200
    %v4202 = vmul.f32 %v4200, %v4201
    %v4203 = vsub.f32 1.0, %v4202
    %v4204 = vmul.f32 %v4201, %v4203
    %v4205 = vadd.f32 %v4201, %v4204
    %vm4206 = vweird.f32 %v4200
    %vm4207 = vweird.f32 %v4201
    %vm4208 = vmor %vm4206, %vm4207
    %v4209 = vsel %vm4208, %v4201, %v4205
    %v4210 = vand.u32 2147483647, %v4200
    %vm4211 = vcmp.eq.f32.partialorder %v4210, 8.507059e+37
    %v4212 = vand.u32 %v4200, 2147483648
    %v4213 = vor.u32 1.1754944e-38, %v4212
    %v4214 = vsel %vm4211, %v4213, %v4209
    %v4215 = vmul.f32 %v4190, %v4214
    %v4216 = vmin.f32 %v4215, 1.0
    %v4217 = vmax.f32 %v4216, -1.0
    %v4218 = vmul.f32 %v4015, %v4015
    %v4219 = vmin.f32 16.0, %v4218
    %v4220 = vmul.f32 %v4219, 2.1237322e-06
    %v4221 = vadd.f32 %v4220, 0.00028619796
    %v4222 = vmul.f32 %v4219, %v4221
    %v4223 = vadd.f32 %v4222, 0.0036580483
    %v4224 = vmul.f32 %v4219, %v4223
    %v4225 = vadd.f32 %v4224, 0.05243302
    %v4226 = vmul.f32 %v4219, %v4225
    %v4227 = vadd.f32 %v4226, 0.18741608
    %v4228 = vmul.f32 %v4219, %v4227
    %v4229 = vadd.f32 %v4228, 1.1283791
    %v4230 = vmul.f32 %v4015, %v4229
    %v4231 = vmul.f32 %v4219, 3.8918573e-05
    %v4232 = vadd.f32 %v4231, 0.001143296
    %v4233 = vmul.f32 %v4219, %v4232
    %v4234 = vadd.f32 %v4233, 0.014752088
    %v4235 = vmul.f32 %v4219, %v4234
    %v4236 = vadd.f32 %v4235, 0.112945676
    %v4237 = vmul.f32 %v4219, %v4236
    %v4238 = vadd.f32 %v4237, 0.4994258
    %v4239 = vmul.f32 %v4219, %v4238
    %v4240 = vadd.f32 %v4239, 1.0
    %v4241 = vrcp.pop %v4240
    %v4242 = vmul.f32 %v4240, %v4241
    %v4243 = vsub.f32 1.0, %v4242
    %v4244 = vmul.f32 %v4241, %v4243
    %v4245 = vadd.f32 %v4241, %v4244
    %vm4246 = vweird.f32 %v4240
    %vm4247 = vweird.f32 %v4241
    %vm4248 = vmor %vm4246, %vm4247
    %v4249 = vsel %vm4248, %v4241, %v4245
    %v4250 = vand.u32 2147483647, %v4240
    %vm4251 = vcmp.eq.f32.partialorder %v4250, 8.507059e+37
    %v4252 = vand.u32 %v4240, 2147483648
    %v4253 = vor.u32 1.1754944e-38, %v4252
    %v4254 = vsel %vm4251, %v4253, %v4249
    %v4255 = vmul.f32 %v4230, %v4254
    %v4256 = vmin.f32 %v4255, 1.0
    %v4257 = vmax.f32 %v4256, -1.0
    %v4258 = vmul.f32 %v4016, %v4016
    %v4259 = vmin.f32 16.0, %v4258
    %v4260 = vmul.f32 %v4259, 2.1237322e-06
    %v4261 = vadd.f32 %v4260, 0.00028619796
    %v4262 = vmul.f32 %v4259, %v4261
    %v4263 = vadd.f32 %v4262, 0.0036580483
    %v4264 = vmul.f32 %v4259, %v4263
    %v4265 = vadd.f32 %v4264, 0.05243302
    %v4266 = vmul.f32 %v4259, %v4265
    %v4267 = vadd.f32 %v4266, 0.18741608
    %v4268 = vmul.f32 %v4259, %v4267
    %v4269 = vadd.f32 %v4268, 1.1283791
    %v4270 = vmul.f32 %v4016, %v4269
    %v4271 = vmul.f32 %v4259, 3.8918573e-05
    %v4272 = vadd.f32 %v4271, 0.001143296
    %v4273 = vmul.f32 %v4259, %v4272
    %v4274 = vadd.f32 %v4273, 0.014752088
    %v4275 = vmul.f32 %v4259, %v4274
    %v4276 = vadd.f32 %v4275, 0.112945676
    %v4277 = vmul.f32 %v4259, %v4276
    %v4278 = vadd.f32 %v4277, 0.4994258
    %v4279 = vmul.f32 %v4259, %v4278
    %v4280 = vadd.f32 %v4279, 1.0
    %v4281 = vrcp.pop %v4280
    %v4282 = vmul.f32 %v4280, %v4281
    %v4283 = vsub.f32 1.0, %v4282
    %v4284 = vmul.f32 %v4281, %v4283
    %v4285 = vadd.f32 %v4281, %v4284
    %vm4286 = vweird.f32 %v4280
    %vm4287 = vweird.f32 %v4281
    %vm4288 = vmor %vm4286, %vm4287
    %v4289 = vsel %vm4288, %v4281, %v4285
    %v4290 = vand.u32 2147483647, %v4280
    %vm4291 = vcmp.eq.f32.partialorder %v4290, 8.507059e+37
    %v4292 = vand.u32 %v4280, 2147483648
    %v4293 = vor.u32 1.1754944e-38, %v4292
    %v4294 = vsel %vm4291, %v4293, %v4289
    %v4295 = vmul.f32 %v4270, %v4294
    %v4296 = vmin.f32 %v4295, 1.0
    %v4297 = vmax.f32 %v4296, -1.0
    %v4298 = vmul.f32 %v4017, %v4017
    %v4299 = vmin.f32 16.0, %v4298
    %v4300 = vmul.f32 %v4299, 2.1237322e-06
    %v4301 = vadd.f32 %v4300, 0.00028619796
    %v4302 = vmul.f32 %v4299, %v4301
    %v4303 = vadd.f32 %v4302, 0.0036580483
    %v4304 = vmul.f32 %v4299, %v4303
    %v4305 = vadd.f32 %v4304, 0.05243302
    %v4306 = vmul.f32 %v4299, %v4305
    %v4307 = vadd.f32 %v4306, 0.18741608
    %v4308 = vmul.f32 %v4299, %v4307
    %v4309 = vadd.f32 %v4308, 1.1283791
    %v4310 = vmul.f32 %v4017, %v4309
    %v4311 = vmul.f32 %v4299, 3.8918573e-05
    %v4312 = vadd.f32 %v4311, 0.001143296
    %v4313 = vmul.f32 %v4299, %v4312
    %v4314 = vadd.f32 %v4313, 0.014752088
    %v4315 = vmul.f32 %v4299, %v4314
    %v4316 = vadd.f32 %v4315, 0.112945676
    %v4317 = vmul.f32 %v4299, %v4316
    %v4318 = vadd.f32 %v4317, 0.4994258
    %v4319 = vmul.f32 %v4299, %v4318
    %v4320 = vadd.f32 %v4319, 1.0
    %v4321 = vrcp.pop %v4320
    %v4322 = vmul.f32 %v4320, %v4321
    %v4323 = vsub.f32 1.0, %v4322
    %v4324 = vmul.f32 %v4321, %v4323
    %v4325 = vadd.f32 %v4321, %v4324
    %vm4326 = vweird.f32 %v4320
    %vm4327 = vweird.f32 %v4321
    %vm4328 = vmor %vm4326, %vm4327
    %v4329 = vsel %vm4328, %v4321, %v4325
    %v4330 = vand.u32 2147483647, %v4320
    %vm4331 = vcmp.eq.f32.partialorder %v4330, 8.507059e+37
    %v4332 = vand.u32 %v4320, 2147483648
    %v4333 = vor.u32 1.1754944e-38, %v4332
    %v4334 = vsel %vm4331, %v4333, %v4329
    %v4335 = vmul.f32 %v4310, %v4334
    %v4336 = vmin.f32 %v4335, 1.0
    %v4337 = vmax.f32 %v4336, -1.0
    %v4338 = vadd.f32 %v4057, 1.0
    %v4339 = vadd.f32 %v4097, 1.0
    %v4340 = vadd.f32 %v4137, 1.0
    %v4341 = vadd.f32 %v4177, 1.0
    %v4342 = vadd.f32 %v4217, 1.0
    %v4343 = vadd.f32 %v4257, 1.0
    %v4344 = vadd.f32 %v4297, 1.0
    %v4345 = vadd.f32 %v4337, 1.0
    %v4346 = vmul.f32 %v4002, %v4338
    %v4347 = vmul.f32 %v4003, %v4339
    %v4348 = vmul.f32 %v4004, %v4340
    %v4349 = vmul.f32 %v4005, %v4341
    %v4350 = vmul.f32 %v4006, %v4342
    %v4351 = vmul.f32 %v4007, %v4343
    %v4352 = vmul.f32 %v4008, %v4344
    %v4353 = vmul.f32 %v4009, %v4345
    %v4354 = vld [vmem:[%s1 + $0x620] sm:$0xff]
    %v4355 = vld [vmem:[%s1 + $0x630] sm:$0xff]
    %v4356 = vld [vmem:[%s1 + $0x640] sm:$0xff]
    %v4357 = vld [vmem:[%s1 + $0x650] sm:$0xff]
    %v4358 = vld [vmem:[%s1 + $0x660] sm:$0xff]
    %v4359 = vld [vmem:[%s1 + $0x670] sm:$0xff]
    %v4360 = vld [vmem:[%s1 + $0x680] sm:$0xff]
    %v4361 = vld [vmem:[%s1 + $0x690] sm:$0xff]
    %v4362 = vld [vmem:[%s1 + $0x781] ss:$0 sm:$0xff]
    %v4364 = vsel %vm1057, %v4346, 0
    %v4367 = vsel %vm1057, %v4347, 0
    %v4370 = vsel %vm1057, %v4348, 0
    %v4373 = vsel %vm1057, %v4349, 0
    %v4376 = vsel %vm1057, %v4350, 0
    %v4379 = vsel %vm1057, %v4351, 0
    %v4382 = vsel %vm1057, %v4352, 0
    %v4385 = vsel %vm1057, %v4353, 0
    %4387 = vmatpush.msra.mxu0 0.0
    %4388 = vmatpush.msra.mxu0 0.0
    %4389 = vmatpush.msra.mxu0 0.0
    %4390 = vmatpush.msra.mxu0 0.0
    %4391 = vmatpush.msra.mxu0 0.0
    %4392 = vmatpush.msra.mxu0 0.0
    %4393 = vmatpush.msra.mxu0 0.0
    %4394 = vmatpush.msra.mxu0 0.0
    %4395 = vmatpush.msra.mxu0 %v4361
    %4396 = vmatpush.msra.mxu0 %v4360
    %4397 = vmatpush.msra.mxu0 %v4359
    %4398 = vmatpush.msra.mxu0 %v4358
    %4399 = vmatpush.msra.mxu0 %v4357
    %4400 = vmatpush.msra.mxu0 %v4356
    %4401 = vmatpush.msra.mxu0 %v4355
    %4402 = vmatpush.msra.mxu0 %v4354
    %4403 = vmatmul.f32.gmra.mxu0 %v4364
    %v4404 = vpop.f32.mrf.mxu0
    %v4405 = vadd.f32 %v4362, %v4404
    %4406 = vmatmul.f32.gmra.mxu0 %v4367
    %v4407 = vpop.f32.mrf.mxu0
    %4408 = vmatmul.f32.gmra.mxu0 %v4370
    %v4409 = vpop.f32.mrf.mxu0
    %4410 = vmatmul.f32.gmra.mxu0 %v4373
    %v4411 = vpop.f32.mrf.mxu0
    %4412 = vmatmul.f32.gmra.mxu0 %v4376
    %v4413 = vpop.f32.mrf.mxu0
    %v4414 = vadd.f32 %v4362, %v4413
    %4415 = vmatmul.f32.gmra.mxu0 %v4379
    %v4416 = vpop.f32.mrf.mxu0
    %4417 = vmatmul.f32.gmra.mxu0 %v4382
    %v4418 = vpop.f32.mrf.mxu0
    %4419 = vmatmul.f32.gmra.mxu0 %v4385
    %v4420 = vpop.f32.mrf.mxu0
    %4421 = vdwg.mxu0
    %v4422 = vadd.f32 %v3730, %v4405
    %v4423 = vadd.f32 %v3734, %v4414
    %v4425 = vrot.slane %v4423, 7
    %v4427 = vsel %vm452, %v4422, %v4425
    %v4428 = vld [vmem:[%s1 + $0x6a0] sm:$0xff]
    %v4429 = vld [vmem:[%s1 + $0x6b0] sm:$0xff]
    %v4430 = vld [vmem:[%s1 + $0x6c0] sm:$0xff]
    %v4431 = vld [vmem:[%s1 + $0x6d0] sm:$0xff]
    %v4432 = vld [vmem:[%s1 + $0x782] ss:$0 sm:$0xff]
    %v4434 = vsel %vm507, %v4427, 0
    %4436 = vmatpush.msra.mxu0 0.0
    %4437 = vmatpush.msra.mxu0 0.0
    %4438 = vmatpush.msra.mxu0 0.0
    %4439 = vmatpush.msra.mxu0 0.0
    %4440 = vmatpush.msra.mxu0 0.0
    %4441 = vmatpush.msra.mxu0 0.0
    %4442 = vmatpush.msra.mxu0 0.0
    %4443 = vmatpush.msra.mxu0 0.0
    %4444 = vmatpush.msra.mxu0 0.0
    %4445 = vmatpush.msra.mxu0 0.0
    %4446 = vmatpush.msra.mxu0 0.0
    %4447 = vmatpush.msra.mxu0 0.0
    %4448 = vmatpush.msra.mxu0 %v4431
    %4449 = vmatpush.msra.mxu0 %v4430
    %4450 = vmatpush.msra.mxu0 %v4429
    %4451 = vmatpush.msra.mxu0 %v4428
    %4452 = vmatmul.f32.gmra.mxu0 %v4434
    %v4453 = vpop.f32.mrf.mxu0
    %v4454 = vadd.f32 %v4432, %v4453
    %4455 = vdwg.mxu0
    %v4456 = vmax.f32 %v4454, 0.0
    %v4457 = vld [vmem:[%s1 + $0x6e0] sm:$0xff]
    %v4458 = vld [vmem:[%s1 + $0x6f0] sm:$0xff]
    %v4459 = vld [vmem:[%s1 + $0x700] sm:$0xff]
    %v4460 = vld [vmem:[%s1 + $0x710] sm:$0xff]
    %v4461 = vld [vmem:[%s1 + $0x720] sm:$0xff]
    %v4462 = vld [vmem:[%s1 + $0x730] sm:$0xff]
    %v4463 = vld [vmem:[%s1 + $0x740] sm:$0xff]
    %v4464 = vld [vmem:[%s1 + $0x750] sm:$0xff]
    %v4465 = vld [vmem:[%s1 + $0x783] ss:$0 sm:$0xff]
    %v4467 = vsel %vm1057, %v4456, 0
    %4469 = vmatpush.msra.mxu0 0.0
    %4470 = vmatpush.msra.mxu0 0.0
    %4471 = vmatpush.msra.mxu0 0.0
    %4472 = vmatpush.msra.mxu0 0.0
    %4473 = vmatpush.msra.mxu0 0.0
    %4474 = vmatpush.msra.mxu0 0.0
    %4475 = vmatpush.msra.mxu0 0.0
    %4476 = vmatpush.msra.mxu0 0.0
    %4477 = vmatpush.msra.mxu0 %v4464
    %4478 = vmatpush.msra.mxu0 %v4463
    %4479 = vmatpush.msra.mxu0 %v4462
    %4480 = vmatpush.msra.mxu0 %v4461
    %4481 = vmatpush.msra.mxu0 %v4460
    %4482 = vmatpush.msra.mxu0 %v4459
    %4483 = vmatpush.msra.mxu0 %v4458
    %4484 = vmatpush.msra.mxu0 %v4457
    %4485 = vmatmul.f32.gmra.mxu0 %v4467
    %v4486 = vpop.f32.mrf.mxu0
    %v4487 = vadd.f32 %v4465, %v4486
    %4488 = vdwg.mxu0
    %vm4489 = vcmask 9216
    %4490 = vst.msk [vmem:[#allocation2] sm:$0x3] %vm4489, %v4487
    // Predicated region
    $region10: #{efficient_vit_forward.1} parent=1 // pred_check
      _
    $region11: #{efficient_vit_forward.1} parent=1 // pred_check_branch
      %4492 = sbr.rel (0) target = $region13
    $region12: #{efficient_vit_forward.1} parent=1 // pred_region
      %4494 = vsyncadd [#allocation3], 0
      %s4496 = sshll.u32 [#allocation2], 4
      %s4497 = int_to_ptr.vmem [resolvable:$true] %s4496
      %s4498 = sshll.u32 %s2, 4
      %s4499 = int_to_ptr.hbm [resolvable:$true] %s4498
      %4501 = dma.vmem_to_hbm [thread:$0]  %s4497, 32, %s4499, [#allocation3]
    $region13: #{efficient_vit_forward.1} parent=1 // pred_fallthru
      _
    // Predicated region
    $region14: #{efficient_vit_forward.1} parent=1 // pred_check
      _
    $region15: #{efficient_vit_forward.1} parent=1 // pred_check_branch
      %4503 = sbr.rel (0) target = $region17
    $region16: #{efficient_vit_forward.1} parent=1 // pred_region
      %4505 = dma.done [#allocation3], 32
    $region17: #{efficient_vit_forward.1} parent=1 // pred_fallthru
      _
    %4506 = vsyncpa [#allocation3], 1

</llo_original>
